<compile_context>
chip_gen: v7x
topology: tpu7x:2x2x1
jax: 0.10.0
libtpu: 0.0.40
codegen_flags: <defaults>
</compile_context>

<pallas_src>
import functools

import jax
import jax.numpy as jnp
from jax import lax
from jax.experimental import pallas as pl
from jax.experimental.pallas import tpu as pltpu


def _sequence_conv_kernel(ids_ref, word_ref, pos_ref, gamma_ref, beta_ref,
                          w1_ref, b1_ref, w2_ref, b2_ref, w3_ref, b3_ref,
                          out_ref, *, eps):
    # ids_ref:   (1, S, 1) int32   -- token ids for this batch row
    # word_ref:  (V, H)  float32   -- full word-embedding table (V=26, tiny)
    # pos_ref:   (S, H)  float32   -- position table, already trimmed to S rows
    # gamma/beta:(1, H)  float32
    # wN_ref:    (K_N, C_in_N, C_out_N) float32 ; bN_ref: (1, C_out_N)
    # out_ref:   (1, L3, C3) float32
    ids = ids_ref[0]                                   # (S, 1) int32
    S = ids.shape[0]
    V = word_ref.shape[0]

    # Word-embedding gather as a one-hot (S,V)x(V,H) MXU matmul (V=26 -> cheap,
    # exact in f32 since one-hot entries are 0/1).
    onehot = (ids == lax.broadcasted_iota(jnp.int32, (S, V), 1)
              ).astype(jnp.float32)                    # (S, V)
    words = jnp.dot(onehot, word_ref[...],
                    preferred_element_type=jnp.float32)  # (S, H)

    emb = words + pos_ref[...]                         # (S, H)

    # LayerNorm over hidden axis (lane reduction) with rsqrt on the EUP.
    u = jnp.mean(emb, axis=-1, keepdims=True)
    var = jnp.mean((emb - u) ** 2, axis=-1, keepdims=True)
    xn = (emb - u) * lax.rsqrt(var + eps)
    x = gamma_ref[...] * xn + beta_ref[...]            # (S, H) float32
    # Dropout: identity (eval mode).

    def conv_relu(x, w_ref, b_ref):
        # 'valid' Conv1d over the sequence axis, data in (seq, channel) layout:
        #   out[t, o] = sum_k x[t+k, :] @ w[k, :, o] + b[o]
        K, _, c_out = w_ref.shape
        L_out = x.shape[0] - K + 1
        acc = jnp.zeros((L_out, c_out), jnp.float32)
        for k in range(K):                             # static unroll (K<=12)
            acc = acc + jnp.dot(x[k:k + L_out, :], w_ref[k],
                                preferred_element_type=jnp.float32)
        return jnp.maximum(acc + b_ref[...], 0.0)

    x = conv_relu(x, w1_ref, b1_ref)                   # (S-3,  16)
    x = conv_relu(x, w2_ref, b2_ref)                   # (S-10, 64)
    x = conv_relu(x, w3_ref, b3_ref)                   # (S-21, 128)

    out_ref[0] = x.astype(out_ref.dtype)


def sequence_conv_forward(input_ids, word_table, pos_table, gamma, beta,
                          w1, b1, w2, b2, w3, b3, eps=1e-12):
    """Pallas forward of SequenceConv (dropout = identity, eval mode)."""
    B, S = input_ids.shape
    V, H = word_table.shape
    P = pos_table.shape[0]
    assert P >= S, "MAX_LENGTH must be >= sequence length"
    K1, _, C1 = w1.shape
    K2, _, C2 = w2.shape
    K3, _, C3 = w3.shape
    L3 = S - (K1 - 1) - (K2 - 1) - (K3 - 1)
    assert L3 > 0, "sequence too short for the conv stack"

    ids3d = input_ids.astype(jnp.int32)[..., None]        # (B, S, 1)
    pos_s = pos_table[:S].astype(jnp.float32)             # only the rows used
    gamma2 = gamma.reshape(1, H).astype(jnp.float32)
    beta2 = beta.reshape(1, H).astype(jnp.float32)
    b1r = b1.reshape(1, C1).astype(jnp.float32)
    b2r = b2.reshape(1, C2).astype(jnp.float32)
    b3r = b3.reshape(1, C3).astype(jnp.float32)

    kernel = functools.partial(_sequence_conv_kernel, eps=eps)

    return pl.pallas_call(
        kernel,
        out_shape=jax.ShapeDtypeStruct((B, L3, C3), jnp.float32),
        grid_spec=pltpu.PrefetchScalarGridSpec(
            num_scalar_prefetch=0,
            grid=(B,),
            in_specs=[
                pl.BlockSpec((1, S, 1), lambda b: (b, 0, 0)),     # ids
                pl.BlockSpec((V, H), lambda b: (0, 0)),           # word table
                pl.BlockSpec((S, H), lambda b: (0, 0)),           # pos (S rows)
                pl.BlockSpec((1, H), lambda b: (0, 0)),           # gamma
                pl.BlockSpec((1, H), lambda b: (0, 0)),           # beta
                pl.BlockSpec((K1, H, C1), lambda b: (0, 0, 0)),   # conv1 w
                pl.BlockSpec((1, C1), lambda b: (0, 0)),          # conv1 b
                pl.BlockSpec((K2, C1, C2), lambda b: (0, 0, 0)),  # conv2 w
                pl.BlockSpec((1, C2), lambda b: (0, 0)),          # conv2 b
                pl.BlockSpec((K3, C2, C3), lambda b: (0, 0, 0)),  # conv3 w
                pl.BlockSpec((1, C3), lambda b: (0, 0)),          # conv3 b
            ],
            out_specs=pl.BlockSpec((1, L3, C3), lambda b: (b, 0, 0)),
        ),
        compiler_params=pltpu.CompilerParams(
            dimension_semantics=("parallel",),
            vmem_limit_bytes=32 * 1024 * 1024),
    )(ids3d, word_table.astype(jnp.float32), pos_s, gamma2, beta2,
      w1.astype(jnp.float32), b1r, w2.astype(jnp.float32), b2r,
      w3.astype(jnp.float32), b3r)


def sequence_conv_reference(input_ids, word_table, pos_table, gamma, beta,
                            w1, b1, w2, b2, w3, b3, eps=1e-12):
    """Pure-JAX reference mirroring the PyTorch forward (eval mode)."""
    B, S = input_ids.shape
    emb = word_table[input_ids] + pos_table[:S][None, :, :]
    u = emb.mean(-1, keepdims=True)
    var = ((emb - u) ** 2).mean(-1, keepdims=True)
    x = gamma * (emb - u) / jnp.sqrt(var + eps) + beta       # (B, S, H)
    x = jnp.transpose(x, (0, 2, 1))                          # (B, H, S) = NCW

    def conv(x, w_kio, b):
        w_oiw = jnp.transpose(w_kio, (2, 1, 0))              # (O, I, K)
        y = lax.conv_general_dilated(x, w_oiw, (1,), 'VALID',
                                     dimension_numbers=('NCW', 'OIW', 'NCW'))
        return jnp.maximum(y + b.reshape(1, -1, 1), 0.0)

    x = conv(x, w1, b1)
    x = conv(x, w2, b2)
    x = conv(x, w3, b3)
    return jnp.transpose(x, (0, 2, 1))                       # (B, L3, C3)


if __name__ == "__main__":
    # Module-implied config: node_dim=26 vocab, dim=128 hidden, conv=16,
    # kernels [4, 8, 12]. Small free shapes: batch=2, MAX_LENGTH=40, seq=32.
    node_dim = 26
    hidden = 128
    conv_c = 16
    kernels = (4, 8, 12)
    max_length = 40
    batch, seq = 2, 32

    key = jax.random.PRNGKey(0)
    ks = jax.random.split(key, 10)

    word_table = jax.random.normal(ks[0], (node_dim, hidden), jnp.float32) * 0.02
    pos_table = jax.random.normal(ks[1], (max_length, hidden), jnp.float32) * 0.02
    gamma = jnp.ones((hidden,), jnp.float32)
    beta = jnp.zeros((hidden,), jnp.float32)

    w1 = jax.random.normal(ks[2], (kernels[0], hidden, conv_c), jnp.float32) * 0.05
    b1 = jax.random.normal(ks[3], (conv_c,), jnp.float32) * 0.05
    w2 = jax.random.normal(ks[4], (kernels[1], conv_c, conv_c * 4), jnp.float32) * 0.05
    b2 = jax.random.normal(ks[5], (conv_c * 4,), jnp.float32) * 0.05
    w3 = jax.random.normal(ks[6], (kernels[2], conv_c * 4, conv_c * 8), jnp.float32) * 0.05
    b3 = jax.random.normal(ks[7], (conv_c * 8,), jnp.float32) * 0.05

    input_ids = jax.random.randint(ks[8], (batch, seq), 0, node_dim, jnp.int32)

    out = sequence_conv_forward(input_ids, word_table, pos_table, gamma, beta,
                                w1, b1, w2, b2, w3, b3)
    out = jax.block_until_ready(out)

    ref = sequence_conv_reference(input_ids, word_table, pos_table, gamma, beta,
                                  w1, b1, w2, b2, w3, b3)
    l_out = seq - (kernels[0] - 1) - (kernels[1] - 1) - (kernels[2] - 1)
    assert out.shape == (batch, l_out, conv_c * 8), out.shape
    max_diff = float(jnp.max(jnp.abs(out - ref)))
    assert jnp.allclose(out, ref, atol=2e-2, rtol=2e-2), (
        f"mismatch vs reference, max abs diff = {max_diff}")

    print("KERNEL_OK")
</pallas_src>

<mosaic_0001>
module attributes {stable_mosaic.version = 11 : i64} {
  func.func @_sequence_conv_kernel(%arg0: i32, %arg1: memref<1x32x1xi32, #tpu.memory_space<vmem>>, %arg2: memref<26x128xf32, #tpu.memory_space<vmem>>, %arg3: memref<32x128xf32, #tpu.memory_space<vmem>>, %arg4: memref<1x128xf32, #tpu.memory_space<vmem>>, %arg5: memref<1x128xf32, #tpu.memory_space<vmem>>, %arg6: memref<4x128x16xf32, #tpu.memory_space<vmem>>, %arg7: memref<1x16xf32, #tpu.memory_space<vmem>>, %arg8: memref<8x16x64xf32, #tpu.memory_space<vmem>>, %arg9: memref<1x64xf32, #tpu.memory_space<vmem>>, %arg10: memref<12x64x128xf32, #tpu.memory_space<vmem>>, %arg11: memref<1x128xf32, #tpu.memory_space<vmem>>, %arg12: memref<1x11x128xf32, #tpu.memory_space<vmem>>) attributes {dimension_semantics = [#tpu.dimension_semantics<parallel>], iteration_bounds = array<i64: 2>, scalar_prefetch = 0 : i64, scratch_operands = 0 : i64, tpu.core_type = #tpu.core_type<tc>, window_params = [{transform_indices = @transform_0, window_bounds = array<i64: 1, 32, 1>}, {pipeline_mode = #tpu.pipeline_mode<synchronous>, transform_indices = @transform_1, window_bounds = array<i64: 26, 128>}, {pipeline_mode = #tpu.pipeline_mode<synchronous>, transform_indices = @transform_2, window_bounds = array<i64: 32, 128>}, {pipeline_mode = #tpu.pipeline_mode<synchronous>, transform_indices = @transform_3, window_bounds = array<i64: 1, 128>}, {pipeline_mode = #tpu.pipeline_mode<synchronous>, transform_indices = @transform_4, window_bounds = array<i64: 1, 128>}, {pipeline_mode = #tpu.pipeline_mode<synchronous>, transform_indices = @transform_5, window_bounds = array<i64: 4, 128, 16>}, {pipeline_mode = #tpu.pipeline_mode<synchronous>, transform_indices = @transform_6, window_bounds = array<i64: 1, 16>}, {pipeline_mode = #tpu.pipeline_mode<synchronous>, transform_indices = @transform_7, window_bounds = array<i64: 8, 16, 64>}, {pipeline_mode = #tpu.pipeline_mode<synchronous>, transform_indices = @transform_8, window_bounds = array<i64: 1, 64>}, {pipeline_mode = #tpu.pipeline_mode<synchronous>, transform_indices = @transform_9, window_bounds = array<i64: 12, 64, 128>}, {pipeline_mode = #tpu.pipeline_mode<synchronous>, transform_indices = @transform_10, window_bounds = array<i64: 1, 128>}, {transform_indices = @transform_11, window_bounds = array<i64: 1, 11, 128>}]} {
    %c0 = arith.constant 0 : index
    %c0_0 = arith.constant 0 : index
    %c0_1 = arith.constant 0 : index
    %0 = vector.load %arg1[%c0, %c0_0, %c0_1] : memref<1x32x1xi32, #tpu.memory_space<vmem>>, vector<1x32x1xi32>
    %1 = vector.shape_cast %0 : vector<1x32x1xi32> to vector<32x1xi32>
    %2 = tpu.iota {dimensions = array<i32: 1>} : vector<32x26xi32>
    %3 = vector.broadcast %1 : vector<32x1xi32> to vector<32x26xi32>
    %4 = arith.cmpi eq, %3, %2 : vector<32x26xi32>
    %5 = arith.extui %4 : vector<32x26xi1> to vector<32x26xi32>
    %6 = arith.sitofp %5 : vector<32x26xi32> to vector<32x26xf32>
    %c0_2 = arith.constant 0 : index
    %c0_3 = arith.constant 0 : index
    %7 = vector.load %arg2[%c0_2, %c0_3] : memref<26x128xf32, #tpu.memory_space<vmem>>, vector<26x128xf32>
    %cst = arith.constant dense<0.000000e+00> : vector<32x128xf32>
    %8 = tpu.matmul %6, %7, %cst {dimension_numbers = #tpu.dot_dimension_numbers<[1], [0], [0], [1], [0, 0, 1, 1], [], []>} : vector<32x26xf32>, vector<26x128xf32>, vector<32x128xf32> -> vector<32x128xf32>
    %c0_4 = arith.constant 0 : index
    %c0_5 = arith.constant 0 : index
    %9 = vector.load %arg3[%c0_4, %c0_5] : memref<32x128xf32, #tpu.memory_space<vmem>>, vector<32x128xf32>
    %10 = arith.addf %8, %9 : vector<32x128xf32>
    %cst_6 = arith.constant dense<0.000000e+00> : vector<32xf32>
    %11 = vector.multi_reduction <add>, %10, %cst_6 [1] : vector<32x128xf32> to vector<32xf32>
    %12 = vector.shape_cast %11 : vector<32xf32> to vector<32x1xf32>
    %cst_7 = arith.constant 1.280000e+02 : f32
    %13 = vector.broadcast %cst_7 : f32 to vector<32x1xf32>
    %14 = arith.divf %12, %13 : vector<32x1xf32>
    %15 = vector.broadcast %14 : vector<32x1xf32> to vector<32x128xf32>
    %16 = arith.subf %10, %15 : vector<32x128xf32>
    %17 = arith.mulf %16, %16 : vector<32x128xf32>
    %cst_8 = arith.constant dense<0.000000e+00> : vector<32xf32>
    %18 = vector.multi_reduction <add>, %17, %cst_8 [1] : vector<32x128xf32> to vector<32xf32>
    %19 = vector.shape_cast %18 : vector<32xf32> to vector<32x1xf32>
    %cst_9 = arith.constant 1.280000e+02 : f32
    %20 = vector.broadcast %cst_9 : f32 to vector<32x1xf32>
    %21 = arith.divf %19, %20 : vector<32x1xf32>
    %22 = vector.broadcast %14 : vector<32x1xf32> to vector<32x128xf32>
    %23 = arith.subf %10, %22 : vector<32x128xf32>
    %cst_10 = arith.constant 9.99999996E-13 : f32
    %24 = vector.broadcast %cst_10 : f32 to vector<32x1xf32>
    %25 = arith.addf %21, %24 : vector<32x1xf32>
    %26 = math.rsqrt %25 : vector<32x1xf32>
    %27 = vector.broadcast %26 : vector<32x1xf32> to vector<32x128xf32>
    %28 = arith.mulf %23, %27 : vector<32x128xf32>
    %c0_11 = arith.constant 0 : index
    %c0_12 = arith.constant 0 : index
    %29 = vector.load %arg4[%c0_11, %c0_12] : memref<1x128xf32, #tpu.memory_space<vmem>>, vector<1x128xf32>
    %30 = vector.broadcast %29 : vector<1x128xf32> to vector<32x128xf32>
    %31 = arith.mulf %30, %28 : vector<32x128xf32>
    %c0_13 = arith.constant 0 : index
    %c0_14 = arith.constant 0 : index
    %32 = vector.load %arg5[%c0_13, %c0_14] : memref<1x128xf32, #tpu.memory_space<vmem>>, vector<1x128xf32>
    %33 = vector.broadcast %32 : vector<1x128xf32> to vector<32x128xf32>
    %34 = arith.addf %31, %33 : vector<32x128xf32>
    %cst_15 = arith.constant 0.000000e+00 : f32
    %35 = vector.broadcast %cst_15 : f32 to vector<29x16xf32>
    %36 = vector.extract_strided_slice %34 {offsets = [0, 0], sizes = [29, 128], strides = [1, 1]} : vector<32x128xf32> to vector<29x128xf32>
    %c0_16 = arith.constant 0 : index
    %c0_17 = arith.constant 0 : index
    %c0_18 = arith.constant 0 : index
    %37 = vector.load %arg6[%c0_16, %c0_17, %c0_18] : memref<4x128x16xf32, #tpu.memory_space<vmem>>, vector<1x128x16xf32>
    %38 = vector.shape_cast %37 : vector<1x128x16xf32> to vector<128x16xf32>
    %cst_19 = arith.constant dense<0.000000e+00> : vector<29x16xf32>
    %39 = tpu.matmul %36, %38, %cst_19 {dimension_numbers = #tpu.dot_dimension_numbers<[1], [0], [0], [1], [0, 0, 1, 1], [], []>} : vector<29x128xf32>, vector<128x16xf32>, vector<29x16xf32> -> vector<29x16xf32>
    %40 = arith.addf %35, %39 : vector<29x16xf32>
    %41 = vector.extract_strided_slice %34 {offsets = [1, 0], sizes = [29, 128], strides = [1, 1]} : vector<32x128xf32> to vector<29x128xf32>
    %c1 = arith.constant 1 : index
    %c0_20 = arith.constant 0 : index
    %c0_21 = arith.constant 0 : index
    %42 = vector.load %arg6[%c1, %c0_20, %c0_21] : memref<4x128x16xf32, #tpu.memory_space<vmem>>, vector<1x128x16xf32>
    %43 = vector.shape_cast %42 : vector<1x128x16xf32> to vector<128x16xf32>
    %cst_22 = arith.constant dense<0.000000e+00> : vector<29x16xf32>
    %44 = tpu.matmul %41, %43, %cst_22 {dimension_numbers = #tpu.dot_dimension_numbers<[1], [0], [0], [1], [0, 0, 1, 1], [], []>} : vector<29x128xf32>, vector<128x16xf32>, vector<29x16xf32> -> vector<29x16xf32>
    %45 = arith.addf %40, %44 : vector<29x16xf32>
    %46 = vector.extract_strided_slice %34 {offsets = [2, 0], sizes = [29, 128], strides = [1, 1]} : vector<32x128xf32> to vector<29x128xf32>
    %c2 = arith.constant 2 : index
    %c0_23 = arith.constant 0 : index
    %c0_24 = arith.constant 0 : index
    %47 = vector.load %arg6[%c2, %c0_23, %c0_24] : memref<4x128x16xf32, #tpu.memory_space<vmem>>, vector<1x128x16xf32>
    %48 = vector.shape_cast %47 : vector<1x128x16xf32> to vector<128x16xf32>
    %cst_25 = arith.constant dense<0.000000e+00> : vector<29x16xf32>
    %49 = tpu.matmul %46, %48, %cst_25 {dimension_numbers = #tpu.dot_dimension_numbers<[1], [0], [0], [1], [0, 0, 1, 1], [], []>} : vector<29x128xf32>, vector<128x16xf32>, vector<29x16xf32> -> vector<29x16xf32>
    %50 = arith.addf %45, %49 : vector<29x16xf32>
    %51 = vector.extract_strided_slice %34 {offsets = [3, 0], sizes = [29, 128], strides = [1, 1]} : vector<32x128xf32> to vector<29x128xf32>
    %c3 = arith.constant 3 : index
    %c0_26 = arith.constant 0 : index
    %c0_27 = arith.constant 0 : index
    %52 = vector.load %arg6[%c3, %c0_26, %c0_27] : memref<4x128x16xf32, #tpu.memory_space<vmem>>, vector<1x128x16xf32>
    %53 = vector.shape_cast %52 : vector<1x128x16xf32> to vector<128x16xf32>
    %cst_28 = arith.constant dense<0.000000e+00> : vector<29x16xf32>
    %54 = tpu.matmul %51, %53, %cst_28 {dimension_numbers = #tpu.dot_dimension_numbers<[1], [0], [0], [1], [0, 0, 1, 1], [], []>} : vector<29x128xf32>, vector<128x16xf32>, vector<29x16xf32> -> vector<29x16xf32>
    %55 = arith.addf %50, %54 : vector<29x16xf32>
    %c0_29 = arith.constant 0 : index
    %c0_30 = arith.constant 0 : index
    %56 = vector.load %arg7[%c0_29, %c0_30] : memref<1x16xf32, #tpu.memory_space<vmem>>, vector<1x16xf32>
    %57 = vector.broadcast %56 : vector<1x16xf32> to vector<29x16xf32>
    %58 = arith.addf %55, %57 : vector<29x16xf32>
    %cst_31 = arith.constant 0.000000e+00 : f32
    %59 = vector.broadcast %cst_31 : f32 to vector<29x16xf32>
    %60 = arith.maximumf %58, %59 : vector<29x16xf32>
    %cst_32 = arith.constant 0.000000e+00 : f32
    %61 = vector.broadcast %cst_32 : f32 to vector<22x64xf32>
    %62 = vector.extract_strided_slice %60 {offsets = [0, 0], sizes = [22, 16], strides = [1, 1]} : vector<29x16xf32> to vector<22x16xf32>
    %c0_33 = arith.constant 0 : index
    %c0_34 = arith.constant 0 : index
    %c0_35 = arith.constant 0 : index
    %63 = vector.load %arg8[%c0_33, %c0_34, %c0_35] : memref<8x16x64xf32, #tpu.memory_space<vmem>>, vector<1x16x64xf32>
    %64 = vector.shape_cast %63 : vector<1x16x64xf32> to vector<16x64xf32>
    %cst_36 = arith.constant dense<0.000000e+00> : vector<22x64xf32>
    %65 = tpu.matmul %62, %64, %cst_36 {dimension_numbers = #tpu.dot_dimension_numbers<[1], [0], [0], [1], [0, 0, 1, 1], [], []>} : vector<22x16xf32>, vector<16x64xf32>, vector<22x64xf32> -> vector<22x64xf32>
    %66 = arith.addf %61, %65 : vector<22x64xf32>
    %67 = vector.extract_strided_slice %60 {offsets = [1, 0], sizes = [22, 16], strides = [1, 1]} : vector<29x16xf32> to vector<22x16xf32>
    %c1_37 = arith.constant 1 : index
    %c0_38 = arith.constant 0 : index
    %c0_39 = arith.constant 0 : index
    %68 = vector.load %arg8[%c1_37, %c0_38, %c0_39] : memref<8x16x64xf32, #tpu.memory_space<vmem>>, vector<1x16x64xf32>
    %69 = vector.shape_cast %68 : vector<1x16x64xf32> to vector<16x64xf32>
    %cst_40 = arith.constant dense<0.000000e+00> : vector<22x64xf32>
    %70 = tpu.matmul %67, %69, %cst_40 {dimension_numbers = #tpu.dot_dimension_numbers<[1], [0], [0], [1], [0, 0, 1, 1], [], []>} : vector<22x16xf32>, vector<16x64xf32>, vector<22x64xf32> -> vector<22x64xf32>
    %71 = arith.addf %66, %70 : vector<22x64xf32>
    %72 = vector.extract_strided_slice %60 {offsets = [2, 0], sizes = [22, 16], strides = [1, 1]} : vector<29x16xf32> to vector<22x16xf32>
    %c2_41 = arith.constant 2 : index
    %c0_42 = arith.constant 0 : index
    %c0_43 = arith.constant 0 : index
    %73 = vector.load %arg8[%c2_41, %c0_42, %c0_43] : memref<8x16x64xf32, #tpu.memory_space<vmem>>, vector<1x16x64xf32>
    %74 = vector.shape_cast %73 : vector<1x16x64xf32> to vector<16x64xf32>
    %cst_44 = arith.constant dense<0.000000e+00> : vector<22x64xf32>
    %75 = tpu.matmul %72, %74, %cst_44 {dimension_numbers = #tpu.dot_dimension_numbers<[1], [0], [0], [1], [0, 0, 1, 1], [], []>} : vector<22x16xf32>, vector<16x64xf32>, vector<22x64xf32> -> vector<22x64xf32>
    %76 = arith.addf %71, %75 : vector<22x64xf32>
    %77 = vector.extract_strided_slice %60 {offsets = [3, 0], sizes = [22, 16], strides = [1, 1]} : vector<29x16xf32> to vector<22x16xf32>
    %c3_45 = arith.constant 3 : index
    %c0_46 = arith.constant 0 : index
    %c0_47 = arith.constant 0 : index
    %78 = vector.load %arg8[%c3_45, %c0_46, %c0_47] : memref<8x16x64xf32, #tpu.memory_space<vmem>>, vector<1x16x64xf32>
    %79 = vector.shape_cast %78 : vector<1x16x64xf32> to vector<16x64xf32>
    %cst_48 = arith.constant dense<0.000000e+00> : vector<22x64xf32>
    %80 = tpu.matmul %77, %79, %cst_48 {dimension_numbers = #tpu.dot_dimension_numbers<[1], [0], [0], [1], [0, 0, 1, 1], [], []>} : vector<22x16xf32>, vector<16x64xf32>, vector<22x64xf32> -> vector<22x64xf32>
    %81 = arith.addf %76, %80 : vector<22x64xf32>
    %82 = vector.extract_strided_slice %60 {offsets = [4, 0], sizes = [22, 16], strides = [1, 1]} : vector<29x16xf32> to vector<22x16xf32>
    %c4 = arith.constant 4 : index
    %c0_49 = arith.constant 0 : index
    %c0_50 = arith.constant 0 : index
    %83 = vector.load %arg8[%c4, %c0_49, %c0_50] : memref<8x16x64xf32, #tpu.memory_space<vmem>>, vector<1x16x64xf32>
    %84 = vector.shape_cast %83 : vector<1x16x64xf32> to vector<16x64xf32>
    %cst_51 = arith.constant dense<0.000000e+00> : vector<22x64xf32>
    %85 = tpu.matmul %82, %84, %cst_51 {dimension_numbers = #tpu.dot_dimension_numbers<[1], [0], [0], [1], [0, 0, 1, 1], [], []>} : vector<22x16xf32>, vector<16x64xf32>, vector<22x64xf32> -> vector<22x64xf32>
    %86 = arith.addf %81, %85 : vector<22x64xf32>
    %87 = vector.extract_strided_slice %60 {offsets = [5, 0], sizes = [22, 16], strides = [1, 1]} : vector<29x16xf32> to vector<22x16xf32>
    %c5 = arith.constant 5 : index
    %c0_52 = arith.constant 0 : index
    %c0_53 = arith.constant 0 : index
    %88 = vector.load %arg8[%c5, %c0_52, %c0_53] : memref<8x16x64xf32, #tpu.memory_space<vmem>>, vector<1x16x64xf32>
    %89 = vector.shape_cast %88 : vector<1x16x64xf32> to vector<16x64xf32>
    %cst_54 = arith.constant dense<0.000000e+00> : vector<22x64xf32>
    %90 = tpu.matmul %87, %89, %cst_54 {dimension_numbers = #tpu.dot_dimension_numbers<[1], [0], [0], [1], [0, 0, 1, 1], [], []>} : vector<22x16xf32>, vector<16x64xf32>, vector<22x64xf32> -> vector<22x64xf32>
    %91 = arith.addf %86, %90 : vector<22x64xf32>
    %92 = vector.extract_strided_slice %60 {offsets = [6, 0], sizes = [22, 16], strides = [1, 1]} : vector<29x16xf32> to vector<22x16xf32>
    %c6 = arith.constant 6 : index
    %c0_55 = arith.constant 0 : index
    %c0_56 = arith.constant 0 : index
    %93 = vector.load %arg8[%c6, %c0_55, %c0_56] : memref<8x16x64xf32, #tpu.memory_space<vmem>>, vector<1x16x64xf32>
    %94 = vector.shape_cast %93 : vector<1x16x64xf32> to vector<16x64xf32>
    %cst_57 = arith.constant dense<0.000000e+00> : vector<22x64xf32>
    %95 = tpu.matmul %92, %94, %cst_57 {dimension_numbers = #tpu.dot_dimension_numbers<[1], [0], [0], [1], [0, 0, 1, 1], [], []>} : vector<22x16xf32>, vector<16x64xf32>, vector<22x64xf32> -> vector<22x64xf32>
    %96 = arith.addf %91, %95 : vector<22x64xf32>
    %97 = vector.extract_strided_slice %60 {offsets = [7, 0], sizes = [22, 16], strides = [1, 1]} : vector<29x16xf32> to vector<22x16xf32>
    %c7 = arith.constant 7 : index
    %c0_58 = arith.constant 0 : index
    %c0_59 = arith.constant 0 : index
    %98 = vector.load %arg8[%c7, %c0_58, %c0_59] : memref<8x16x64xf32, #tpu.memory_space<vmem>>, vector<1x16x64xf32>
    %99 = vector.shape_cast %98 : vector<1x16x64xf32> to vector<16x64xf32>
    %cst_60 = arith.constant dense<0.000000e+00> : vector<22x64xf32>
    %100 = tpu.matmul %97, %99, %cst_60 {dimension_numbers = #tpu.dot_dimension_numbers<[1], [0], [0], [1], [0, 0, 1, 1], [], []>} : vector<22x16xf32>, vector<16x64xf32>, vector<22x64xf32> -> vector<22x64xf32>
    %101 = arith.addf %96, %100 : vector<22x64xf32>
    %c0_61 = arith.constant 0 : index
    %c0_62 = arith.constant 0 : index
    %102 = vector.load %arg9[%c0_61, %c0_62] : memref<1x64xf32, #tpu.memory_space<vmem>>, vector<1x64xf32>
    %103 = vector.broadcast %102 : vector<1x64xf32> to vector<22x64xf32>
    %104 = arith.addf %101, %103 : vector<22x64xf32>
    %cst_63 = arith.constant 0.000000e+00 : f32
    %105 = vector.broadcast %cst_63 : f32 to vector<22x64xf32>
    %106 = arith.maximumf %104, %105 : vector<22x64xf32>
    %cst_64 = arith.constant 0.000000e+00 : f32
    %107 = vector.broadcast %cst_64 : f32 to vector<11x128xf32>
    %108 = vector.extract_strided_slice %106 {offsets = [0, 0], sizes = [11, 64], strides = [1, 1]} : vector<22x64xf32> to vector<11x64xf32>
    %c0_65 = arith.constant 0 : index
    %c0_66 = arith.constant 0 : index
    %c0_67 = arith.constant 0 : index
    %109 = vector.load %arg10[%c0_65, %c0_66, %c0_67] : memref<12x64x128xf32, #tpu.memory_space<vmem>>, vector<1x64x128xf32>
    %110 = vector.shape_cast %109 : vector<1x64x128xf32> to vector<64x128xf32>
    %cst_68 = arith.constant dense<0.000000e+00> : vector<11x128xf32>
    %111 = tpu.matmul %108, %110, %cst_68 {dimension_numbers = #tpu.dot_dimension_numbers<[1], [0], [0], [1], [0, 0, 1, 1], [], []>} : vector<11x64xf32>, vector<64x128xf32>, vector<11x128xf32> -> vector<11x128xf32>
    %112 = arith.addf %107, %111 : vector<11x128xf32>
    %113 = vector.extract_strided_slice %106 {offsets = [1, 0], sizes = [11, 64], strides = [1, 1]} : vector<22x64xf32> to vector<11x64xf32>
    %c1_69 = arith.constant 1 : index
    %c0_70 = arith.constant 0 : index
    %c0_71 = arith.constant 0 : index
    %114 = vector.load %arg10[%c1_69, %c0_70, %c0_71] : memref<12x64x128xf32, #tpu.memory_space<vmem>>, vector<1x64x128xf32>
    %115 = vector.shape_cast %114 : vector<1x64x128xf32> to vector<64x128xf32>
    %cst_72 = arith.constant dense<0.000000e+00> : vector<11x128xf32>
    %116 = tpu.matmul %113, %115, %cst_72 {dimension_numbers = #tpu.dot_dimension_numbers<[1], [0], [0], [1], [0, 0, 1, 1], [], []>} : vector<11x64xf32>, vector<64x128xf32>, vector<11x128xf32> -> vector<11x128xf32>
    %117 = arith.addf %112, %116 : vector<11x128xf32>
    %118 = vector.extract_strided_slice %106 {offsets = [2, 0], sizes = [11, 64], strides = [1, 1]} : vector<22x64xf32> to vector<11x64xf32>
    %c2_73 = arith.constant 2 : index
    %c0_74 = arith.constant 0 : index
    %c0_75 = arith.constant 0 : index
    %119 = vector.load %arg10[%c2_73, %c0_74, %c0_75] : memref<12x64x128xf32, #tpu.memory_space<vmem>>, vector<1x64x128xf32>
    %120 = vector.shape_cast %119 : vector<1x64x128xf32> to vector<64x128xf32>
    %cst_76 = arith.constant dense<0.000000e+00> : vector<11x128xf32>
    %121 = tpu.matmul %118, %120, %cst_76 {dimension_numbers = #tpu.dot_dimension_numbers<[1], [0], [0], [1], [0, 0, 1, 1], [], []>} : vector<11x64xf32>, vector<64x128xf32>, vector<11x128xf32> -> vector<11x128xf32>
    %122 = arith.addf %117, %121 : vector<11x128xf32>
    %123 = vector.extract_strided_slice %106 {offsets = [3, 0], sizes = [11, 64], strides = [1, 1]} : vector<22x64xf32> to vector<11x64xf32>
    %c3_77 = arith.constant 3 : index
    %c0_78 = arith.constant 0 : index
    %c0_79 = arith.constant 0 : index
    %124 = vector.load %arg10[%c3_77, %c0_78, %c0_79] : memref<12x64x128xf32, #tpu.memory_space<vmem>>, vector<1x64x128xf32>
    %125 = vector.shape_cast %124 : vector<1x64x128xf32> to vector<64x128xf32>
    %cst_80 = arith.constant dense<0.000000e+00> : vector<11x128xf32>
    %126 = tpu.matmul %123, %125, %cst_80 {dimension_numbers = #tpu.dot_dimension_numbers<[1], [0], [0], [1], [0, 0, 1, 1], [], []>} : vector<11x64xf32>, vector<64x128xf32>, vector<11x128xf32> -> vector<11x128xf32>
    %127 = arith.addf %122, %126 : vector<11x128xf32>
    %128 = vector.extract_strided_slice %106 {offsets = [4, 0], sizes = [11, 64], strides = [1, 1]} : vector<22x64xf32> to vector<11x64xf32>
    %c4_81 = arith.constant 4 : index
    %c0_82 = arith.constant 0 : index
    %c0_83 = arith.constant 0 : index
    %129 = vector.load %arg10[%c4_81, %c0_82, %c0_83] : memref<12x64x128xf32, #tpu.memory_space<vmem>>, vector<1x64x128xf32>
    %130 = vector.shape_cast %129 : vector<1x64x128xf32> to vector<64x128xf32>
    %cst_84 = arith.constant dense<0.000000e+00> : vector<11x128xf32>
    %131 = tpu.matmul %128, %130, %cst_84 {dimension_numbers = #tpu.dot_dimension_numbers<[1], [0], [0], [1], [0, 0, 1, 1], [], []>} : vector<11x64xf32>, vector<64x128xf32>, vector<11x128xf32> -> vector<11x128xf32>
    %132 = arith.addf %127, %131 : vector<11x128xf32>
    %133 = vector.extract_strided_slice %106 {offsets = [5, 0], sizes = [11, 64], strides = [1, 1]} : vector<22x64xf32> to vector<11x64xf32>
    %c5_85 = arith.constant 5 : index
    %c0_86 = arith.constant 0 : index
    %c0_87 = arith.constant 0 : index
    %134 = vector.load %arg10[%c5_85, %c0_86, %c0_87] : memref<12x64x128xf32, #tpu.memory_space<vmem>>, vector<1x64x128xf32>
    %135 = vector.shape_cast %134 : vector<1x64x128xf32> to vector<64x128xf32>
    %cst_88 = arith.constant dense<0.000000e+00> : vector<11x128xf32>
    %136 = tpu.matmul %133, %135, %cst_88 {dimension_numbers = #tpu.dot_dimension_numbers<[1], [0], [0], [1], [0, 0, 1, 1], [], []>} : vector<11x64xf32>, vector<64x128xf32>, vector<11x128xf32> -> vector<11x128xf32>
    %137 = arith.addf %132, %136 : vector<11x128xf32>
    %138 = vector.extract_strided_slice %106 {offsets = [6, 0], sizes = [11, 64], strides = [1, 1]} : vector<22x64xf32> to vector<11x64xf32>
    %c6_89 = arith.constant 6 : index
    %c0_90 = arith.constant 0 : index
    %c0_91 = arith.constant 0 : index
    %139 = vector.load %arg10[%c6_89, %c0_90, %c0_91] : memref<12x64x128xf32, #tpu.memory_space<vmem>>, vector<1x64x128xf32>
    %140 = vector.shape_cast %139 : vector<1x64x128xf32> to vector<64x128xf32>
    %cst_92 = arith.constant dense<0.000000e+00> : vector<11x128xf32>
    %141 = tpu.matmul %138, %140, %cst_92 {dimension_numbers = #tpu.dot_dimension_numbers<[1], [0], [0], [1], [0, 0, 1, 1], [], []>} : vector<11x64xf32>, vector<64x128xf32>, vector<11x128xf32> -> vector<11x128xf32>
    %142 = arith.addf %137, %141 : vector<11x128xf32>
    %143 = vector.extract_strided_slice %106 {offsets = [7, 0], sizes = [11, 64], strides = [1, 1]} : vector<22x64xf32> to vector<11x64xf32>
    %c7_93 = arith.constant 7 : index
    %c0_94 = arith.constant 0 : index
    %c0_95 = arith.constant 0 : index
    %144 = vector.load %arg10[%c7_93, %c0_94, %c0_95] : memref<12x64x128xf32, #tpu.memory_space<vmem>>, vector<1x64x128xf32>
    %145 = vector.shape_cast %144 : vector<1x64x128xf32> to vector<64x128xf32>
    %cst_96 = arith.constant dense<0.000000e+00> : vector<11x128xf32>
    %146 = tpu.matmul %143, %145, %cst_96 {dimension_numbers = #tpu.dot_dimension_numbers<[1], [0], [0], [1], [0, 0, 1, 1], [], []>} : vector<11x64xf32>, vector<64x128xf32>, vector<11x128xf32> -> vector<11x128xf32>
    %147 = arith.addf %142, %146 : vector<11x128xf32>
    %148 = vector.extract_strided_slice %106 {offsets = [8, 0], sizes = [11, 64], strides = [1, 1]} : vector<22x64xf32> to vector<11x64xf32>
    %c8 = arith.constant 8 : index
    %c0_97 = arith.constant 0 : index
    %c0_98 = arith.constant 0 : index
    %149 = vector.load %arg10[%c8, %c0_97, %c0_98] : memref<12x64x128xf32, #tpu.memory_space<vmem>>, vector<1x64x128xf32>
    %150 = vector.shape_cast %149 : vector<1x64x128xf32> to vector<64x128xf32>
    %cst_99 = arith.constant dense<0.000000e+00> : vector<11x128xf32>
    %151 = tpu.matmul %148, %150, %cst_99 {dimension_numbers = #tpu.dot_dimension_numbers<[1], [0], [0], [1], [0, 0, 1, 1], [], []>} : vector<11x64xf32>, vector<64x128xf32>, vector<11x128xf32> -> vector<11x128xf32>
    %152 = arith.addf %147, %151 : vector<11x128xf32>
    %153 = vector.extract_strided_slice %106 {offsets = [9, 0], sizes = [11, 64], strides = [1, 1]} : vector<22x64xf32> to vector<11x64xf32>
    %c9 = arith.constant 9 : index
    %c0_100 = arith.constant 0 : index
    %c0_101 = arith.constant 0 : index
    %154 = vector.load %arg10[%c9, %c0_100, %c0_101] : memref<12x64x128xf32, #tpu.memory_space<vmem>>, vector<1x64x128xf32>
    %155 = vector.shape_cast %154 : vector<1x64x128xf32> to vector<64x128xf32>
    %cst_102 = arith.constant dense<0.000000e+00> : vector<11x128xf32>
    %156 = tpu.matmul %153, %155, %cst_102 {dimension_numbers = #tpu.dot_dimension_numbers<[1], [0], [0], [1], [0, 0, 1, 1], [], []>} : vector<11x64xf32>, vector<64x128xf32>, vector<11x128xf32> -> vector<11x128xf32>
    %157 = arith.addf %152, %156 : vector<11x128xf32>
    %158 = vector.extract_strided_slice %106 {offsets = [10, 0], sizes = [11, 64], strides = [1, 1]} : vector<22x64xf32> to vector<11x64xf32>
    %c10 = arith.constant 10 : index
    %c0_103 = arith.constant 0 : index
    %c0_104 = arith.constant 0 : index
    %159 = vector.load %arg10[%c10, %c0_103, %c0_104] : memref<12x64x128xf32, #tpu.memory_space<vmem>>, vector<1x64x128xf32>
    %160 = vector.shape_cast %159 : vector<1x64x128xf32> to vector<64x128xf32>
    %cst_105 = arith.constant dense<0.000000e+00> : vector<11x128xf32>
    %161 = tpu.matmul %158, %160, %cst_105 {dimension_numbers = #tpu.dot_dimension_numbers<[1], [0], [0], [1], [0, 0, 1, 1], [], []>} : vector<11x64xf32>, vector<64x128xf32>, vector<11x128xf32> -> vector<11x128xf32>
    %162 = arith.addf %157, %161 : vector<11x128xf32>
    %163 = vector.extract_strided_slice %106 {offsets = [11, 0], sizes = [11, 64], strides = [1, 1]} : vector<22x64xf32> to vector<11x64xf32>
    %c11 = arith.constant 11 : index
    %c0_106 = arith.constant 0 : index
    %c0_107 = arith.constant 0 : index
    %164 = vector.load %arg10[%c11, %c0_106, %c0_107] : memref<12x64x128xf32, #tpu.memory_space<vmem>>, vector<1x64x128xf32>
    %165 = vector.shape_cast %164 : vector<1x64x128xf32> to vector<64x128xf32>
    %cst_108 = arith.constant dense<0.000000e+00> : vector<11x128xf32>
    %166 = tpu.matmul %163, %165, %cst_108 {dimension_numbers = #tpu.dot_dimension_numbers<[1], [0], [0], [1], [0, 0, 1, 1], [], []>} : vector<11x64xf32>, vector<64x128xf32>, vector<11x128xf32> -> vector<11x128xf32>
    %167 = arith.addf %162, %166 : vector<11x128xf32>
    %c0_109 = arith.constant 0 : index
    %c0_110 = arith.constant 0 : index
    %168 = vector.load %arg11[%c0_109, %c0_110] : memref<1x128xf32, #tpu.memory_space<vmem>>, vector<1x128xf32>
    %169 = vector.broadcast %168 : vector<1x128xf32> to vector<11x128xf32>
    %170 = arith.addf %167, %169 : vector<11x128xf32>
    %cst_111 = arith.constant 0.000000e+00 : f32
    %171 = vector.broadcast %cst_111 : f32 to vector<11x128xf32>
    %172 = arith.maximumf %170, %171 : vector<11x128xf32>
    %c0_112 = arith.constant 0 : index
    %c0_113 = arith.constant 0 : index
    %c0_114 = arith.constant 0 : index
    %173 = vector.load %arg12[%c0_112, %c0_113, %c0_114] : memref<1x11x128xf32, #tpu.memory_space<vmem>>, vector<1x11x128xf32>
    %174 = vector.shape_cast %173 : vector<1x11x128xf32> to vector<11x128xf32>
    %175 = vector.shape_cast %172 : vector<11x128xf32> to vector<1x11x128xf32>
    tpu.vector_store %arg12[%c0_112, %c0_113, %c0_114], %175 {strides = array<i32>} : memref<1x11x128xf32, #tpu.memory_space<vmem>>, vector<1x11x128xf32>,
    return
  }
  func.func @transform_0(%arg0: i32) -> (i32, i32, i32) {
    %c0_i32 = arith.constant 0 : i32
    %c0_i32_0 = arith.constant 0 : i32
    %c0_i32_1 = arith.constant 0 : i32
    return %arg0, %c0_i32, %c0_i32_0 : i32, i32, i32
  }
  func.func @transform_1(%arg0: i32) -> (i32, i32) {
    %c0_i32 = arith.constant 0 : i32
    %c0_i32_0 = arith.constant 0 : i32
    %c0_i32_1 = arith.constant 0 : i32
    return %c0_i32, %c0_i32_0 : i32, i32
  }
  func.func @transform_2(%arg0: i32) -> (i32, i32) {
    %c0_i32 = arith.constant 0 : i32
    %c0_i32_0 = arith.constant 0 : i32
    %c0_i32_1 = arith.constant 0 : i32
    return %c0_i32, %c0_i32_0 : i32, i32
  }
  func.func @transform_3(%arg0: i32) -> (i32, i32) {
    %c0_i32 = arith.constant 0 : i32
    %c0_i32_0 = arith.constant 0 : i32
    %c0_i32_1 = arith.constant 0 : i32
    return %c0_i32, %c0_i32_0 : i32, i32
  }
  func.func @transform_4(%arg0: i32) -> (i32, i32) {
    %c0_i32 = arith.constant 0 : i32
    %c0_i32_0 = arith.constant 0 : i32
    %c0_i32_1 = arith.constant 0 : i32
    return %c0_i32, %c0_i32_0 : i32, i32
  }
  func.func @transform_5(%arg0: i32) -> (i32, i32, i32) {
    %c0_i32 = arith.constant 0 : i32
    %c0_i32_0 = arith.constant 0 : i32
    %c0_i32_1 = arith.constant 0 : i32
    %c0_i32_2 = arith.constant 0 : i32
    return %c0_i32, %c0_i32_0, %c0_i32_1 : i32, i32, i32
  }
  func.func @transform_6(%arg0: i32) -> (i32, i32) {
    %c0_i32 = arith.constant 0 : i32
    %c0_i32_0 = arith.constant 0 : i32
    %c0_i32_1 = arith.constant 0 : i32
    return %c0_i32, %c0_i32_0 : i32, i32
  }
  func.func @transform_7(%arg0: i32) -> (i32, i32, i32) {
    %c0_i32 = arith.constant 0 : i32
    %c0_i32_0 = arith.constant 0 : i32
    %c0_i32_1 = arith.constant 0 : i32
    %c0_i32_2 = arith.constant 0 : i32
    return %c0_i32, %c0_i32_0, %c0_i32_1 : i32, i32, i32
  }
  func.func @transform_8(%arg0: i32) -> (i32, i32) {
    %c0_i32 = arith.constant 0 : i32
    %c0_i32_0 = arith.constant 0 : i32
    %c0_i32_1 = arith.constant 0 : i32
    return %c0_i32, %c0_i32_0 : i32, i32
  }
  func.func @transform_9(%arg0: i32) -> (i32, i32, i32) {
    %c0_i32 = arith.constant 0 : i32
    %c0_i32_0 = arith.constant 0 : i32
    %c0_i32_1 = arith.constant 0 : i32
    %c0_i32_2 = arith.constant 0 : i32
    return %c0_i32, %c0_i32_0, %c0_i32_1 : i32, i32, i32
  }
  func.func @transform_10(%arg0: i32) -> (i32, i32) {
    %c0_i32 = arith.constant 0 : i32
    %c0_i32_0 = arith.constant 0 : i32
    %c0_i32_1 = arith.constant 0 : i32
    return %c0_i32, %c0_i32_0 : i32, i32
  }
  func.func @transform_11(%arg0: i32) -> (i32, i32, i32) {
    %c0_i32 = arith.constant 0 : i32
    %c0_i32_0 = arith.constant 0 : i32
    %c0_i32_1 = arith.constant 0 : i32
    return %arg0, %c0_i32, %c0_i32_0 : i32, i32, i32
  }
}

</mosaic_0001>

<llo_original>
// kernel: tpu_custom_call.1
$region0: #{tpu_custom_call.1}
  #allocation0 [shape = 'u32[]', space=smem, size = 0x4, offset = 0x4, fixed_abs, tag = 'smem constant byte address 0x4 - core index']
  #allocation1 [shape = 'u32[144,128]{1,0:T(1,128)}', space=vmem, size = 0x12000, scoped, tag = 'internal scratch']
  %s0 = inlined_call_operand.vmem [shape: s32[2,32,1], index: 0, kind: input, shape index: {}]
  %s1 = inlined_call_operand.vmem [shape: f32[26,128], index: 1, kind: input, shape index: {}]
  %s2 = inlined_call_operand.vmem [shape: f32[32,128], index: 2, kind: input, shape index: {}]
  %s3 = inlined_call_operand.vmem [shape: f32[1,128], index: 3, kind: input, shape index: {}]
  %s4 = inlined_call_operand.vmem [shape: f32[1,128], index: 4, kind: input, shape index: {}]
  %s5 = inlined_call_operand.vmem [shape: f32[4,128,16], index: 5, kind: input, shape index: {}]
  %s6 = inlined_call_operand.vmem [shape: f32[1,16], index: 6, kind: input, shape index: {}]
  %s7 = inlined_call_operand.vmem [shape: f32[8,16,64], index: 7, kind: input, shape index: {}]
  %s8 = inlined_call_operand.vmem [shape: f32[1,64], index: 8, kind: input, shape index: {}]
  %s9 = inlined_call_operand.hbm [shape: f32[12,64,128], index: 9, kind: input, shape index: {}]
  %s10 = inlined_call_operand.vmem [shape: f32[1,128], index: 10, kind: input, shape index: {}]
  %s11 = inlined_call_operand.vmem [shape: f32[2,11,128], index: 11, kind: output, shape index: {}]
  %s12 = sld [smem:[#allocation0]]
  $region81: #{tpu_custom_call.1} parent=0
    _
  %s14 = ssub.s32 1, %s12
  %s15 = scalar_select 0, %s14, %s12
  $region1: #{tpu_custom_call.1} parent=0
    #allocation2 [shape = 'u8[393216]{0}', space=vmem, size = 0x60000, scoped, tag = 'input window, operand 9, single buffered']
    #allocation3 [shape = 's32[2]{0}', space=sflag, size = 0x8, scoped, tag = 'scoped memory for tpu_custom_call.1']
    %16 = vsyncpa [#allocation3], 0
    loop: start=0, step=1, limit=4
    $region2: #{tpu_custom_call.1} parent=1 // loop_pre_header
      _
    $region3: #{tpu_custom_call.1} parent=1 // loop_header
      %s18 = sphi 0, %s22
      %p19 = scmp.ge.s32.totalorder %s18, 4
      %s28 = sphi 0, %s30
      %s31 = sphi 0, %s28
      %s32 = sphi 0, %s31
      %s48 = sphi 0, %s32
      %s52 = sphi 0, %s52
      %s54 = sphi 0, %s52
      %s55 = sphi 0, %s54
      %s69 = sphi 0, %s55
      %s73 = sphi 0, %s73
      %s75 = sphi 0, %s73
      %s76 = sphi 0, %s75
      %s90 = sphi 0, %s76
      %s94 = sphi 0, %s94
      %s96 = sphi 0, %s94
      %s97 = sphi 0, %s96
      %s111 = sphi 0, %s97
      %s115 = sphi 0, %s115
      %s117 = sphi 0, %s115
      %s118 = sphi 0, %s117
      %s132 = sphi 0, %s118
      %s136 = sphi 0, %s136
      %s138 = sphi 0, %s136
      %s139 = sphi 0, %s138
      %s153 = sphi 0, %s139
      %s157 = sphi 0, %s157
      %s159 = sphi 0, %s157
      %s160 = sphi 0, %s159
      %s174 = sphi 0, %s160
      %s178 = sphi 0, %s178
      %s180 = sphi 0, %s178
      %s181 = sphi 0, %s180
      %s195 = sphi 0, %s181
      %s199 = sphi 0, %s199
      %s201 = sphi 0, %s199
      %s202 = sphi 0, %s201
      %s216 = sphi 0, %s202
      %s220 = sphi 0, %s220
      %s222 = sphi 0, %s220
      %s223 = sphi 0, %s222
      %s237 = sphi 0, %s223
      %s241 = sphi 0, %s241
      %s243 = sphi 0, %s241
      %s244 = sphi 0, %s243
      %s258 = sphi 0, %s244
      %s264 = sphi 0, %s266
      %s267 = sphi 0, %s264
      %s268 = sphi 0, %s267
      %s284 = sphi 0, %s268
    $region4: #{tpu_custom_call.1} parent=1 // loop_header_branch
      %21 = sbr.rel (%p19) target = $region8
    $region5: #{tpu_custom_call.1} parent=1 // loop_body
      %s23 = ssub.s32 %s18, 1
      %s24 = ssub.s32 %s18, 2
      %s25 = sadd.s32 %s18, 1
      %s26 = ssub.s32 %s18, %s25
      %p27 = scmp.eq.s32.totalorder %s26, 0
      %s29 = sadd.s32 %s28, 1
      %s30 = scalar_select %p27, %s28, %s29
      %p33 = pneg %p27
      %p34 = scmp.eq.s32.totalorder %s18, 1
      %p35 = por %p33, %p34
      %p36 = scmp.ne.s32.totalorder %s28, %s31
      %p37 = scmp.eq.s32.totalorder %s18, 0
      %p38 = por %p36, %p37
      %p39 = scmp.ne.s32.totalorder %s28, %s31
      %p40 = scmp.eq.s32.totalorder %s23, 1
      %p41 = por %p39, %p40
      %p42 = scmp.ne.s32.totalorder %s31, %s32
      %p43 = scmp.eq.s32.totalorder %s23, 0
      %p44 = por %p42, %p43
      %p45 = scmp.ne.s32.totalorder %s31, %s32
      %p46 = scmp.eq.s32.totalorder %s24, 1
      %p47 = por %p45, %p46
      %p49 = scmp.ne.s32.totalorder %s32, %s48
      %p50 = scmp.eq.s32.totalorder %s24, 0
      %p51 = por %p49, %p50
      %s53 = sadd.s32 %s52, 1
      %p56 = scmp.eq.s32.totalorder %s18, 1
      %p57 = scmp.ne.s32.totalorder %s52, %s54
      %p58 = scmp.eq.s32.totalorder %s18, 0
      %p59 = por %p57, %p58
      %p60 = scmp.ne.s32.totalorder %s52, %s54
      %p61 = scmp.eq.s32.totalorder %s23, 1
      %p62 = por %p60, %p61
      %p63 = scmp.ne.s32.totalorder %s54, %s55
      %p64 = scmp.eq.s32.totalorder %s23, 0
      %p65 = por %p63, %p64
      %p66 = scmp.ne.s32.totalorder %s54, %s55
      %p67 = scmp.eq.s32.totalorder %s24, 1
      %p68 = por %p66, %p67
      %p70 = scmp.ne.s32.totalorder %s55, %s69
      %p71 = scmp.eq.s32.totalorder %s24, 0
      %p72 = por %p70, %p71
      %s74 = sadd.s32 %s73, 1
      %p77 = scmp.eq.s32.totalorder %s18, 1
      %p78 = scmp.ne.s32.totalorder %s73, %s75
      %p79 = scmp.eq.s32.totalorder %s18, 0
      %p80 = por %p78, %p79
      %p81 = scmp.ne.s32.totalorder %s73, %s75
      %p82 = scmp.eq.s32.totalorder %s23, 1
      %p83 = por %p81, %p82
      %p84 = scmp.ne.s32.totalorder %s75, %s76
      %p85 = scmp.eq.s32.totalorder %s23, 0
      %p86 = por %p84, %p85
      %p87 = scmp.ne.s32.totalorder %s75, %s76
      %p88 = scmp.eq.s32.totalorder %s24, 1
      %p89 = por %p87, %p88
      %p91 = scmp.ne.s32.totalorder %s76, %s90
      %p92 = scmp.eq.s32.totalorder %s24, 0
      %p93 = por %p91, %p92
      %s95 = sadd.s32 %s94, 1
      %p98 = scmp.eq.s32.totalorder %s18, 1
      %p99 = scmp.ne.s32.totalorder %s94, %s96
      %p100 = scmp.eq.s32.totalorder %s18, 0
      %p101 = por %p99, %p100
      %p102 = scmp.ne.s32.totalorder %s94, %s96
      %p103 = scmp.eq.s32.totalorder %s23, 1
      %p104 = por %p102, %p103
      %p105 = scmp.ne.s32.totalorder %s96, %s97
      %p106 = scmp.eq.s32.totalorder %s23, 0
      %p107 = por %p105, %p106
      %p108 = scmp.ne.s32.totalorder %s96, %s97
      %p109 = scmp.eq.s32.totalorder %s24, 1
      %p110 = por %p108, %p109
      %p112 = scmp.ne.s32.totalorder %s97, %s111
      %p113 = scmp.eq.s32.totalorder %s24, 0
      %p114 = por %p112, %p113
      %s116 = sadd.s32 %s115, 1
      %p119 = scmp.eq.s32.totalorder %s18, 1
      %p120 = scmp.ne.s32.totalorder %s115, %s117
      %p121 = scmp.eq.s32.totalorder %s18, 0
      %p122 = por %p120, %p121
      %p123 = scmp.ne.s32.totalorder %s115, %s117
      %p124 = scmp.eq.s32.totalorder %s23, 1
      %p125 = por %p123, %p124
      %p126 = scmp.ne.s32.totalorder %s117, %s118
      %p127 = scmp.eq.s32.totalorder %s23, 0
      %p128 = por %p126, %p127
      %p129 = scmp.ne.s32.totalorder %s117, %s118
      %p130 = scmp.eq.s32.totalorder %s24, 1
      %p131 = por %p129, %p130
      %p133 = scmp.ne.s32.totalorder %s118, %s132
      %p134 = scmp.eq.s32.totalorder %s24, 0
      %p135 = por %p133, %p134
      %s137 = sadd.s32 %s136, 1
      %p140 = scmp.eq.s32.totalorder %s18, 1
      %p141 = scmp.ne.s32.totalorder %s136, %s138
      %p142 = scmp.eq.s32.totalorder %s18, 0
      %p143 = por %p141, %p142
      %p144 = scmp.ne.s32.totalorder %s136, %s138
      %p145 = scmp.eq.s32.totalorder %s23, 1
      %p146 = por %p144, %p145
      %p147 = scmp.ne.s32.totalorder %s138, %s139
      %p148 = scmp.eq.s32.totalorder %s23, 0
      %p149 = por %p147, %p148
      %p150 = scmp.ne.s32.totalorder %s138, %s139
      %p151 = scmp.eq.s32.totalorder %s24, 1
      %p152 = por %p150, %p151
      %p154 = scmp.ne.s32.totalorder %s139, %s153
      %p155 = scmp.eq.s32.totalorder %s24, 0
      %p156 = por %p154, %p155
      %s158 = sadd.s32 %s157, 1
      %p161 = scmp.eq.s32.totalorder %s18, 1
      %p162 = scmp.ne.s32.totalorder %s157, %s159
      %p163 = scmp.eq.s32.totalorder %s18, 0
      %p164 = por %p162, %p163
      %p165 = scmp.ne.s32.totalorder %s157, %s159
      %p166 = scmp.eq.s32.totalorder %s23, 1
      %p167 = por %p165, %p166
      %p168 = scmp.ne.s32.totalorder %s159, %s160
      %p169 = scmp.eq.s32.totalorder %s23, 0
      %p170 = por %p168, %p169
      %p171 = scmp.ne.s32.totalorder %s159, %s160
      %p172 = scmp.eq.s32.totalorder %s24, 1
      %p173 = por %p171, %p172
      %p175 = scmp.ne.s32.totalorder %s160, %s174
      %p176 = scmp.eq.s32.totalorder %s24, 0
      %p177 = por %p175, %p176
      %s179 = sadd.s32 %s178, 1
      %p182 = scmp.eq.s32.totalorder %s18, 1
      %p183 = scmp.ne.s32.totalorder %s178, %s180
      %p184 = scmp.eq.s32.totalorder %s18, 0
      %p185 = por %p183, %p184
      %p186 = scmp.ne.s32.totalorder %s178, %s180
      %p187 = scmp.eq.s32.totalorder %s23, 1
      %p188 = por %p186, %p187
      %p189 = scmp.ne.s32.totalorder %s180, %s181
      %p190 = scmp.eq.s32.totalorder %s23, 0
      %p191 = por %p189, %p190
      %p192 = scmp.ne.s32.totalorder %s180, %s181
      %p193 = scmp.eq.s32.totalorder %s24, 1
      %p194 = por %p192, %p193
      %p196 = scmp.ne.s32.totalorder %s181, %s195
      %p197 = scmp.eq.s32.totalorder %s24, 0
      %p198 = por %p196, %p197
      %s200 = sadd.s32 %s199, 1
      %p203 = scmp.eq.s32.totalorder %s18, 1
      %p204 = scmp.ne.s32.totalorder %s199, %s201
      %p205 = scmp.eq.s32.totalorder %s18, 0
      %p206 = por %p204, %p205
      %p207 = scmp.ne.s32.totalorder %s199, %s201
      %p208 = scmp.eq.s32.totalorder %s23, 1
      %p209 = por %p207, %p208
      %p210 = scmp.ne.s32.totalorder %s201, %s202
      %p211 = scmp.eq.s32.totalorder %s23, 0
      %p212 = por %p210, %p211
      %p213 = scmp.ne.s32.totalorder %s201, %s202
      %p214 = scmp.eq.s32.totalorder %s24, 1
      %p215 = por %p213, %p214
      %p217 = scmp.ne.s32.totalorder %s202, %s216
      %p218 = scmp.eq.s32.totalorder %s24, 0
      %p219 = por %p217, %p218
      %s221 = sadd.s32 %s220, 1
      %p224 = scmp.eq.s32.totalorder %s18, 1
      %p225 = scmp.ne.s32.totalorder %s220, %s222
      %p226 = scmp.eq.s32.totalorder %s18, 0
      %p227 = por %p225, %p226
      %p228 = scmp.ne.s32.totalorder %s220, %s222
      %p229 = scmp.eq.s32.totalorder %s23, 1
      %p230 = por %p228, %p229
      %p231 = scmp.ne.s32.totalorder %s222, %s223
      %p232 = scmp.eq.s32.totalorder %s23, 0
      %p233 = por %p231, %p232
      %p234 = scmp.ne.s32.totalorder %s222, %s223
      %p235 = scmp.eq.s32.totalorder %s24, 1
      %p236 = por %p234, %p235
      %p238 = scmp.ne.s32.totalorder %s223, %s237
      %p239 = scmp.eq.s32.totalorder %s24, 0
      %p240 = por %p238, %p239
      %s242 = sadd.s32 %s241, 1
      %p245 = scmp.eq.s32.totalorder %s18, 1
      %p246 = scmp.ne.s32.totalorder %s241, %s243
      %p247 = scmp.eq.s32.totalorder %s18, 0
      %p248 = por %p246, %p247
      %p249 = scmp.ne.s32.totalorder %s241, %s243
      %p250 = scmp.eq.s32.totalorder %s23, 1
      %p251 = por %p249, %p250
      %p252 = scmp.ne.s32.totalorder %s243, %s244
      %p253 = scmp.eq.s32.totalorder %s23, 0
      %p254 = por %p252, %p253
      %p255 = scmp.ne.s32.totalorder %s243, %s244
      %p256 = scmp.eq.s32.totalorder %s24, 1
      %p257 = por %p255, %p256
      %p259 = scmp.ne.s32.totalorder %s244, %s258
      %p260 = scmp.eq.s32.totalorder %s24, 0
      %p261 = por %p259, %p260
      %s262 = ssub.s32 %s18, %s25
      %p263 = scmp.eq.s32.totalorder %s262, 0
      %s265 = sadd.s32 %s264, 1
      %s266 = scalar_select %p263, %s264, %s265
      %p269 = pneg %p263
      %p270 = scmp.eq.s32.totalorder %s18, 1
      %p271 = por %p269, %p270
      %p272 = scmp.ne.s32.totalorder %s264, %s267
      %p273 = scmp.eq.s32.totalorder %s18, 0
      %p274 = por %p272, %p273
      %p275 = scmp.ne.s32.totalorder %s264, %s267
      %p276 = scmp.eq.s32.totalorder %s23, 1
      %p277 = por %p275, %p276
      %p278 = scmp.ne.s32.totalorder %s267, %s268
      %p279 = scmp.eq.s32.totalorder %s23, 0
      %p280 = por %p278, %p279
      %p281 = scmp.ne.s32.totalorder %s267, %s268
      %p282 = scmp.eq.s32.totalorder %s24, 1
      %p283 = por %p281, %p282
      %p285 = scmp.ne.s32.totalorder %s268, %s284
      %p286 = scmp.eq.s32.totalorder %s24, 0
      %p287 = por %p285, %p286
      %p288 = scmp.le.s32.totalorder 1, %s18
      %p289 = scmp.lt.s32.totalorder %s18, 3
      %p290 = pnand %p288, %p289
      %p291 = pneg %p290
      // Predicated region
      $region9: #{tpu_custom_call.1} parent=5 // pred_check
        _
      $region10: #{tpu_custom_call.1} parent=5 // pred_check_branch
        %293 = sbr.rel (%p290) target = $region12
      $region11: #{tpu_custom_call.1} parent=5 // pred_region
        %s294 = ssub.s32 %s18, 1
        // Predicated region
        $region13: #{tpu_custom_call.1} parent=11 // pred_check
          %p295 = pneg %p65
        $region14: #{tpu_custom_call.1} parent=11 // pred_check_branch
          %297 = sbr.rel (%p295) target = $region16
        $region15: #{tpu_custom_call.1} parent=11 // pred_region
          _
        $region16: #{tpu_custom_call.1} parent=11 // pred_fallthru
          _
        // Predicated region
        $region17: #{tpu_custom_call.1} parent=11 // pred_check
          %p298 = pneg %p86
        $region18: #{tpu_custom_call.1} parent=11 // pred_check_branch
          %300 = sbr.rel (%p298) target = $region20
        $region19: #{tpu_custom_call.1} parent=11 // pred_region
          _
        $region20: #{tpu_custom_call.1} parent=11 // pred_fallthru
          _
        // Predicated region
        $region21: #{tpu_custom_call.1} parent=11 // pred_check
          %p301 = pneg %p107
        $region22: #{tpu_custom_call.1} parent=11 // pred_check_branch
          %303 = sbr.rel (%p301) target = $region24
        $region23: #{tpu_custom_call.1} parent=11 // pred_region
          _
        $region24: #{tpu_custom_call.1} parent=11 // pred_fallthru
          _
        // Predicated region
        $region25: #{tpu_custom_call.1} parent=11 // pred_check
          %p304 = pneg %p128
        $region26: #{tpu_custom_call.1} parent=11 // pred_check_branch
          %306 = sbr.rel (%p304) target = $region28
        $region27: #{tpu_custom_call.1} parent=11 // pred_region
          _
        $region28: #{tpu_custom_call.1} parent=11 // pred_fallthru
          _
        // Predicated region
        $region29: #{tpu_custom_call.1} parent=11 // pred_check
          %p307 = pneg %p149
        $region30: #{tpu_custom_call.1} parent=11 // pred_check_branch
          %309 = sbr.rel (%p307) target = $region32
        $region31: #{tpu_custom_call.1} parent=11 // pred_region
          _
        $region32: #{tpu_custom_call.1} parent=11 // pred_fallthru
          _
        // Predicated region
        $region33: #{tpu_custom_call.1} parent=11 // pred_check
          %p310 = pneg %p170
        $region34: #{tpu_custom_call.1} parent=11 // pred_check_branch
          %312 = sbr.rel (%p310) target = $region36
        $region35: #{tpu_custom_call.1} parent=11 // pred_region
          _
        $region36: #{tpu_custom_call.1} parent=11 // pred_fallthru
          _
        // Predicated region
        $region37: #{tpu_custom_call.1} parent=11 // pred_check
          %p313 = pneg %p191
        $region38: #{tpu_custom_call.1} parent=11 // pred_check_branch
          %315 = sbr.rel (%p313) target = $region40
        $region39: #{tpu_custom_call.1} parent=11 // pred_region
          _
        $region40: #{tpu_custom_call.1} parent=11 // pred_fallthru
          _
        // Predicated region
        $region41: #{tpu_custom_call.1} parent=11 // pred_check
          %p316 = pneg %p212
        $region42: #{tpu_custom_call.1} parent=11 // pred_check_branch
          %318 = sbr.rel (%p316) target = $region44
        $region43: #{tpu_custom_call.1} parent=11 // pred_region
          _
        $region44: #{tpu_custom_call.1} parent=11 // pred_fallthru
          _
        // Predicated region
        $region45: #{tpu_custom_call.1} parent=11 // pred_check
          %p319 = pneg %p233
        $region46: #{tpu_custom_call.1} parent=11 // pred_check_branch
          %321 = sbr.rel (%p319) target = $region48
        $region47: #{tpu_custom_call.1} parent=11 // pred_region
          %s323 = ssub.s32 12288, 12288
          %324 = vsyncadd [#allocation3], %s323
          %s325 = sshll.u32 [#allocation2], 4
          %s326 = int_to_ptr.vmem [resolvable:$true] %s325
          %331 = dma.hbm_to_vmem [thread:$0]  %s9, 12288, %s326, [#allocation3], 128, 128, 8
        $region48: #{tpu_custom_call.1} parent=11 // pred_fallthru
          _
        // Predicated region
        $region49: #{tpu_custom_call.1} parent=11 // pred_check
          %p332 = pneg %p254
        $region50: #{tpu_custom_call.1} parent=11 // pred_check_branch
          %334 = sbr.rel (%p332) target = $region52
        $region51: #{tpu_custom_call.1} parent=11 // pred_region
          _
        $region52: #{tpu_custom_call.1} parent=11 // pred_fallthru
          _
      $region12: #{tpu_custom_call.1} parent=5 // pred_fallthru
        _
      %p335 = scmp.lt.s32.totalorder %s18, 2
      // Predicated region
      $region53: #{tpu_custom_call.1} parent=5 // pred_check
        %p336 = pneg %p335
      $region54: #{tpu_custom_call.1} parent=5 // pred_check_branch
        %338 = sbr.rel (%p336) target = $region56
      $region55: #{tpu_custom_call.1} parent=5 // pred_region
        // Predicated region
        $region57: #{tpu_custom_call.1} parent=55 // pred_check
          %p339 = pneg %p38
        $region58: #{tpu_custom_call.1} parent=55 // pred_check_branch
          %341 = sbr.rel (%p339) target = $region60
        $region59: #{tpu_custom_call.1} parent=55 // pred_region
          %p342 = scmp.lt.s32.totalorder %s18, 1
          %s343 = scalar_select %p342, %s18, 1
          %s344 = smul.addr %s343, 4
          %s345 = smul.addr %s344, 8
          %s346 = scalar_lea.vmem %s0, %s345
        $region60: #{tpu_custom_call.1} parent=55 // pred_fallthru
          _
      $region56: #{tpu_custom_call.1} parent=5 // pred_fallthru
        _
      %p347 = scmp.le.s32.totalorder 1, %s18
      %p348 = scmp.lt.s32.totalorder %s18, 3
      %p349 = pnand %p347, %p348
      %p350 = pneg %p349
      // Predicated region
      $region61: #{tpu_custom_call.1} parent=5 // pred_check
        _
      $region62: #{tpu_custom_call.1} parent=5 // pred_check_branch
        %352 = sbr.rel (%p349) target = $region64
      $region63: #{tpu_custom_call.1} parent=5 // pred_region
        %s353 = ssub.s32 %s18, 1
        // Predicated region
        $region65: #{tpu_custom_call.1} parent=63 // pred_check
          %p354 = pneg %p233
        $region66: #{tpu_custom_call.1} parent=63 // pred_check_branch
          %356 = sbr.rel (%p354) target = $region68
        $region67: #{tpu_custom_call.1} parent=63 // pred_region
          %357 = dma.done [#allocation3], 12288
        $region68: #{tpu_custom_call.1} parent=63 // pred_fallthru
          _
        %p358 = scmp.lt.s32.totalorder %s23, 1
        %s359 = scalar_select %p358, %s23, 1
        %s360 = smul.addr %s359, 4
        %s361 = smul.addr %s360, 8
        %s362 = scalar_lea.vmem %s0, %s361
        %p363 = pneg %p44
        %p364 = pneg %p41
        %p365 = pneg %p65
        %p366 = pneg %p62
        %p367 = pneg %p86
        %p368 = pneg %p83
        %p369 = pneg %p107
        %p370 = pneg %p104
        %p371 = pneg %p128
        %p372 = pneg %p125
        %p373 = pneg %p149
        %p374 = pneg %p146
        %p375 = pneg %p170
        %p376 = pneg %p167
        %p377 = pneg %p191
        %p378 = pneg %p188
        %p379 = pneg %p212
        %p380 = pneg %p209
        %p381 = pneg %p233
        %p382 = pneg %p230
        %p383 = pneg %p254
        %p384 = pneg %p251
        %p385 = pneg %p280
        %p386 = pneg %p277
        %p387 = scmp.lt.s32.totalorder %s23, 1
        %s388 = scalar_select %p387, %s23, 1
        %s389 = smul.addr %s388, 2
        %s390 = smul.addr %s389, 8
        %s391 = scalar_lea.vmem %s11, %s390
        %p392 = scmp.lt.s32.totalorder %s23, 1
        %s393 = scalar_select %p392, %s23, 1
        %s394 = smul.addr %s393, 4
        %s395 = smul.addr %s394, 8
        %s396 = scalar_lea.vmem %s0, %s395
        %p397 = scmp.lt.s32.totalorder %s23, 1
        %s398 = scalar_select %p397, %s23, 1
        %s399 = smul.addr %s398, 2
        %s400 = smul.addr %s399, 8
        %s401 = scalar_lea.vmem %s11, %s400
        %v402 = vld [vmem:[%s396] sm:$0xff]
        %v403 = vld [vmem:[%s396 + $0x8] sm:$0xff]
        %v404 = vld [vmem:[%s396 + $0x10] sm:$0xff]
        %v405 = vld [vmem:[%s396 + $0x18] sm:$0xff]
        %v406 = vlaneseq
        %v407 = vand.u32 %v406, 127
        %408 = vset.pattern.permute.xlu0 0
        %409 = vperm.xlu0 %408, %v402
        %v410 = vpop.permute.xlu0 %409
        %411 = vset.pattern.permute.xlu0 0
        %412 = vperm.xlu0 %411, %v403
        %v413 = vpop.permute.xlu0 %412
        %414 = vset.pattern.permute.xlu0 0
        %415 = vperm.xlu0 %414, %v404
        %v416 = vpop.permute.xlu0 %415
        %417 = vset.pattern.permute.xlu0 0
        %418 = vperm.xlu0 %417, %v405
        %v419 = vpop.permute.xlu0 %418
        %vm420 = vcmp.eq.s32.totalorder %v410, %v407
        %vm421 = vcmp.eq.s32.totalorder %v413, %v407
        %vm422 = vcmp.eq.s32.totalorder %v416, %v407
        %vm423 = vcmp.eq.s32.totalorder %v419, %v407
        %v424 = vsel %vm420, 1, 0
        %v425 = vsel %vm421, 1, 0
        %v426 = vsel %vm422, 1, 0
        %v427 = vsel %vm423, 1, 0
        %v428 = vcvt.s32.f32 %v424
        %v429 = vcvt.s32.f32 %v425
        %v430 = vcvt.s32.f32 %v426
        %v431 = vcvt.s32.f32 %v427
        %v432 = vld [vmem:[%s1] sm:$0xff]
        %v433 = vld [vmem:[%s1 + $0x8] sm:$0xff]
        %v434 = vld [vmem:[%s1 + $0x10] sm:$0xff]
        %v435 = vld [vmem:[%s1 + $0x18] sm:$0x3]
        %v436 = vld [vmem:[%s2] sm:$0xff]
        %v437 = vld [vmem:[%s2 + $0x8] sm:$0xff]
        %v438 = vld [vmem:[%s2 + $0x10] sm:$0xff]
        %v439 = vld [vmem:[%s2 + $0x18] sm:$0xff]
        %vm440 = vcmask 211968
        %v442 = vsel %vm440, %v428, 0
        %v445 = vsel %vm440, %v429, 0
        %v448 = vsel %vm440, %v430, 0
        %v451 = vsel %vm440, %v431, 0
        %vm453 = vcmask 1041408
        %v455 = vsel %vm453, %v435, 0
        %457 = vmatprep.subr.mxu0 0.0
        %458 = vmatpush1.msra.mxu0 %v432
        %459 = vmatprep.subr.mxu0 0.0
        %460 = vmatpush1.msra.mxu0 %v433
        %461 = vmatprep.subr.mxu0 0.0
        %462 = vmatpush1.msra.mxu0 %v434
        %463 = vmatprep.subr.mxu0 0.0
        %464 = vmatpush1.msra.mxu0 %v455
        %465 = vmatprep.subr.mxu0 0.0
        %466 = vmatpush1.msra.mxu0 0.0
        %467 = vmatprep.subr.mxu0 0.0
        %468 = vmatpush1.msra.mxu0 0.0
        %469 = vmatprep.subr.mxu0 0.0
        %470 = vmatpush1.msra.mxu0 0.0
        %471 = vmatprep.subr.mxu0 0.0
        %472 = vmatpush1.msra.mxu0 0.0
        %473 = vmatprep.subr.mxu0 0.0
        %474 = vmatpush1.msra.mxu0 0.0
        %475 = vmatprep.subr.mxu0 0.0
        %476 = vmatpush1.msra.mxu0 0.0
        %477 = vmatprep.subr.mxu0 0.0
        %478 = vmatpush1.msra.mxu0 0.0
        %479 = vmatprep.subr.mxu0 0.0
        %480 = vmatpush1.msra.mxu0 0.0
        %481 = vmatprep.subr.mxu0 0.0
        %482 = vmatpush1.msra.mxu0 0.0
        %483 = vmatprep.subr.mxu0 0.0
        %484 = vmatpush1.msra.mxu0 0.0
        %485 = vmatprep.subr.mxu0 0.0
        %486 = vmatpush1.msra.mxu0 0.0
        %487 = vmatprep.subr.mxu0 0.0
        %488 = vmatpush1.msra.mxu0 0.0
        %489 = vmatprep.subr.mxu0 0.0
        %490 = vmatpush1.msra.mxu0 0.0
        %491 = vmatprep.subr.mxu0 0.0
        %492 = vmatpush1.msra.mxu0 0.0
        %493 = vmatprep.subr.mxu0 0.0
        %494 = vmatpush1.msra.mxu0 0.0
        %495 = vmatprep.subr.mxu0 0.0
        %496 = vmatpush1.msra.mxu0 0.0
        %497 = vmatprep.subr.mxu0 0.0
        %498 = vmatpush1.msra.mxu0 0.0
        %499 = vmatprep.subr.mxu0 0.0
        %500 = vmatpush1.msra.mxu0 0.0
        %501 = vmatprep.subr.mxu0 0.0
        %502 = vmatpush1.msra.mxu0 0.0
        %503 = vmatprep.subr.mxu0 0.0
        %504 = vmatpush1.msra.mxu0 0.0
        %505 = vmatprep.subr.mxu0 0.0
        %506 = vmatpush1.msra.mxu0 0.0
        %507 = vmatprep.subr.mxu0 0.0
        %508 = vmatpush1.msra.mxu0 0.0
        %509 = vmatprep.subr.mxu0 0.0
        %510 = vmatpush1.msra.mxu0 0.0
        %511 = vmatprep.subr.mxu0 0.0
        %512 = vmatpush1.msra.mxu0 0.0
        %513 = vmatprep.subr.mxu0 0.0
        %514 = vmatpush1.msra.mxu0 0.0
        %515 = vmatprep.subr.mxu0 0.0
        %516 = vmatpush1.msra.mxu0 0.0
        %517 = vmatprep.subr.mxu0 0.0
        %518 = vmatpush1.msra.mxu0 0.0
        %519 = vmatprep.subr.mxu0 0.0
        %520 = vmatpush1.msra.mxu0 0.0
        %521 = vmatprep.mubr.f32.mxu0 0.0
        %522 = vmatmul.mubr.f32.gmra.mrb[0].mxu0 %v442
        %v523 = vpop.f32.mrb[0].mxu0
        %v524 = vadd.f32 %v436, %v523
        %v525 = vpop.f32.mrb[0].mxu0
        %526 = vmatprep.mubr.f32.mxu0 0.0
        %527 = vmatmul.mubr.f32.gmra.mrb[0].mxu0 %v445
        %v528 = vpop.f32.mrb[0].mxu0
        %v529 = vadd.f32 %v437, %v528
        %v530 = vpop.f32.mrb[0].mxu0
        %531 = vmatprep.mubr.f32.mxu0 0.0
        %532 = vmatmul.mubr.f32.gmra.mrb[0].mxu0 %v448
        %v533 = vpop.f32.mrb[0].mxu0
        %v534 = vadd.f32 %v438, %v533
        %v535 = vpop.f32.mrb[0].mxu0
        %536 = vmatprep.mubr.f32.mxu0 0.0
        %537 = vmatmul.mubr.f32.gmra.mrb[0].mxu0 %v451
        %v538 = vpop.f32.mrb[0].mxu0
        %v539 = vadd.f32 %v439, %v538
        %v540 = vpop.f32.mrb[0].mxu0
        %541 = vdwg.mxu0
        %542 = vadd.xlane.f32.xlu0 %v524
        %v543 = vpop.xlane.xlu0 %542
        %544 = vadd.xlane.f32.xlu0 %v529
        %v545 = vpop.xlane.xlu0 %544
        %546 = vadd.xlane.f32.xlu0 %v534
        %v547 = vpop.xlane.xlu0 %546
        %548 = vadd.xlane.f32.xlu0 %v539
        %v549 = vpop.xlane.xlu0 %548
        %v550 = vrcp.pop 128.0
        %v551 = vmul.f32 %v543, %v550
        %v552 = vmul.f32 %v545, %v550
        %v553 = vmul.f32 %v547, %v550
        %v554 = vmul.f32 %v549, %v550
        %v555 = vsub.f32 %v524, %v551
        %v556 = vsub.f32 %v529, %v552
        %v557 = vsub.f32 %v534, %v553
        %v558 = vsub.f32 %v539, %v554
        %v559 = vmul.f32 %v555, %v555
        %v560 = vmul.f32 %v556, %v556
        %v561 = vmul.f32 %v557, %v557
        %v562 = vmul.f32 %v558, %v558
        %563 = vadd.xlane.f32.xlu0 %v559
        %v564 = vpop.xlane.xlu0 %563
        %565 = vadd.xlane.f32.xlu0 %v560
        %v566 = vpop.xlane.xlu0 %565
        %567 = vadd.xlane.f32.xlu0 %v561
        %v568 = vpop.xlane.xlu0 %567
        %569 = vadd.xlane.f32.xlu0 %v562
        %v570 = vpop.xlane.xlu0 %569
        %v571 = vmul.f32 %v564, %v550
        %v572 = vmul.f32 %v566, %v550
        %v573 = vmul.f32 %v568, %v550
        %v574 = vmul.f32 %v570, %v550
        %v575 = vadd.f32 %v571, 1e-12
        %v576 = vadd.f32 %v572, 1e-12
        %v577 = vadd.f32 %v573, 1e-12
        %v578 = vadd.f32 %v574, 1e-12
        %v579 = vrsqrt.pop %v575
        %v580 = vrsqrt.pop %v576
        %v581 = vrsqrt.pop %v577
        %v582 = vrsqrt.pop %v578
        %v583 = vmul.f32 %v555, %v579
        %v584 = vmul.f32 %v556, %v580
        %v585 = vmul.f32 %v557, %v581
        %v586 = vmul.f32 %v558, %v582
        %v587 = vld [vmem:[%s3] sm:$0x1]
        %v589 = vlaneseq
        %v590 = vshrl.u32 %v589, 7
        %v591 = vsub.s32 0, %v590
        %v592 = vrot.slane %v587, %v591
        %v594 = vmul.f32 %v592, %v583
        %v595 = vmul.f32 %v592, %v584
        %v596 = vmul.f32 %v592, %v585
        %v597 = vmul.f32 %v592, %v586
        %v598 = vld [vmem:[%s4] sm:$0x1]
        %v600 = vlaneseq
        %v601 = vshrl.u32 %v600, 7
        %v602 = vsub.s32 0, %v601
        %v603 = vrot.slane %v598, %v602
        %v605 = vadd.f32 %v594, %v603
        %v606 = vadd.f32 %v595, %v603
        %v607 = vadd.f32 %v596, %v603
        %v608 = vadd.f32 %v597, %v603
        %v609 = vld [vmem:[%s5] sm:$0xff]
        %v610 = vld [vmem:[%s5 + $0x8] sm:$0xff]
        %v611 = vld [vmem:[%s5 + $0x10] sm:$0xff]
        %v612 = vld [vmem:[%s5 + $0x18] sm:$0xff]
        %v613 = vld [vmem:[%s5 + $0x20] sm:$0xff]
        %v614 = vld [vmem:[%s5 + $0x28] sm:$0xff]
        %v615 = vld [vmem:[%s5 + $0x30] sm:$0xff]
        %v616 = vld [vmem:[%s5 + $0x38] sm:$0xff]
        %v617 = vld [vmem:[%s5 + $0x40] sm:$0xff]
        %v618 = vld [vmem:[%s5 + $0x48] sm:$0xff]
        %v619 = vld [vmem:[%s5 + $0x50] sm:$0xff]
        %v620 = vld [vmem:[%s5 + $0x58] sm:$0xff]
        %v621 = vld [vmem:[%s5 + $0x60] sm:$0xff]
        %v622 = vld [vmem:[%s5 + $0x68] sm:$0xff]
        %v623 = vld [vmem:[%s5 + $0x70] sm:$0xff]
        %v624 = vld [vmem:[%s5 + $0x78] sm:$0xff]
        %s625 = scalar_lea.vmem %s5, 128
        %v626 = vld [vmem:[%s625] sm:$0xff]
        %v627 = vld [vmem:[%s625 + $0x8] sm:$0xff]
        %v628 = vld [vmem:[%s625 + $0x10] sm:$0xff]
        %v629 = vld [vmem:[%s625 + $0x18] sm:$0xff]
        %v630 = vld [vmem:[%s625 + $0x20] sm:$0xff]
        %v631 = vld [vmem:[%s625 + $0x28] sm:$0xff]
        %v632 = vld [vmem:[%s625 + $0x30] sm:$0xff]
        %v633 = vld [vmem:[%s625 + $0x38] sm:$0xff]
        %v634 = vld [vmem:[%s625 + $0x40] sm:$0xff]
        %v635 = vld [vmem:[%s625 + $0x48] sm:$0xff]
        %v636 = vld [vmem:[%s625 + $0x50] sm:$0xff]
        %v637 = vld [vmem:[%s625 + $0x58] sm:$0xff]
        %v638 = vld [vmem:[%s625 + $0x60] sm:$0xff]
        %v639 = vld [vmem:[%s625 + $0x68] sm:$0xff]
        %v640 = vld [vmem:[%s625 + $0x70] sm:$0xff]
        %v641 = vld [vmem:[%s625 + $0x78] sm:$0xff]
        %vm646 = vcmask 1046528
        %v647 = vrot.slane %v605, 1
        %v648 = vrot.slane %v606, 1
        %v649 = vsel %vm646, %v647, %v648
        %v650 = vrot.slane %v607, 1
        %v651 = vsel %vm646, %v648, %v650
        %v652 = vrot.slane %v608, 1
        %v653 = vsel %vm646, %v650, %v652
        %658 = vmatprep.subr.mxu0 0.0
        %659 = vmatpush1.msra.mxu0 %v626
        %660 = vmatprep.subr.mxu0 0.0
        %661 = vmatpush1.msra.mxu0 %v627
        %662 = vmatprep.subr.mxu0 0.0
        %663 = vmatpush1.msra.mxu0 %v628
        %664 = vmatprep.subr.mxu0 0.0
        %665 = vmatpush1.msra.mxu0 %v629
        %666 = vmatprep.subr.mxu0 0.0
        %667 = vmatpush1.msra.mxu0 %v630
        %668 = vmatprep.subr.mxu0 0.0
        %669 = vmatpush1.msra.mxu0 %v631
        %670 = vmatprep.subr.mxu0 0.0
        %671 = vmatpush1.msra.mxu0 %v632
        %672 = vmatprep.subr.mxu0 0.0
        %673 = vmatpush1.msra.mxu0 %v633
        %674 = vmatprep.subr.mxu0 0.0
        %675 = vmatpush1.msra.mxu0 %v634
        %676 = vmatprep.subr.mxu0 0.0
        %677 = vmatpush1.msra.mxu0 %v635
        %678 = vmatprep.subr.mxu0 0.0
        %679 = vmatpush1.msra.mxu0 %v636
        %680 = vmatprep.subr.mxu0 0.0
        %681 = vmatpush1.msra.mxu0 %v637
        %682 = vmatprep.subr.mxu0 0.0
        %683 = vmatpush1.msra.mxu0 %v638
        %684 = vmatprep.subr.mxu0 0.0
        %685 = vmatpush1.msra.mxu0 %v639
        %686 = vmatprep.subr.mxu0 0.0
        %687 = vmatpush1.msra.mxu0 %v640
        %688 = vmatprep.subr.mxu0 0.0
        %689 = vmatpush1.msra.mxu0 %v641
        %690 = vmatprep.subr.mxu0 0.0
        %691 = vmatpush1.msra.mxu0 0.0
        %692 = vmatprep.subr.mxu0 0.0
        %693 = vmatpush1.msra.mxu0 0.0
        %694 = vmatprep.subr.mxu0 0.0
        %695 = vmatpush1.msra.mxu0 0.0
        %696 = vmatprep.subr.mxu0 0.0
        %697 = vmatpush1.msra.mxu0 0.0
        %698 = vmatprep.subr.mxu0 0.0
        %699 = vmatpush1.msra.mxu0 0.0
        %700 = vmatprep.subr.mxu0 0.0
        %701 = vmatpush1.msra.mxu0 0.0
        %702 = vmatprep.subr.mxu0 0.0
        %703 = vmatpush1.msra.mxu0 0.0
        %704 = vmatprep.subr.mxu0 0.0
        %705 = vmatpush1.msra.mxu0 0.0
        %706 = vmatprep.subr.mxu0 0.0
        %707 = vmatpush1.msra.mxu0 0.0
        %708 = vmatprep.subr.mxu0 0.0
        %709 = vmatpush1.msra.mxu0 0.0
        %710 = vmatprep.subr.mxu0 0.0
        %711 = vmatpush1.msra.mxu0 0.0
        %712 = vmatprep.subr.mxu0 0.0
        %713 = vmatpush1.msra.mxu0 0.0
        %714 = vmatprep.subr.mxu0 0.0
        %715 = vmatpush1.msra.mxu0 0.0
        %716 = vmatprep.subr.mxu0 0.0
        %717 = vmatpush1.msra.mxu0 0.0
        %718 = vmatprep.subr.mxu0 0.0
        %719 = vmatpush1.msra.mxu0 0.0
        %720 = vmatprep.subr.mxu0 0.0
        %721 = vmatpush1.msra.mxu0 0.0
        %722 = vmatprep.mubr.f32.mxu0 0.0
        %723 = vmatmul.mubr.f32.gmra.mrb[0].mxu0 %v649
        %v724 = vpop.f32.mrb[0].mxu0
        %v725 = vadd.f32 0.0, %v724
        %v726 = vpop.f32.mrb[0].mxu0
        %727 = vmatprep.mubr.f32.mxu0 0.0
        %728 = vmatmul.mubr.f32.gmra.mrb[0].mxu0 %v651
        %v729 = vpop.f32.mrb[0].mxu0
        %v730 = vadd.f32 0.0, %v729
        %v731 = vpop.f32.mrb[0].mxu0
        %732 = vmatprep.mubr.f32.mxu0 0.0
        %733 = vmatmul.mubr.f32.gmra.mrb[0].mxu0 %v653
        %v734 = vpop.f32.mrb[0].mxu0
        %v735 = vadd.f32 0.0, %v734
        %v736 = vpop.f32.mrb[0].mxu0
        %737 = vmatprep.mubr.f32.mxu0 0.0
        %738 = vmatmul.mubr.f32.gmra.mrb[0].mxu0 %v652
        %v739 = vpop.f32.mrb[0].mxu0
        %v740 = vadd.f32 0.0, %v739
        %v741 = vpop.f32.mrb[0].mxu0
        %742 = vdwg.mxu0
        %743 = vmatprep.subr.mxu0 0.0
        %744 = vmatpush1.msra.mxu0 %v609
        %745 = vmatprep.subr.mxu0 0.0
        %746 = vmatpush1.msra.mxu0 %v610
        %747 = vmatprep.subr.mxu0 0.0
        %748 = vmatpush1.msra.mxu0 %v611
        %749 = vmatprep.subr.mxu0 0.0
        %750 = vmatpush1.msra.mxu0 %v612
        %751 = vmatprep.subr.mxu0 0.0
        %752 = vmatpush1.msra.mxu0 %v613
        %753 = vmatprep.subr.mxu0 0.0
        %754 = vmatpush1.msra.mxu0 %v614
        %755 = vmatprep.subr.mxu0 0.0
        %756 = vmatpush1.msra.mxu0 %v615
        %757 = vmatprep.subr.mxu0 0.0
        %758 = vmatpush1.msra.mxu0 %v616
        %759 = vmatprep.subr.mxu0 0.0
        %760 = vmatpush1.msra.mxu0 %v617
        %761 = vmatprep.subr.mxu0 0.0
        %762 = vmatpush1.msra.mxu0 %v618
        %763 = vmatprep.subr.mxu0 0.0
        %764 = vmatpush1.msra.mxu0 %v619
        %765 = vmatprep.subr.mxu0 0.0
        %766 = vmatpush1.msra.mxu0 %v620
        %767 = vmatprep.subr.mxu0 0.0
        %768 = vmatpush1.msra.mxu0 %v621
        %769 = vmatprep.subr.mxu0 0.0
        %770 = vmatpush1.msra.mxu0 %v622
        %771 = vmatprep.subr.mxu0 0.0
        %772 = vmatpush1.msra.mxu0 %v623
        %773 = vmatprep.subr.mxu0 0.0
        %774 = vmatpush1.msra.mxu0 %v624
        %775 = vmatprep.subr.mxu0 0.0
        %776 = vmatpush1.msra.mxu0 0.0
        %777 = vmatprep.subr.mxu0 0.0
        %778 = vmatpush1.msra.mxu0 0.0
        %779 = vmatprep.subr.mxu0 0.0
        %780 = vmatpush1.msra.mxu0 0.0
        %781 = vmatprep.subr.mxu0 0.0
        %782 = vmatpush1.msra.mxu0 0.0
        %783 = vmatprep.subr.mxu0 0.0
        %784 = vmatpush1.msra.mxu0 0.0
        %785 = vmatprep.subr.mxu0 0.0
        %786 = vmatpush1.msra.mxu0 0.0
        %787 = vmatprep.subr.mxu0 0.0
        %788 = vmatpush1.msra.mxu0 0.0
        %789 = vmatprep.subr.mxu0 0.0
        %790 = vmatpush1.msra.mxu0 0.0
        %791 = vmatprep.subr.mxu0 0.0
        %792 = vmatpush1.msra.mxu0 0.0
        %793 = vmatprep.subr.mxu0 0.0
        %794 = vmatpush1.msra.mxu0 0.0
        %795 = vmatprep.subr.mxu0 0.0
        %796 = vmatpush1.msra.mxu0 0.0
        %797 = vmatprep.subr.mxu0 0.0
        %798 = vmatpush1.msra.mxu0 0.0
        %799 = vmatprep.subr.mxu0 0.0
        %800 = vmatpush1.msra.mxu0 0.0
        %801 = vmatprep.subr.mxu0 0.0
        %802 = vmatpush1.msra.mxu0 0.0
        %803 = vmatprep.subr.mxu0 0.0
        %804 = vmatpush1.msra.mxu0 0.0
        %805 = vmatprep.subr.mxu0 0.0
        %806 = vmatpush1.msra.mxu0 0.0
        %807 = vmatprep.mubr.f32.mxu0 0.0
        %808 = vmatmul.mubr.f32.gmra.mrb[0].mxu0 %v605
        %v809 = vpop.f32.mrb[0].mxu0
        %v810 = vadd.f32 %v725, %v809
        %v811 = vpop.f32.mrb[0].mxu0
        %812 = vmatprep.mubr.f32.mxu0 0.0
        %813 = vmatmul.mubr.f32.gmra.mrb[0].mxu0 %v606
        %v814 = vpop.f32.mrb[0].mxu0
        %v815 = vadd.f32 %v730, %v814
        %v816 = vpop.f32.mrb[0].mxu0
        %817 = vmatprep.mubr.f32.mxu0 0.0
        %818 = vmatmul.mubr.f32.gmra.mrb[0].mxu0 %v607
        %v819 = vpop.f32.mrb[0].mxu0
        %v820 = vadd.f32 %v735, %v819
        %v821 = vpop.f32.mrb[0].mxu0
        %822 = vmatprep.mubr.f32.mxu0 0.0
        %823 = vmatmul.mubr.f32.gmra.mrb[0].mxu0 %v608
        %v824 = vpop.f32.mrb[0].mxu0
        %v825 = vadd.f32 %v740, %v824
        %v826 = vpop.f32.mrb[0].mxu0
        %827 = vdwg.mxu0
        %s828 = scalar_lea.vmem %s5, 256
        %v829 = vld [vmem:[%s828] sm:$0xff]
        %v830 = vld [vmem:[%s828 + $0x8] sm:$0xff]
        %v831 = vld [vmem:[%s828 + $0x10] sm:$0xff]
        %v832 = vld [vmem:[%s828 + $0x18] sm:$0xff]
        %v833 = vld [vmem:[%s828 + $0x20] sm:$0xff]
        %v834 = vld [vmem:[%s828 + $0x28] sm:$0xff]
        %v835 = vld [vmem:[%s828 + $0x30] sm:$0xff]
        %v836 = vld [vmem:[%s828 + $0x38] sm:$0xff]
        %v837 = vld [vmem:[%s828 + $0x40] sm:$0xff]
        %v838 = vld [vmem:[%s828 + $0x48] sm:$0xff]
        %v839 = vld [vmem:[%s828 + $0x50] sm:$0xff]
        %v840 = vld [vmem:[%s828 + $0x58] sm:$0xff]
        %v841 = vld [vmem:[%s828 + $0x60] sm:$0xff]
        %v842 = vld [vmem:[%s828 + $0x68] sm:$0xff]
        %v843 = vld [vmem:[%s828 + $0x70] sm:$0xff]
        %v844 = vld [vmem:[%s828 + $0x78] sm:$0xff]
        %vm845 = vcmask 1045504
        %v846 = vrot.slane %v605, 2
        %v847 = vrot.slane %v606, 2
        %v848 = vsel %vm845, %v846, %v847
        %v849 = vrot.slane %v607, 2
        %v850 = vsel %vm845, %v847, %v849
        %v851 = vrot.slane %v608, 2
        %v852 = vsel %vm845, %v849, %v851
        %857 = vmatprep.subr.mxu0 0.0
        %858 = vmatpush1.msra.mxu0 %v829
        %859 = vmatprep.subr.mxu0 0.0
        %860 = vmatpush1.msra.mxu0 %v830
        %861 = vmatprep.subr.mxu0 0.0
        %862 = vmatpush1.msra.mxu0 %v831
        %863 = vmatprep.subr.mxu0 0.0
        %864 = vmatpush1.msra.mxu0 %v832
        %865 = vmatprep.subr.mxu0 0.0
        %866 = vmatpush1.msra.mxu0 %v833
        %867 = vmatprep.subr.mxu0 0.0
        %868 = vmatpush1.msra.mxu0 %v834
        %869 = vmatprep.subr.mxu0 0.0
        %870 = vmatpush1.msra.mxu0 %v835
        %871 = vmatprep.subr.mxu0 0.0
        %872 = vmatpush1.msra.mxu0 %v836
        %873 = vmatprep.subr.mxu0 0.0
        %874 = vmatpush1.msra.mxu0 %v837
        %875 = vmatprep.subr.mxu0 0.0
        %876 = vmatpush1.msra.mxu0 %v838
        %877 = vmatprep.subr.mxu0 0.0
        %878 = vmatpush1.msra.mxu0 %v839
        %879 = vmatprep.subr.mxu0 0.0
        %880 = vmatpush1.msra.mxu0 %v840
        %881 = vmatprep.subr.mxu0 0.0
        %882 = vmatpush1.msra.mxu0 %v841
        %883 = vmatprep.subr.mxu0 0.0
        %884 = vmatpush1.msra.mxu0 %v842
        %885 = vmatprep.subr.mxu0 0.0
        %886 = vmatpush1.msra.mxu0 %v843
        %887 = vmatprep.subr.mxu0 0.0
        %888 = vmatpush1.msra.mxu0 %v844
        %889 = vmatprep.subr.mxu0 0.0
        %890 = vmatpush1.msra.mxu0 0.0
        %891 = vmatprep.subr.mxu0 0.0
        %892 = vmatpush1.msra.mxu0 0.0
        %893 = vmatprep.subr.mxu0 0.0
        %894 = vmatpush1.msra.mxu0 0.0
        %895 = vmatprep.subr.mxu0 0.0
        %896 = vmatpush1.msra.mxu0 0.0
        %897 = vmatprep.subr.mxu0 0.0
        %898 = vmatpush1.msra.mxu0 0.0
        %899 = vmatprep.subr.mxu0 0.0
        %900 = vmatpush1.msra.mxu0 0.0
        %901 = vmatprep.subr.mxu0 0.0
        %902 = vmatpush1.msra.mxu0 0.0
        %903 = vmatprep.subr.mxu0 0.0
        %904 = vmatpush1.msra.mxu0 0.0
        %905 = vmatprep.subr.mxu0 0.0
        %906 = vmatpush1.msra.mxu0 0.0
        %907 = vmatprep.subr.mxu0 0.0
        %908 = vmatpush1.msra.mxu0 0.0
        %909 = vmatprep.subr.mxu0 0.0
        %910 = vmatpush1.msra.mxu0 0.0
        %911 = vmatprep.subr.mxu0 0.0
        %912 = vmatpush1.msra.mxu0 0.0
        %913 = vmatprep.subr.mxu0 0.0
        %914 = vmatpush1.msra.mxu0 0.0
        %915 = vmatprep.subr.mxu0 0.0
        %916 = vmatpush1.msra.mxu0 0.0
        %917 = vmatprep.subr.mxu0 0.0
        %918 = vmatpush1.msra.mxu0 0.0
        %919 = vmatprep.subr.mxu0 0.0
        %920 = vmatpush1.msra.mxu0 0.0
        %921 = vmatprep.mubr.f32.mxu0 0.0
        %922 = vmatmul.mubr.f32.gmra.mrb[0].mxu0 %v848
        %v923 = vpop.f32.mrb[0].mxu0
        %v924 = vadd.f32 0.0, %v923
        %v925 = vpop.f32.mrb[0].mxu0
        %926 = vmatprep.mubr.f32.mxu0 0.0
        %927 = vmatmul.mubr.f32.gmra.mrb[0].mxu0 %v850
        %v928 = vpop.f32.mrb[0].mxu0
        %v929 = vadd.f32 0.0, %v928
        %v930 = vpop.f32.mrb[0].mxu0
        %931 = vmatprep.mubr.f32.mxu0 0.0
        %932 = vmatmul.mubr.f32.gmra.mrb[0].mxu0 %v852
        %v933 = vpop.f32.mrb[0].mxu0
        %v934 = vadd.f32 0.0, %v933
        %v935 = vpop.f32.mrb[0].mxu0
        %936 = vmatprep.mubr.f32.mxu0 0.0
        %937 = vmatmul.mubr.f32.gmra.mrb[0].mxu0 %v851
        %v938 = vpop.f32.mrb[0].mxu0
        %v939 = vadd.f32 0.0, %v938
        %v940 = vpop.f32.mrb[0].mxu0
        %941 = vdwg.mxu0
        %v942 = vadd.f32 %v810, %v924
        %v943 = vadd.f32 %v815, %v929
        %v944 = vadd.f32 %v820, %v934
        %v945 = vadd.f32 %v825, %v939
        %s946 = scalar_lea.vmem %s5, 384
        %v947 = vld [vmem:[%s946] sm:$0xff]
        %v948 = vld [vmem:[%s946 + $0x8] sm:$0xff]
        %v949 = vld [vmem:[%s946 + $0x10] sm:$0xff]
        %v950 = vld [vmem:[%s946 + $0x18] sm:$0xff]
        %v951 = vld [vmem:[%s946 + $0x20] sm:$0xff]
        %v952 = vld [vmem:[%s946 + $0x28] sm:$0xff]
        %v953 = vld [vmem:[%s946 + $0x30] sm:$0xff]
        %v954 = vld [vmem:[%s946 + $0x38] sm:$0xff]
        %v955 = vld [vmem:[%s946 + $0x40] sm:$0xff]
        %v956 = vld [vmem:[%s946 + $0x48] sm:$0xff]
        %v957 = vld [vmem:[%s946 + $0x50] sm:$0xff]
        %v958 = vld [vmem:[%s946 + $0x58] sm:$0xff]
        %v959 = vld [vmem:[%s946 + $0x60] sm:$0xff]
        %v960 = vld [vmem:[%s946 + $0x68] sm:$0xff]
        %v961 = vld [vmem:[%s946 + $0x70] sm:$0xff]
        %v962 = vld [vmem:[%s946 + $0x78] sm:$0xff]
        %vm963 = vcmask 1044480
        %v964 = vrot.slane %v605, 3
        %v965 = vrot.slane %v606, 3
        %v966 = vsel %vm963, %v964, %v965
        %v967 = vrot.slane %v607, 3
        %v968 = vsel %vm963, %v965, %v967
        %v969 = vrot.slane %v608, 3
        %v970 = vsel %vm963, %v967, %v969
        %975 = vmatprep.subr.mxu0 0.0
        %976 = vmatpush1.msra.mxu0 %v947
        %977 = vmatprep.subr.mxu0 0.0
        %978 = vmatpush1.msra.mxu0 %v948
        %979 = vmatprep.subr.mxu0 0.0
        %980 = vmatpush1.msra.mxu0 %v949
        %981 = vmatprep.subr.mxu0 0.0
        %982 = vmatpush1.msra.mxu0 %v950
        %983 = vmatprep.subr.mxu0 0.0
        %984 = vmatpush1.msra.mxu0 %v951
        %985 = vmatprep.subr.mxu0 0.0
        %986 = vmatpush1.msra.mxu0 %v952
        %987 = vmatprep.subr.mxu0 0.0
        %988 = vmatpush1.msra.mxu0 %v953
        %989 = vmatprep.subr.mxu0 0.0
        %990 = vmatpush1.msra.mxu0 %v954
        %991 = vmatprep.subr.mxu0 0.0
        %992 = vmatpush1.msra.mxu0 %v955
        %993 = vmatprep.subr.mxu0 0.0
        %994 = vmatpush1.msra.mxu0 %v956
        %995 = vmatprep.subr.mxu0 0.0
        %996 = vmatpush1.msra.mxu0 %v957
        %997 = vmatprep.subr.mxu0 0.0
        %998 = vmatpush1.msra.mxu0 %v958
        %999 = vmatprep.subr.mxu0 0.0
        %1000 = vmatpush1.msra.mxu0 %v959
        %1001 = vmatprep.subr.mxu0 0.0
        %1002 = vmatpush1.msra.mxu0 %v960
        %1003 = vmatprep.subr.mxu0 0.0
        %1004 = vmatpush1.msra.mxu0 %v961
        %1005 = vmatprep.subr.mxu0 0.0
        %1006 = vmatpush1.msra.mxu0 %v962
        %1007 = vmatprep.subr.mxu0 0.0
        %1008 = vmatpush1.msra.mxu0 0.0
        %1009 = vmatprep.subr.mxu0 0.0
        %1010 = vmatpush1.msra.mxu0 0.0
        %1011 = vmatprep.subr.mxu0 0.0
        %1012 = vmatpush1.msra.mxu0 0.0
        %1013 = vmatprep.subr.mxu0 0.0
        %1014 = vmatpush1.msra.mxu0 0.0
        %1015 = vmatprep.subr.mxu0 0.0
        %1016 = vmatpush1.msra.mxu0 0.0
        %1017 = vmatprep.subr.mxu0 0.0
        %1018 = vmatpush1.msra.mxu0 0.0
        %1019 = vmatprep.subr.mxu0 0.0
        %1020 = vmatpush1.msra.mxu0 0.0
        %1021 = vmatprep.subr.mxu0 0.0
        %1022 = vmatpush1.msra.mxu0 0.0
        %1023 = vmatprep.subr.mxu0 0.0
        %1024 = vmatpush1.msra.mxu0 0.0
        %1025 = vmatprep.subr.mxu0 0.0
        %1026 = vmatpush1.msra.mxu0 0.0
        %1027 = vmatprep.subr.mxu0 0.0
        %1028 = vmatpush1.msra.mxu0 0.0
        %1029 = vmatprep.subr.mxu0 0.0
        %1030 = vmatpush1.msra.mxu0 0.0
        %1031 = vmatprep.subr.mxu0 0.0
        %1032 = vmatpush1.msra.mxu0 0.0
        %1033 = vmatprep.subr.mxu0 0.0
        %1034 = vmatpush1.msra.mxu0 0.0
        %1035 = vmatprep.subr.mxu0 0.0
        %1036 = vmatpush1.msra.mxu0 0.0
        %1037 = vmatprep.subr.mxu0 0.0
        %1038 = vmatpush1.msra.mxu0 0.0
        %1039 = vmatprep.mubr.f32.mxu0 0.0
        %1040 = vmatmul.mubr.f32.gmra.mrb[0].mxu0 %v966
        %v1041 = vpop.f32.mrb[0].mxu0
        %v1042 = vadd.f32 0.0, %v1041
        %v1043 = vpop.f32.mrb[0].mxu0
        %1044 = vmatprep.mubr.f32.mxu0 0.0
        %1045 = vmatmul.mubr.f32.gmra.mrb[0].mxu0 %v968
        %v1046 = vpop.f32.mrb[0].mxu0
        %v1047 = vadd.f32 0.0, %v1046
        %v1048 = vpop.f32.mrb[0].mxu0
        %1049 = vmatprep.mubr.f32.mxu0 0.0
        %1050 = vmatmul.mubr.f32.gmra.mrb[0].mxu0 %v970
        %v1051 = vpop.f32.mrb[0].mxu0
        %v1052 = vadd.f32 0.0, %v1051
        %v1053 = vpop.f32.mrb[0].mxu0
        %1054 = vmatprep.mubr.f32.mxu0 0.0
        %1055 = vmatmul.mubr.f32.gmra.mrb[0].mxu0 %v969
        %v1056 = vpop.f32.mrb[0].mxu0
        %v1057 = vadd.f32 0.0, %v1056
        %v1058 = vpop.f32.mrb[0].mxu0
        %1059 = vdwg.mxu0
        %v1060 = vadd.f32 %v942, %v1042
        %v1061 = vadd.f32 %v943, %v1047
        %v1062 = vadd.f32 %v944, %v1052
        %v1063 = vadd.f32 %v945, %v1057
        %v1064 = vld [vmem:[%s6] sm:$0x1]
        %v1066 = vlaneseq
        %v1067 = vshrl.u32 %v1066, 7
        %v1068 = vsub.s32 0, %v1067
        %v1069 = vrot.slane %v1064, %v1068
        %v1071 = vadd.f32 %v1060, %v1069
        %v1072 = vadd.f32 %v1061, %v1069
        %v1073 = vadd.f32 %v1062, %v1069
        %v1074 = vadd.f32 %v1063, %v1069
        %v1075 = vmax.f32 %v1071, 0.0
        %v1076 = vmax.f32 %v1072, 0.0
        %v1077 = vmax.f32 %v1073, 0.0
        %v1078 = vmax.f32 %v1074, 0.0
        %v1079 = vld [vmem:[%s7] sm:$0xff]
        %v1080 = vld [vmem:[%s7 + $0x8] sm:$0xff]
        %s1081 = scalar_lea.vmem %s7, 16
        %v1082 = vld [vmem:[%s1081] sm:$0xff]
        %v1083 = vld [vmem:[%s1081 + $0x8] sm:$0xff]
        %v1087 = vrot.slane %v1075, 1
        %v1088 = vrot.slane %v1076, 1
        %v1089 = vsel %vm646, %v1087, %v1088
        %v1090 = vrot.slane %v1077, 1
        %v1091 = vsel %vm646, %v1088, %v1090
        %vm1092 = vcmask 130048
        %v1093 = vsel %vm1092, %v1089, 0
        %v1095 = vsel %vm1092, %v1091, 0
        %v1097 = vsel %vm1092, %v1090, 0
        %1099 = vmatprep.subr.mxu0 0.0
        %1100 = vmatpush1.msra.mxu0 %v1082
        %1101 = vmatprep.subr.mxu0 0.0
        %1102 = vmatpush1.msra.mxu0 %v1083
        %1103 = vmatprep.subr.mxu0 0.0
        %1104 = vmatpush1.msra.mxu0 0.0
        %1105 = vmatprep.subr.mxu0 0.0
        %1106 = vmatpush1.msra.mxu0 0.0
        %1107 = vmatprep.subr.mxu0 0.0
        %1108 = vmatpush1.msra.mxu0 0.0
        %1109 = vmatprep.subr.mxu0 0.0
        %1110 = vmatpush1.msra.mxu0 0.0
        %1111 = vmatprep.subr.mxu0 0.0
        %1112 = vmatpush1.msra.mxu0 0.0
        %1113 = vmatprep.subr.mxu0 0.0
        %1114 = vmatpush1.msra.mxu0 0.0
        %1115 = vmatprep.subr.mxu0 0.0
        %1116 = vmatpush1.msra.mxu0 0.0
        %1117 = vmatprep.subr.mxu0 0.0
        %1118 = vmatpush1.msra.mxu0 0.0
        %1119 = vmatprep.subr.mxu0 0.0
        %1120 = vmatpush1.msra.mxu0 0.0
        %1121 = vmatprep.subr.mxu0 0.0
        %1122 = vmatpush1.msra.mxu0 0.0
        %1123 = vmatprep.subr.mxu0 0.0
        %1124 = vmatpush1.msra.mxu0 0.0
        %1125 = vmatprep.subr.mxu0 0.0
        %1126 = vmatpush1.msra.mxu0 0.0
        %1127 = vmatprep.subr.mxu0 0.0
        %1128 = vmatpush1.msra.mxu0 0.0
        %1129 = vmatprep.subr.mxu0 0.0
        %1130 = vmatpush1.msra.mxu0 0.0
        %1131 = vmatprep.subr.mxu0 0.0
        %1132 = vmatpush1.msra.mxu0 0.0
        %1133 = vmatprep.subr.mxu0 0.0
        %1134 = vmatpush1.msra.mxu0 0.0
        %1135 = vmatprep.subr.mxu0 0.0
        %1136 = vmatpush1.msra.mxu0 0.0
        %1137 = vmatprep.subr.mxu0 0.0
        %1138 = vmatpush1.msra.mxu0 0.0
        %1139 = vmatprep.subr.mxu0 0.0
        %1140 = vmatpush1.msra.mxu0 0.0
        %1141 = vmatprep.subr.mxu0 0.0
        %1142 = vmatpush1.msra.mxu0 0.0
        %1143 = vmatprep.subr.mxu0 0.0
        %1144 = vmatpush1.msra.mxu0 0.0
        %1145 = vmatprep.subr.mxu0 0.0
        %1146 = vmatpush1.msra.mxu0 0.0
        %1147 = vmatprep.subr.mxu0 0.0
        %1148 = vmatpush1.msra.mxu0 0.0
        %1149 = vmatprep.subr.mxu0 0.0
        %1150 = vmatpush1.msra.mxu0 0.0
        %1151 = vmatprep.subr.mxu0 0.0
        %1152 = vmatpush1.msra.mxu0 0.0
        %1153 = vmatprep.subr.mxu0 0.0
        %1154 = vmatpush1.msra.mxu0 0.0
        %1155 = vmatprep.subr.mxu0 0.0
        %1156 = vmatpush1.msra.mxu0 0.0
        %1157 = vmatprep.subr.mxu0 0.0
        %1158 = vmatpush1.msra.mxu0 0.0
        %1159 = vmatprep.subr.mxu0 0.0
        %1160 = vmatpush1.msra.mxu0 0.0
        %1161 = vmatprep.subr.mxu0 0.0
        %1162 = vmatpush1.msra.mxu0 0.0
        %1163 = vmatprep.mubr.f32.mxu0 0.0
        %1164 = vmatmul.mubr.f32.gmra.mrb[0].mxu0 %v1093
        %v1165 = vpop.f32.mrb[0].mxu0
        %v1166 = vadd.f32 0.0, %v1165
        %v1167 = vpop.f32.mrb[0].mxu0
        %1168 = vmatprep.mubr.f32.mxu0 0.0
        %1169 = vmatmul.mubr.f32.gmra.mrb[0].mxu0 %v1095
        %v1170 = vpop.f32.mrb[0].mxu0
        %v1171 = vadd.f32 0.0, %v1170
        %v1172 = vpop.f32.mrb[0].mxu0
        %1173 = vmatprep.mubr.f32.mxu0 0.0
        %1174 = vmatmul.mubr.f32.gmra.mrb[0].mxu0 %v1097
        %v1175 = vpop.f32.mrb[0].mxu0
        %v1176 = vadd.f32 0.0, %v1175
        %v1177 = vpop.f32.mrb[0].mxu0
        %1178 = vdwg.mxu0
        %v1179 = vsel %vm1092, %v1075, 0
        %v1181 = vsel %vm1092, %v1076, 0
        %v1183 = vsel %vm1092, %v1077, 0
        %1185 = vmatprep.subr.mxu0 0.0
        %1186 = vmatpush1.msra.mxu0 %v1079
        %1187 = vmatprep.subr.mxu0 0.0
        %1188 = vmatpush1.msra.mxu0 %v1080
        %1189 = vmatprep.subr.mxu0 0.0
        %1190 = vmatpush1.msra.mxu0 0.0
        %1191 = vmatprep.subr.mxu0 0.0
        %1192 = vmatpush1.msra.mxu0 0.0
        %1193 = vmatprep.subr.mxu0 0.0
        %1194 = vmatpush1.msra.mxu0 0.0
        %1195 = vmatprep.subr.mxu0 0.0
        %1196 = vmatpush1.msra.mxu0 0.0
        %1197 = vmatprep.subr.mxu0 0.0
        %1198 = vmatpush1.msra.mxu0 0.0
        %1199 = vmatprep.subr.mxu0 0.0
        %1200 = vmatpush1.msra.mxu0 0.0
        %1201 = vmatprep.subr.mxu0 0.0
        %1202 = vmatpush1.msra.mxu0 0.0
        %1203 = vmatprep.subr.mxu0 0.0
        %1204 = vmatpush1.msra.mxu0 0.0
        %1205 = vmatprep.subr.mxu0 0.0
        %1206 = vmatpush1.msra.mxu0 0.0
        %1207 = vmatprep.subr.mxu0 0.0
        %1208 = vmatpush1.msra.mxu0 0.0
        %1209 = vmatprep.subr.mxu0 0.0
        %1210 = vmatpush1.msra.mxu0 0.0
        %1211 = vmatprep.subr.mxu0 0.0
        %1212 = vmatpush1.msra.mxu0 0.0
        %1213 = vmatprep.subr.mxu0 0.0
        %1214 = vmatpush1.msra.mxu0 0.0
        %1215 = vmatprep.subr.mxu0 0.0
        %1216 = vmatpush1.msra.mxu0 0.0
        %1217 = vmatprep.subr.mxu0 0.0
        %1218 = vmatpush1.msra.mxu0 0.0
        %1219 = vmatprep.subr.mxu0 0.0
        %1220 = vmatpush1.msra.mxu0 0.0
        %1221 = vmatprep.subr.mxu0 0.0
        %1222 = vmatpush1.msra.mxu0 0.0
        %1223 = vmatprep.subr.mxu0 0.0
        %1224 = vmatpush1.msra.mxu0 0.0
        %1225 = vmatprep.subr.mxu0 0.0
        %1226 = vmatpush1.msra.mxu0 0.0
        %1227 = vmatprep.subr.mxu0 0.0
        %1228 = vmatpush1.msra.mxu0 0.0
        %1229 = vmatprep.subr.mxu0 0.0
        %1230 = vmatpush1.msra.mxu0 0.0
        %1231 = vmatprep.subr.mxu0 0.0
        %1232 = vmatpush1.msra.mxu0 0.0
        %1233 = vmatprep.subr.mxu0 0.0
        %1234 = vmatpush1.msra.mxu0 0.0
        %1235 = vmatprep.subr.mxu0 0.0
        %1236 = vmatpush1.msra.mxu0 0.0
        %1237 = vmatprep.subr.mxu0 0.0
        %1238 = vmatpush1.msra.mxu0 0.0
        %1239 = vmatprep.subr.mxu0 0.0
        %1240 = vmatpush1.msra.mxu0 0.0
        %1241 = vmatprep.subr.mxu0 0.0
        %1242 = vmatpush1.msra.mxu0 0.0
        %1243 = vmatprep.subr.mxu0 0.0
        %1244 = vmatpush1.msra.mxu0 0.0
        %1245 = vmatprep.subr.mxu0 0.0
        %1246 = vmatpush1.msra.mxu0 0.0
        %1247 = vmatprep.subr.mxu0 0.0
        %1248 = vmatpush1.msra.mxu0 0.0
        %1249 = vmatprep.mubr.f32.mxu0 0.0
        %1250 = vmatmul.mubr.f32.gmra.mrb[0].mxu0 %v1179
        %v1251 = vpop.f32.mrb[0].mxu0
        %v1252 = vadd.f32 %v1166, %v1251
        %v1253 = vpop.f32.mrb[0].mxu0
        %1254 = vmatprep.mubr.f32.mxu0 0.0
        %1255 = vmatmul.mubr.f32.gmra.mrb[0].mxu0 %v1181
        %v1256 = vpop.f32.mrb[0].mxu0
        %v1257 = vadd.f32 %v1171, %v1256
        %v1258 = vpop.f32.mrb[0].mxu0
        %1259 = vmatprep.mubr.f32.mxu0 0.0
        %1260 = vmatmul.mubr.f32.gmra.mrb[0].mxu0 %v1183
        %v1261 = vpop.f32.mrb[0].mxu0
        %v1262 = vadd.f32 %v1176, %v1261
        %v1263 = vpop.f32.mrb[0].mxu0
        %1264 = vdwg.mxu0
        %s1265 = scalar_lea.vmem %s7, 32
        %v1266 = vld [vmem:[%s1265] sm:$0xff]
        %v1267 = vld [vmem:[%s1265 + $0x8] sm:$0xff]
        %v1268 = vrot.slane %v1075, 2
        %v1269 = vrot.slane %v1076, 2
        %v1270 = vsel %vm845, %v1268, %v1269
        %v1271 = vrot.slane %v1077, 2
        %v1272 = vsel %vm845, %v1269, %v1271
        %v1273 = vsel %vm1092, %v1270, 0
        %v1275 = vsel %vm1092, %v1272, 0
        %v1277 = vsel %vm1092, %v1271, 0
        %1279 = vmatprep.subr.mxu0 0.0
        %1280 = vmatpush1.msra.mxu0 %v1266
        %1281 = vmatprep.subr.mxu0 0.0
        %1282 = vmatpush1.msra.mxu0 %v1267
        %1283 = vmatprep.subr.mxu0 0.0
        %1284 = vmatpush1.msra.mxu0 0.0
        %1285 = vmatprep.subr.mxu0 0.0
        %1286 = vmatpush1.msra.mxu0 0.0
        %1287 = vmatprep.subr.mxu0 0.0
        %1288 = vmatpush1.msra.mxu0 0.0
        %1289 = vmatprep.subr.mxu0 0.0
        %1290 = vmatpush1.msra.mxu0 0.0
        %1291 = vmatprep.subr.mxu0 0.0
        %1292 = vmatpush1.msra.mxu0 0.0
        %1293 = vmatprep.subr.mxu0 0.0
        %1294 = vmatpush1.msra.mxu0 0.0
        %1295 = vmatprep.subr.mxu0 0.0
        %1296 = vmatpush1.msra.mxu0 0.0
        %1297 = vmatprep.subr.mxu0 0.0
        %1298 = vmatpush1.msra.mxu0 0.0
        %1299 = vmatprep.subr.mxu0 0.0
        %1300 = vmatpush1.msra.mxu0 0.0
        %1301 = vmatprep.subr.mxu0 0.0
        %1302 = vmatpush1.msra.mxu0 0.0
        %1303 = vmatprep.subr.mxu0 0.0
        %1304 = vmatpush1.msra.mxu0 0.0
        %1305 = vmatprep.subr.mxu0 0.0
        %1306 = vmatpush1.msra.mxu0 0.0
        %1307 = vmatprep.subr.mxu0 0.0
        %1308 = vmatpush1.msra.mxu0 0.0
        %1309 = vmatprep.subr.mxu0 0.0
        %1310 = vmatpush1.msra.mxu0 0.0
        %1311 = vmatprep.subr.mxu0 0.0
        %1312 = vmatpush1.msra.mxu0 0.0
        %1313 = vmatprep.subr.mxu0 0.0
        %1314 = vmatpush1.msra.mxu0 0.0
        %1315 = vmatprep.subr.mxu0 0.0
        %1316 = vmatpush1.msra.mxu0 0.0
        %1317 = vmatprep.subr.mxu0 0.0
        %1318 = vmatpush1.msra.mxu0 0.0
        %1319 = vmatprep.subr.mxu0 0.0
        %1320 = vmatpush1.msra.mxu0 0.0
        %1321 = vmatprep.subr.mxu0 0.0
        %1322 = vmatpush1.msra.mxu0 0.0
        %1323 = vmatprep.subr.mxu0 0.0
        %1324 = vmatpush1.msra.mxu0 0.0
        %1325 = vmatprep.subr.mxu0 0.0
        %1326 = vmatpush1.msra.mxu0 0.0
        %1327 = vmatprep.subr.mxu0 0.0
        %1328 = vmatpush1.msra.mxu0 0.0
        %1329 = vmatprep.subr.mxu0 0.0
        %1330 = vmatpush1.msra.mxu0 0.0
        %1331 = vmatprep.subr.mxu0 0.0
        %1332 = vmatpush1.msra.mxu0 0.0
        %1333 = vmatprep.subr.mxu0 0.0
        %1334 = vmatpush1.msra.mxu0 0.0
        %1335 = vmatprep.subr.mxu0 0.0
        %1336 = vmatpush1.msra.mxu0 0.0
        %1337 = vmatprep.subr.mxu0 0.0
        %1338 = vmatpush1.msra.mxu0 0.0
        %1339 = vmatprep.subr.mxu0 0.0
        %1340 = vmatpush1.msra.mxu0 0.0
        %1341 = vmatprep.subr.mxu0 0.0
        %1342 = vmatpush1.msra.mxu0 0.0
        %1343 = vmatprep.mubr.f32.mxu0 0.0
        %1344 = vmatmul.mubr.f32.gmra.mrb[0].mxu0 %v1273
        %v1345 = vpop.f32.mrb[0].mxu0
        %v1346 = vadd.f32 0.0, %v1345
        %v1347 = vpop.f32.mrb[0].mxu0
        %1348 = vmatprep.mubr.f32.mxu0 0.0
        %1349 = vmatmul.mubr.f32.gmra.mrb[0].mxu0 %v1275
        %v1350 = vpop.f32.mrb[0].mxu0
        %v1351 = vadd.f32 0.0, %v1350
        %v1352 = vpop.f32.mrb[0].mxu0
        %1353 = vmatprep.mubr.f32.mxu0 0.0
        %1354 = vmatmul.mubr.f32.gmra.mrb[0].mxu0 %v1277
        %v1355 = vpop.f32.mrb[0].mxu0
        %v1356 = vadd.f32 0.0, %v1355
        %v1357 = vpop.f32.mrb[0].mxu0
        %1358 = vdwg.mxu0
        %v1359 = vadd.f32 %v1252, %v1346
        %v1360 = vadd.f32 %v1257, %v1351
        %v1361 = vadd.f32 %v1262, %v1356
        %s1362 = scalar_lea.vmem %s7, 48
        %v1363 = vld [vmem:[%s1362] sm:$0xff]
        %v1364 = vld [vmem:[%s1362 + $0x8] sm:$0xff]
        %v1366 = vrot.slane %v1075, 3
        %v1367 = vrot.slane %v1076, 3
        %v1368 = vsel %vm963, %v1366, %v1367
        %v1369 = vrot.slane %v1077, 3
        %v1370 = vsel %vm963, %v1367, %v1369
        %v1371 = vrot.slane %v1078, 3
        %v1372 = vsel %vm963, %v1369, %v1371
        %v1373 = vsel %vm1092, %v1368, 0
        %v1375 = vsel %vm1092, %v1370, 0
        %v1377 = vsel %vm1092, %v1372, 0
        %1379 = vmatprep.subr.mxu0 0.0
        %1380 = vmatpush1.msra.mxu0 %v1363
        %1381 = vmatprep.subr.mxu0 0.0
        %1382 = vmatpush1.msra.mxu0 %v1364
        %1383 = vmatprep.subr.mxu0 0.0
        %1384 = vmatpush1.msra.mxu0 0.0
        %1385 = vmatprep.subr.mxu0 0.0
        %1386 = vmatpush1.msra.mxu0 0.0
        %1387 = vmatprep.subr.mxu0 0.0
        %1388 = vmatpush1.msra.mxu0 0.0
        %1389 = vmatprep.subr.mxu0 0.0
        %1390 = vmatpush1.msra.mxu0 0.0
        %1391 = vmatprep.subr.mxu0 0.0
        %1392 = vmatpush1.msra.mxu0 0.0
        %1393 = vmatprep.subr.mxu0 0.0
        %1394 = vmatpush1.msra.mxu0 0.0
        %1395 = vmatprep.subr.mxu0 0.0
        %1396 = vmatpush1.msra.mxu0 0.0
        %1397 = vmatprep.subr.mxu0 0.0
        %1398 = vmatpush1.msra.mxu0 0.0
        %1399 = vmatprep.subr.mxu0 0.0
        %1400 = vmatpush1.msra.mxu0 0.0
        %1401 = vmatprep.subr.mxu0 0.0
        %1402 = vmatpush1.msra.mxu0 0.0
        %1403 = vmatprep.subr.mxu0 0.0
        %1404 = vmatpush1.msra.mxu0 0.0
        %1405 = vmatprep.subr.mxu0 0.0
        %1406 = vmatpush1.msra.mxu0 0.0
        %1407 = vmatprep.subr.mxu0 0.0
        %1408 = vmatpush1.msra.mxu0 0.0
        %1409 = vmatprep.subr.mxu0 0.0
        %1410 = vmatpush1.msra.mxu0 0.0
        %1411 = vmatprep.subr.mxu0 0.0
        %1412 = vmatpush1.msra.mxu0 0.0
        %1413 = vmatprep.subr.mxu0 0.0
        %1414 = vmatpush1.msra.mxu0 0.0
        %1415 = vmatprep.subr.mxu0 0.0
        %1416 = vmatpush1.msra.mxu0 0.0
        %1417 = vmatprep.subr.mxu0 0.0
        %1418 = vmatpush1.msra.mxu0 0.0
        %1419 = vmatprep.subr.mxu0 0.0
        %1420 = vmatpush1.msra.mxu0 0.0
        %1421 = vmatprep.subr.mxu0 0.0
        %1422 = vmatpush1.msra.mxu0 0.0
        %1423 = vmatprep.subr.mxu0 0.0
        %1424 = vmatpush1.msra.mxu0 0.0
        %1425 = vmatprep.subr.mxu0 0.0
        %1426 = vmatpush1.msra.mxu0 0.0
        %1427 = vmatprep.subr.mxu0 0.0
        %1428 = vmatpush1.msra.mxu0 0.0
        %1429 = vmatprep.subr.mxu0 0.0
        %1430 = vmatpush1.msra.mxu0 0.0
        %1431 = vmatprep.subr.mxu0 0.0
        %1432 = vmatpush1.msra.mxu0 0.0
        %1433 = vmatprep.subr.mxu0 0.0
        %1434 = vmatpush1.msra.mxu0 0.0
        %1435 = vmatprep.subr.mxu0 0.0
        %1436 = vmatpush1.msra.mxu0 0.0
        %1437 = vmatprep.subr.mxu0 0.0
        %1438 = vmatpush1.msra.mxu0 0.0
        %1439 = vmatprep.subr.mxu0 0.0
        %1440 = vmatpush1.msra.mxu0 0.0
        %1441 = vmatprep.subr.mxu0 0.0
        %1442 = vmatpush1.msra.mxu0 0.0
        %1443 = vmatprep.mubr.f32.mxu0 0.0
        %1444 = vmatmul.mubr.f32.gmra.mrb[0].mxu0 %v1373
        %v1445 = vpop.f32.mrb[0].mxu0
        %v1446 = vadd.f32 0.0, %v1445
        %v1447 = vpop.f32.mrb[0].mxu0
        %1448 = vmatprep.mubr.f32.mxu0 0.0
        %1449 = vmatmul.mubr.f32.gmra.mrb[0].mxu0 %v1375
        %v1450 = vpop.f32.mrb[0].mxu0
        %v1451 = vadd.f32 0.0, %v1450
        %v1452 = vpop.f32.mrb[0].mxu0
        %1453 = vmatprep.mubr.f32.mxu0 0.0
        %1454 = vmatmul.mubr.f32.gmra.mrb[0].mxu0 %v1377
        %v1455 = vpop.f32.mrb[0].mxu0
        %v1456 = vadd.f32 0.0, %v1455
        %v1457 = vpop.f32.mrb[0].mxu0
        %1458 = vdwg.mxu0
        %v1459 = vadd.f32 %v1359, %v1446
        %v1460 = vadd.f32 %v1360, %v1451
        %v1461 = vadd.f32 %v1361, %v1456
        %s1462 = scalar_lea.vmem %s7, 64
        %v1463 = vld [vmem:[%s1462] sm:$0xff]
        %v1464 = vld [vmem:[%s1462 + $0x8] sm:$0xff]
        %vm1465 = vcmask 1043456
        %v1466 = vrot.slane %v1075, 4
        %v1467 = vrot.slane %v1076, 4
        %v1468 = vsel %vm1465, %v1466, %v1467
        %v1469 = vrot.slane %v1077, 4
        %v1470 = vsel %vm1465, %v1467, %v1469
        %v1471 = vrot.slane %v1078, 4
        %v1472 = vsel %vm1465, %v1469, %v1471
        %v1473 = vsel %vm1092, %v1468, 0
        %v1475 = vsel %vm1092, %v1470, 0
        %v1477 = vsel %vm1092, %v1472, 0
        %1479 = vmatprep.subr.mxu0 0.0
        %1480 = vmatpush1.msra.mxu0 %v1463
        %1481 = vmatprep.subr.mxu0 0.0
        %1482 = vmatpush1.msra.mxu0 %v1464
        %1483 = vmatprep.subr.mxu0 0.0
        %1484 = vmatpush1.msra.mxu0 0.0
        %1485 = vmatprep.subr.mxu0 0.0
        %1486 = vmatpush1.msra.mxu0 0.0
        %1487 = vmatprep.subr.mxu0 0.0
        %1488 = vmatpush1.msra.mxu0 0.0
        %1489 = vmatprep.subr.mxu0 0.0
        %1490 = vmatpush1.msra.mxu0 0.0
        %1491 = vmatprep.subr.mxu0 0.0
        %1492 = vmatpush1.msra.mxu0 0.0
        %1493 = vmatprep.subr.mxu0 0.0
        %1494 = vmatpush1.msra.mxu0 0.0
        %1495 = vmatprep.subr.mxu0 0.0
        %1496 = vmatpush1.msra.mxu0 0.0
        %1497 = vmatprep.subr.mxu0 0.0
        %1498 = vmatpush1.msra.mxu0 0.0
        %1499 = vmatprep.subr.mxu0 0.0
        %1500 = vmatpush1.msra.mxu0 0.0
        %1501 = vmatprep.subr.mxu0 0.0
        %1502 = vmatpush1.msra.mxu0 0.0
        %1503 = vmatprep.subr.mxu0 0.0
        %1504 = vmatpush1.msra.mxu0 0.0
        %1505 = vmatprep.subr.mxu0 0.0
        %1506 = vmatpush1.msra.mxu0 0.0
        %1507 = vmatprep.subr.mxu0 0.0
        %1508 = vmatpush1.msra.mxu0 0.0
        %1509 = vmatprep.subr.mxu0 0.0
        %1510 = vmatpush1.msra.mxu0 0.0
        %1511 = vmatprep.subr.mxu0 0.0
        %1512 = vmatpush1.msra.mxu0 0.0
        %1513 = vmatprep.subr.mxu0 0.0
        %1514 = vmatpush1.msra.mxu0 0.0
        %1515 = vmatprep.subr.mxu0 0.0
        %1516 = vmatpush1.msra.mxu0 0.0
        %1517 = vmatprep.subr.mxu0 0.0
        %1518 = vmatpush1.msra.mxu0 0.0
        %1519 = vmatprep.subr.mxu0 0.0
        %1520 = vmatpush1.msra.mxu0 0.0
        %1521 = vmatprep.subr.mxu0 0.0
        %1522 = vmatpush1.msra.mxu0 0.0
        %1523 = vmatprep.subr.mxu0 0.0
        %1524 = vmatpush1.msra.mxu0 0.0
        %1525 = vmatprep.subr.mxu0 0.0
        %1526 = vmatpush1.msra.mxu0 0.0
        %1527 = vmatprep.subr.mxu0 0.0
        %1528 = vmatpush1.msra.mxu0 0.0
        %1529 = vmatprep.subr.mxu0 0.0
        %1530 = vmatpush1.msra.mxu0 0.0
        %1531 = vmatprep.subr.mxu0 0.0
        %1532 = vmatpush1.msra.mxu0 0.0
        %1533 = vmatprep.subr.mxu0 0.0
        %1534 = vmatpush1.msra.mxu0 0.0
        %1535 = vmatprep.subr.mxu0 0.0
        %1536 = vmatpush1.msra.mxu0 0.0
        %1537 = vmatprep.subr.mxu0 0.0
        %1538 = vmatpush1.msra.mxu0 0.0
        %1539 = vmatprep.subr.mxu0 0.0
        %1540 = vmatpush1.msra.mxu0 0.0
        %1541 = vmatprep.subr.mxu0 0.0
        %1542 = vmatpush1.msra.mxu0 0.0
        %1543 = vmatprep.mubr.f32.mxu0 0.0
        %1544 = vmatmul.mubr.f32.gmra.mrb[0].mxu0 %v1473
        %v1545 = vpop.f32.mrb[0].mxu0
        %v1546 = vadd.f32 0.0, %v1545
        %v1547 = vpop.f32.mrb[0].mxu0
        %1548 = vmatprep.mubr.f32.mxu0 0.0
        %1549 = vmatmul.mubr.f32.gmra.mrb[0].mxu0 %v1475
        %v1550 = vpop.f32.mrb[0].mxu0
        %v1551 = vadd.f32 0.0, %v1550
        %v1552 = vpop.f32.mrb[0].mxu0
        %1553 = vmatprep.mubr.f32.mxu0 0.0
        %1554 = vmatmul.mubr.f32.gmra.mrb[0].mxu0 %v1477
        %v1555 = vpop.f32.mrb[0].mxu0
        %v1556 = vadd.f32 0.0, %v1555
        %v1557 = vpop.f32.mrb[0].mxu0
        %1558 = vdwg.mxu0
        %v1559 = vadd.f32 %v1459, %v1546
        %v1560 = vadd.f32 %v1460, %v1551
        %v1561 = vadd.f32 %v1461, %v1556
        %s1562 = scalar_lea.vmem %s7, 80
        %v1563 = vld [vmem:[%s1562] sm:$0xff]
        %v1564 = vld [vmem:[%s1562 + $0x8] sm:$0xff]
        %vm1565 = vcmask 1042432
        %v1566 = vrot.slane %v1075, 5
        %v1567 = vrot.slane %v1076, 5
        %v1568 = vsel %vm1565, %v1566, %v1567
        %v1569 = vrot.slane %v1077, 5
        %v1570 = vsel %vm1565, %v1567, %v1569
        %v1571 = vrot.slane %v1078, 5
        %v1572 = vsel %vm1565, %v1569, %v1571
        %v1573 = vsel %vm1092, %v1568, 0
        %v1575 = vsel %vm1092, %v1570, 0
        %v1577 = vsel %vm1092, %v1572, 0
        %1579 = vmatprep.subr.mxu0 0.0
        %1580 = vmatpush1.msra.mxu0 %v1563
        %1581 = vmatprep.subr.mxu0 0.0
        %1582 = vmatpush1.msra.mxu0 %v1564
        %1583 = vmatprep.subr.mxu0 0.0
        %1584 = vmatpush1.msra.mxu0 0.0
        %1585 = vmatprep.subr.mxu0 0.0
        %1586 = vmatpush1.msra.mxu0 0.0
        %1587 = vmatprep.subr.mxu0 0.0
        %1588 = vmatpush1.msra.mxu0 0.0
        %1589 = vmatprep.subr.mxu0 0.0
        %1590 = vmatpush1.msra.mxu0 0.0
        %1591 = vmatprep.subr.mxu0 0.0
        %1592 = vmatpush1.msra.mxu0 0.0
        %1593 = vmatprep.subr.mxu0 0.0
        %1594 = vmatpush1.msra.mxu0 0.0
        %1595 = vmatprep.subr.mxu0 0.0
        %1596 = vmatpush1.msra.mxu0 0.0
        %1597 = vmatprep.subr.mxu0 0.0
        %1598 = vmatpush1.msra.mxu0 0.0
        %1599 = vmatprep.subr.mxu0 0.0
        %1600 = vmatpush1.msra.mxu0 0.0
        %1601 = vmatprep.subr.mxu0 0.0
        %1602 = vmatpush1.msra.mxu0 0.0
        %1603 = vmatprep.subr.mxu0 0.0
        %1604 = vmatpush1.msra.mxu0 0.0
        %1605 = vmatprep.subr.mxu0 0.0
        %1606 = vmatpush1.msra.mxu0 0.0
        %1607 = vmatprep.subr.mxu0 0.0
        %1608 = vmatpush1.msra.mxu0 0.0
        %1609 = vmatprep.subr.mxu0 0.0
        %1610 = vmatpush1.msra.mxu0 0.0
        %1611 = vmatprep.subr.mxu0 0.0
        %1612 = vmatpush1.msra.mxu0 0.0
        %1613 = vmatprep.subr.mxu0 0.0
        %1614 = vmatpush1.msra.mxu0 0.0
        %1615 = vmatprep.subr.mxu0 0.0
        %1616 = vmatpush1.msra.mxu0 0.0
        %1617 = vmatprep.subr.mxu0 0.0
        %1618 = vmatpush1.msra.mxu0 0.0
        %1619 = vmatprep.subr.mxu0 0.0
        %1620 = vmatpush1.msra.mxu0 0.0
        %1621 = vmatprep.subr.mxu0 0.0
        %1622 = vmatpush1.msra.mxu0 0.0
        %1623 = vmatprep.subr.mxu0 0.0
        %1624 = vmatpush1.msra.mxu0 0.0
        %1625 = vmatprep.subr.mxu0 0.0
        %1626 = vmatpush1.msra.mxu0 0.0
        %1627 = vmatprep.subr.mxu0 0.0
        %1628 = vmatpush1.msra.mxu0 0.0
        %1629 = vmatprep.subr.mxu0 0.0
        %1630 = vmatpush1.msra.mxu0 0.0
        %1631 = vmatprep.subr.mxu0 0.0
        %1632 = vmatpush1.msra.mxu0 0.0
        %1633 = vmatprep.subr.mxu0 0.0
        %1634 = vmatpush1.msra.mxu0 0.0
        %1635 = vmatprep.subr.mxu0 0.0
        %1636 = vmatpush1.msra.mxu0 0.0
        %1637 = vmatprep.subr.mxu0 0.0
        %1638 = vmatpush1.msra.mxu0 0.0
        %1639 = vmatprep.subr.mxu0 0.0
        %1640 = vmatpush1.msra.mxu0 0.0
        %1641 = vmatprep.subr.mxu0 0.0
        %1642 = vmatpush1.msra.mxu0 0.0
        %1643 = vmatprep.mubr.f32.mxu0 0.0
        %1644 = vmatmul.mubr.f32.gmra.mrb[0].mxu0 %v1573
        %v1645 = vpop.f32.mrb[0].mxu0
        %v1646 = vadd.f32 0.0, %v1645
        %v1647 = vpop.f32.mrb[0].mxu0
        %1648 = vmatprep.mubr.f32.mxu0 0.0
        %1649 = vmatmul.mubr.f32.gmra.mrb[0].mxu0 %v1575
        %v1650 = vpop.f32.mrb[0].mxu0
        %v1651 = vadd.f32 0.0, %v1650
        %v1652 = vpop.f32.mrb[0].mxu0
        %1653 = vmatprep.mubr.f32.mxu0 0.0
        %1654 = vmatmul.mubr.f32.gmra.mrb[0].mxu0 %v1577
        %v1655 = vpop.f32.mrb[0].mxu0
        %v1656 = vadd.f32 0.0, %v1655
        %v1657 = vpop.f32.mrb[0].mxu0
        %1658 = vdwg.mxu0
        %v1659 = vadd.f32 %v1559, %v1646
        %v1660 = vadd.f32 %v1560, %v1651
        %v1661 = vadd.f32 %v1561, %v1656
        %s1662 = scalar_lea.vmem %s7, 96
        %v1663 = vld [vmem:[%s1662] sm:$0xff]
        %v1664 = vld [vmem:[%s1662 + $0x8] sm:$0xff]
        %v1665 = vrot.slane %v1075, 6
        %v1666 = vrot.slane %v1076, 6
        %v1667 = vsel %vm453, %v1665, %v1666
        %v1668 = vrot.slane %v1077, 6
        %v1669 = vsel %vm453, %v1666, %v1668
        %v1670 = vrot.slane %v1078, 6
        %v1671 = vsel %vm453, %v1668, %v1670
        %v1672 = vsel %vm1092, %v1667, 0
        %v1674 = vsel %vm1092, %v1669, 0
        %v1676 = vsel %vm1092, %v1671, 0
        %1678 = vmatprep.subr.mxu0 0.0
        %1679 = vmatpush1.msra.mxu0 %v1663
        %1680 = vmatprep.subr.mxu0 0.0
        %1681 = vmatpush1.msra.mxu0 %v1664
        %1682 = vmatprep.subr.mxu0 0.0
        %1683 = vmatpush1.msra.mxu0 0.0
        %1684 = vmatprep.subr.mxu0 0.0
        %1685 = vmatpush1.msra.mxu0 0.0
        %1686 = vmatprep.subr.mxu0 0.0
        %1687 = vmatpush1.msra.mxu0 0.0
        %1688 = vmatprep.subr.mxu0 0.0
        %1689 = vmatpush1.msra.mxu0 0.0
        %1690 = vmatprep.subr.mxu0 0.0
        %1691 = vmatpush1.msra.mxu0 0.0
        %1692 = vmatprep.subr.mxu0 0.0
        %1693 = vmatpush1.msra.mxu0 0.0
        %1694 = vmatprep.subr.mxu0 0.0
        %1695 = vmatpush1.msra.mxu0 0.0
        %1696 = vmatprep.subr.mxu0 0.0
        %1697 = vmatpush1.msra.mxu0 0.0
        %1698 = vmatprep.subr.mxu0 0.0
        %1699 = vmatpush1.msra.mxu0 0.0
        %1700 = vmatprep.subr.mxu0 0.0
        %1701 = vmatpush1.msra.mxu0 0.0
        %1702 = vmatprep.subr.mxu0 0.0
        %1703 = vmatpush1.msra.mxu0 0.0
        %1704 = vmatprep.subr.mxu0 0.0
        %1705 = vmatpush1.msra.mxu0 0.0
        %1706 = vmatprep.subr.mxu0 0.0
        %1707 = vmatpush1.msra.mxu0 0.0
        %1708 = vmatprep.subr.mxu0 0.0
        %1709 = vmatpush1.msra.mxu0 0.0
        %1710 = vmatprep.subr.mxu0 0.0
        %1711 = vmatpush1.msra.mxu0 0.0
        %1712 = vmatprep.subr.mxu0 0.0
        %1713 = vmatpush1.msra.mxu0 0.0
        %1714 = vmatprep.subr.mxu0 0.0
        %1715 = vmatpush1.msra.mxu0 0.0
        %1716 = vmatprep.subr.mxu0 0.0
        %1717 = vmatpush1.msra.mxu0 0.0
        %1718 = vmatprep.subr.mxu0 0.0
        %1719 = vmatpush1.msra.mxu0 0.0
        %1720 = vmatprep.subr.mxu0 0.0
        %1721 = vmatpush1.msra.mxu0 0.0
        %1722 = vmatprep.subr.mxu0 0.0
        %1723 = vmatpush1.msra.mxu0 0.0
        %1724 = vmatprep.subr.mxu0 0.0
        %1725 = vmatpush1.msra.mxu0 0.0
        %1726 = vmatprep.subr.mxu0 0.0
        %1727 = vmatpush1.msra.mxu0 0.0
        %1728 = vmatprep.subr.mxu0 0.0
        %1729 = vmatpush1.msra.mxu0 0.0
        %1730 = vmatprep.subr.mxu0 0.0
        %1731 = vmatpush1.msra.mxu0 0.0
        %1732 = vmatprep.subr.mxu0 0.0
        %1733 = vmatpush1.msra.mxu0 0.0
        %1734 = vmatprep.subr.mxu0 0.0
        %1735 = vmatpush1.msra.mxu0 0.0
        %1736 = vmatprep.subr.mxu0 0.0
        %1737 = vmatpush1.msra.mxu0 0.0
        %1738 = vmatprep.subr.mxu0 0.0
        %1739 = vmatpush1.msra.mxu0 0.0
        %1740 = vmatprep.subr.mxu0 0.0
        %1741 = vmatpush1.msra.mxu0 0.0
        %1742 = vmatprep.mubr.f32.mxu0 0.0
        %1743 = vmatmul.mubr.f32.gmra.mrb[0].mxu0 %v1672
        %v1744 = vpop.f32.mrb[0].mxu0
        %v1745 = vadd.f32 0.0, %v1744
        %v1746 = vpop.f32.mrb[0].mxu0
        %1747 = vmatprep.mubr.f32.mxu0 0.0
        %1748 = vmatmul.mubr.f32.gmra.mrb[0].mxu0 %v1674
        %v1749 = vpop.f32.mrb[0].mxu0
        %v1750 = vadd.f32 0.0, %v1749
        %v1751 = vpop.f32.mrb[0].mxu0
        %1752 = vmatprep.mubr.f32.mxu0 0.0
        %1753 = vmatmul.mubr.f32.gmra.mrb[0].mxu0 %v1676
        %v1754 = vpop.f32.mrb[0].mxu0
        %v1755 = vadd.f32 0.0, %v1754
        %v1756 = vpop.f32.mrb[0].mxu0
        %1757 = vdwg.mxu0
        %v1758 = vadd.f32 %v1659, %v1745
        %v1759 = vadd.f32 %v1660, %v1750
        %v1760 = vadd.f32 %v1661, %v1755
        %s1761 = scalar_lea.vmem %s7, 112
        %v1762 = vld [vmem:[%s1761] sm:$0xff]
        %v1763 = vld [vmem:[%s1761 + $0x8] sm:$0xff]
        %vm1764 = vcmask 1040384
        %v1765 = vrot.slane %v1075, 7
        %v1766 = vrot.slane %v1076, 7
        %v1767 = vsel %vm1764, %v1765, %v1766
        %v1768 = vrot.slane %v1077, 7
        %v1769 = vsel %vm1764, %v1766, %v1768
        %v1770 = vrot.slane %v1078, 7
        %v1771 = vsel %vm1764, %v1768, %v1770
        %v1772 = vsel %vm1092, %v1767, 0
        %v1774 = vsel %vm1092, %v1769, 0
        %v1776 = vsel %vm1092, %v1771, 0
        %1778 = vmatprep.subr.mxu0 0.0
        %1779 = vmatpush1.msra.mxu0 %v1762
        %1780 = vmatprep.subr.mxu0 0.0
        %1781 = vmatpush1.msra.mxu0 %v1763
        %1782 = vmatprep.subr.mxu0 0.0
        %1783 = vmatpush1.msra.mxu0 0.0
        %1784 = vmatprep.subr.mxu0 0.0
        %1785 = vmatpush1.msra.mxu0 0.0
        %1786 = vmatprep.subr.mxu0 0.0
        %1787 = vmatpush1.msra.mxu0 0.0
        %1788 = vmatprep.subr.mxu0 0.0
        %1789 = vmatpush1.msra.mxu0 0.0
        %1790 = vmatprep.subr.mxu0 0.0
        %1791 = vmatpush1.msra.mxu0 0.0
        %1792 = vmatprep.subr.mxu0 0.0
        %1793 = vmatpush1.msra.mxu0 0.0
        %1794 = vmatprep.subr.mxu0 0.0
        %1795 = vmatpush1.msra.mxu0 0.0
        %1796 = vmatprep.subr.mxu0 0.0
        %1797 = vmatpush1.msra.mxu0 0.0
        %1798 = vmatprep.subr.mxu0 0.0
        %1799 = vmatpush1.msra.mxu0 0.0
        %1800 = vmatprep.subr.mxu0 0.0
        %1801 = vmatpush1.msra.mxu0 0.0
        %1802 = vmatprep.subr.mxu0 0.0
        %1803 = vmatpush1.msra.mxu0 0.0
        %1804 = vmatprep.subr.mxu0 0.0
        %1805 = vmatpush1.msra.mxu0 0.0
        %1806 = vmatprep.subr.mxu0 0.0
        %1807 = vmatpush1.msra.mxu0 0.0
        %1808 = vmatprep.subr.mxu0 0.0
        %1809 = vmatpush1.msra.mxu0 0.0
        %1810 = vmatprep.subr.mxu0 0.0
        %1811 = vmatpush1.msra.mxu0 0.0
        %1812 = vmatprep.subr.mxu0 0.0
        %1813 = vmatpush1.msra.mxu0 0.0
        %1814 = vmatprep.subr.mxu0 0.0
        %1815 = vmatpush1.msra.mxu0 0.0
        %1816 = vmatprep.subr.mxu0 0.0
        %1817 = vmatpush1.msra.mxu0 0.0
        %1818 = vmatprep.subr.mxu0 0.0
        %1819 = vmatpush1.msra.mxu0 0.0
        %1820 = vmatprep.subr.mxu0 0.0
        %1821 = vmatpush1.msra.mxu0 0.0
        %1822 = vmatprep.subr.mxu0 0.0
        %1823 = vmatpush1.msra.mxu0 0.0
        %1824 = vmatprep.subr.mxu0 0.0
        %1825 = vmatpush1.msra.mxu0 0.0
        %1826 = vmatprep.subr.mxu0 0.0
        %1827 = vmatpush1.msra.mxu0 0.0
        %1828 = vmatprep.subr.mxu0 0.0
        %1829 = vmatpush1.msra.mxu0 0.0
        %1830 = vmatprep.subr.mxu0 0.0
        %1831 = vmatpush1.msra.mxu0 0.0
        %1832 = vmatprep.subr.mxu0 0.0
        %1833 = vmatpush1.msra.mxu0 0.0
        %1834 = vmatprep.subr.mxu0 0.0
        %1835 = vmatpush1.msra.mxu0 0.0
        %1836 = vmatprep.subr.mxu0 0.0
        %1837 = vmatpush1.msra.mxu0 0.0
        %1838 = vmatprep.subr.mxu0 0.0
        %1839 = vmatpush1.msra.mxu0 0.0
        %1840 = vmatprep.subr.mxu0 0.0
        %1841 = vmatpush1.msra.mxu0 0.0
        %1842 = vmatprep.mubr.f32.mxu0 0.0
        %1843 = vmatmul.mubr.f32.gmra.mrb[0].mxu0 %v1772
        %v1844 = vpop.f32.mrb[0].mxu0
        %v1845 = vadd.f32 0.0, %v1844
        %v1846 = vpop.f32.mrb[0].mxu0
        %1847 = vmatprep.mubr.f32.mxu0 0.0
        %1848 = vmatmul.mubr.f32.gmra.mrb[0].mxu0 %v1774
        %v1849 = vpop.f32.mrb[0].mxu0
        %v1850 = vadd.f32 0.0, %v1849
        %v1851 = vpop.f32.mrb[0].mxu0
        %1852 = vmatprep.mubr.f32.mxu0 0.0
        %1853 = vmatmul.mubr.f32.gmra.mrb[0].mxu0 %v1776
        %v1854 = vpop.f32.mrb[0].mxu0
        %v1855 = vadd.f32 0.0, %v1854
        %v1856 = vpop.f32.mrb[0].mxu0
        %1857 = vdwg.mxu0
        %v1858 = vadd.f32 %v1758, %v1845
        %v1859 = vadd.f32 %v1759, %v1850
        %v1860 = vadd.f32 %v1760, %v1855
        %v1861 = vld [vmem:[%s8] sm:$0x1]
        %v1863 = vlaneseq
        %v1864 = vshrl.u32 %v1863, 7
        %v1865 = vsub.s32 0, %v1864
        %v1866 = vrot.slane %v1861, %v1865
        %v1868 = vadd.f32 %v1858, %v1866
        %v1869 = vadd.f32 %v1859, %v1866
        %v1870 = vadd.f32 %v1860, %v1866
        %v1871 = vmax.f32 %v1868, 0.0
        %v1872 = vmax.f32 %v1869, 0.0
        %v1873 = vmax.f32 %v1870, 0.0
        %v1874 = vld [vmem:[#allocation2] sm:$0xff]
        %v1875 = vld [vmem:[#allocation2 + $0x8] sm:$0xff]
        %v1876 = vld [vmem:[#allocation2 + $0x10] sm:$0xff]
        %v1877 = vld [vmem:[#allocation2 + $0x18] sm:$0xff]
        %v1878 = vld [vmem:[#allocation2 + $0x20] sm:$0xff]
        %v1879 = vld [vmem:[#allocation2 + $0x28] sm:$0xff]
        %v1880 = vld [vmem:[#allocation2 + $0x30] sm:$0xff]
        %v1881 = vld [vmem:[#allocation2 + $0x38] sm:$0xff]
        %s1882 = scalar_lea.vmem [#allocation2], 64
        %v1883 = vld [vmem:[%s1882] sm:$0xff]
        %v1884 = vld [vmem:[%s1882 + $0x8] sm:$0xff]
        %v1885 = vld [vmem:[%s1882 + $0x10] sm:$0xff]
        %v1886 = vld [vmem:[%s1882 + $0x18] sm:$0xff]
        %v1887 = vld [vmem:[%s1882 + $0x20] sm:$0xff]
        %v1888 = vld [vmem:[%s1882 + $0x28] sm:$0xff]
        %v1889 = vld [vmem:[%s1882 + $0x30] sm:$0xff]
        %v1890 = vld [vmem:[%s1882 + $0x38] sm:$0xff]
        %v1893 = vrot.slane %v1871, 1
        %v1894 = vrot.slane %v1872, 1
        %v1895 = vsel %vm646, %v1893, %v1894
        %vm1896 = vcmask 523264
        %v1897 = vsel %vm1896, %v1895, 0
        %v1899 = vsel %vm1896, %v1894, 0
        %1901 = vmatprep.subr.mxu0 0.0
        %1902 = vmatpush1.msra.mxu0 %v1883
        %1903 = vmatprep.subr.mxu0 0.0
        %1904 = vmatpush1.msra.mxu0 %v1884
        %1905 = vmatprep.subr.mxu0 0.0
        %1906 = vmatpush1.msra.mxu0 %v1885
        %1907 = vmatprep.subr.mxu0 0.0
        %1908 = vmatpush1.msra.mxu0 %v1886
        %1909 = vmatprep.subr.mxu0 0.0
        %1910 = vmatpush1.msra.mxu0 %v1887
        %1911 = vmatprep.subr.mxu0 0.0
        %1912 = vmatpush1.msra.mxu0 %v1888
        %1913 = vmatprep.subr.mxu0 0.0
        %1914 = vmatpush1.msra.mxu0 %v1889
        %1915 = vmatprep.subr.mxu0 0.0
        %1916 = vmatpush1.msra.mxu0 %v1890
        %1917 = vmatprep.subr.mxu0 0.0
        %1918 = vmatpush1.msra.mxu0 0.0
        %1919 = vmatprep.subr.mxu0 0.0
        %1920 = vmatpush1.msra.mxu0 0.0
        %1921 = vmatprep.subr.mxu0 0.0
        %1922 = vmatpush1.msra.mxu0 0.0
        %1923 = vmatprep.subr.mxu0 0.0
        %1924 = vmatpush1.msra.mxu0 0.0
        %1925 = vmatprep.subr.mxu0 0.0
        %1926 = vmatpush1.msra.mxu0 0.0
        %1927 = vmatprep.subr.mxu0 0.0
        %1928 = vmatpush1.msra.mxu0 0.0
        %1929 = vmatprep.subr.mxu0 0.0
        %1930 = vmatpush1.msra.mxu0 0.0
        %1931 = vmatprep.subr.mxu0 0.0
        %1932 = vmatpush1.msra.mxu0 0.0
        %1933 = vmatprep.subr.mxu0 0.0
        %1934 = vmatpush1.msra.mxu0 0.0
        %1935 = vmatprep.subr.mxu0 0.0
        %1936 = vmatpush1.msra.mxu0 0.0
        %1937 = vmatprep.subr.mxu0 0.0
        %1938 = vmatpush1.msra.mxu0 0.0
        %1939 = vmatprep.subr.mxu0 0.0
        %1940 = vmatpush1.msra.mxu0 0.0
        %1941 = vmatprep.subr.mxu0 0.0
        %1942 = vmatpush1.msra.mxu0 0.0
        %1943 = vmatprep.subr.mxu0 0.0
        %1944 = vmatpush1.msra.mxu0 0.0
        %1945 = vmatprep.subr.mxu0 0.0
        %1946 = vmatpush1.msra.mxu0 0.0
        %1947 = vmatprep.subr.mxu0 0.0
        %1948 = vmatpush1.msra.mxu0 0.0
        %1949 = vmatprep.subr.mxu0 0.0
        %1950 = vmatpush1.msra.mxu0 0.0
        %1951 = vmatprep.subr.mxu0 0.0
        %1952 = vmatpush1.msra.mxu0 0.0
        %1953 = vmatprep.subr.mxu0 0.0
        %1954 = vmatpush1.msra.mxu0 0.0
        %1955 = vmatprep.subr.mxu0 0.0
        %1956 = vmatpush1.msra.mxu0 0.0
        %1957 = vmatprep.subr.mxu0 0.0
        %1958 = vmatpush1.msra.mxu0 0.0
        %1959 = vmatprep.subr.mxu0 0.0
        %1960 = vmatpush1.msra.mxu0 0.0
        %1961 = vmatprep.subr.mxu0 0.0
        %1962 = vmatpush1.msra.mxu0 0.0
        %1963 = vmatprep.subr.mxu0 0.0
        %1964 = vmatpush1.msra.mxu0 0.0
        %1965 = vmatprep.mubr.f32.mxu0 0.0
        %1966 = vmatmul.mubr.f32.gmra.mrb[0].mxu0 %v1897
        %v1967 = vpop.f32.mrb[0].mxu0
        %v1968 = vadd.f32 0.0, %v1967
        %v1969 = vpop.f32.mrb[0].mxu0
        %1970 = vmatprep.mubr.f32.mxu0 0.0
        %1971 = vmatmul.mubr.f32.gmra.mrb[0].mxu0 %v1899
        %v1972 = vpop.f32.mrb[0].mxu0
        %v1973 = vadd.f32 0.0, %v1972
        %v1974 = vpop.f32.mrb[0].mxu0
        %1975 = vdwg.mxu0
        %v1976 = vsel %vm1896, %v1871, 0
        %v1978 = vsel %vm1896, %v1872, 0
        %1980 = vmatprep.subr.mxu0 0.0
        %1981 = vmatpush1.msra.mxu0 %v1874
        %1982 = vmatprep.subr.mxu0 0.0
        %1983 = vmatpush1.msra.mxu0 %v1875
        %1984 = vmatprep.subr.mxu0 0.0
        %1985 = vmatpush1.msra.mxu0 %v1876
        %1986 = vmatprep.subr.mxu0 0.0
        %1987 = vmatpush1.msra.mxu0 %v1877
        %1988 = vmatprep.subr.mxu0 0.0
        %1989 = vmatpush1.msra.mxu0 %v1878
        %1990 = vmatprep.subr.mxu0 0.0
        %1991 = vmatpush1.msra.mxu0 %v1879
        %1992 = vmatprep.subr.mxu0 0.0
        %1993 = vmatpush1.msra.mxu0 %v1880
        %1994 = vmatprep.subr.mxu0 0.0
        %1995 = vmatpush1.msra.mxu0 %v1881
        %1996 = vmatprep.subr.mxu0 0.0
        %1997 = vmatpush1.msra.mxu0 0.0
        %1998 = vmatprep.subr.mxu0 0.0
        %1999 = vmatpush1.msra.mxu0 0.0
        %2000 = vmatprep.subr.mxu0 0.0
        %2001 = vmatpush1.msra.mxu0 0.0
        %2002 = vmatprep.subr.mxu0 0.0
        %2003 = vmatpush1.msra.mxu0 0.0
        %2004 = vmatprep.subr.mxu0 0.0
        %2005 = vmatpush1.msra.mxu0 0.0
        %2006 = vmatprep.subr.mxu0 0.0
        %2007 = vmatpush1.msra.mxu0 0.0
        %2008 = vmatprep.subr.mxu0 0.0
        %2009 = vmatpush1.msra.mxu0 0.0
        %2010 = vmatprep.subr.mxu0 0.0
        %2011 = vmatpush1.msra.mxu0 0.0
        %2012 = vmatprep.subr.mxu0 0.0
        %2013 = vmatpush1.msra.mxu0 0.0
        %2014 = vmatprep.subr.mxu0 0.0
        %2015 = vmatpush1.msra.mxu0 0.0
        %2016 = vmatprep.subr.mxu0 0.0
        %2017 = vmatpush1.msra.mxu0 0.0
        %2018 = vmatprep.subr.mxu0 0.0
        %2019 = vmatpush1.msra.mxu0 0.0
        %2020 = vmatprep.subr.mxu0 0.0
        %2021 = vmatpush1.msra.mxu0 0.0
        %2022 = vmatprep.subr.mxu0 0.0
        %2023 = vmatpush1.msra.mxu0 0.0
        %2024 = vmatprep.subr.mxu0 0.0
        %2025 = vmatpush1.msra.mxu0 0.0
        %2026 = vmatprep.subr.mxu0 0.0
        %2027 = vmatpush1.msra.mxu0 0.0
        %2028 = vmatprep.subr.mxu0 0.0
        %2029 = vmatpush1.msra.mxu0 0.0
        %2030 = vmatprep.subr.mxu0 0.0
        %2031 = vmatpush1.msra.mxu0 0.0
        %2032 = vmatprep.subr.mxu0 0.0
        %2033 = vmatpush1.msra.mxu0 0.0
        %2034 = vmatprep.subr.mxu0 0.0
        %2035 = vmatpush1.msra.mxu0 0.0
        %2036 = vmatprep.subr.mxu0 0.0
        %2037 = vmatpush1.msra.mxu0 0.0
        %2038 = vmatprep.subr.mxu0 0.0
        %2039 = vmatpush1.msra.mxu0 0.0
        %2040 = vmatprep.subr.mxu0 0.0
        %2041 = vmatpush1.msra.mxu0 0.0
        %2042 = vmatprep.subr.mxu0 0.0
        %2043 = vmatpush1.msra.mxu0 0.0
        %2044 = vmatprep.mubr.f32.mxu0 0.0
        %2045 = vmatmul.mubr.f32.gmra.mrb[0].mxu0 %v1976
        %v2046 = vpop.f32.mrb[0].mxu0
        %v2047 = vadd.f32 %v1968, %v2046
        %v2048 = vpop.f32.mrb[0].mxu0
        %2049 = vmatprep.mubr.f32.mxu0 0.0
        %2050 = vmatmul.mubr.f32.gmra.mrb[0].mxu0 %v1978
        %v2051 = vpop.f32.mrb[0].mxu0
        %v2052 = vadd.f32 %v1973, %v2051
        %v2053 = vpop.f32.mrb[0].mxu0
        %2054 = vdwg.mxu0
        %s2055 = scalar_lea.vmem [#allocation2], 128
        %v2056 = vld [vmem:[%s2055] sm:$0xff]
        %v2057 = vld [vmem:[%s2055 + $0x8] sm:$0xff]
        %v2058 = vld [vmem:[%s2055 + $0x10] sm:$0xff]
        %v2059 = vld [vmem:[%s2055 + $0x18] sm:$0xff]
        %v2060 = vld [vmem:[%s2055 + $0x20] sm:$0xff]
        %v2061 = vld [vmem:[%s2055 + $0x28] sm:$0xff]
        %v2062 = vld [vmem:[%s2055 + $0x30] sm:$0xff]
        %v2063 = vld [vmem:[%s2055 + $0x38] sm:$0xff]
        %v2064 = vrot.slane %v1871, 2
        %v2065 = vrot.slane %v1872, 2
        %v2066 = vsel %vm845, %v2064, %v2065
        %v2067 = vsel %vm1896, %v2066, 0
        %v2069 = vsel %vm1896, %v2065, 0
        %2071 = vmatprep.subr.mxu0 0.0
        %2072 = vmatpush1.msra.mxu0 %v2056
        %2073 = vmatprep.subr.mxu0 0.0
        %2074 = vmatpush1.msra.mxu0 %v2057
        %2075 = vmatprep.subr.mxu0 0.0
        %2076 = vmatpush1.msra.mxu0 %v2058
        %2077 = vmatprep.subr.mxu0 0.0
        %2078 = vmatpush1.msra.mxu0 %v2059
        %2079 = vmatprep.subr.mxu0 0.0
        %2080 = vmatpush1.msra.mxu0 %v2060
        %2081 = vmatprep.subr.mxu0 0.0
        %2082 = vmatpush1.msra.mxu0 %v2061
        %2083 = vmatprep.subr.mxu0 0.0
        %2084 = vmatpush1.msra.mxu0 %v2062
        %2085 = vmatprep.subr.mxu0 0.0
        %2086 = vmatpush1.msra.mxu0 %v2063
        %2087 = vmatprep.subr.mxu0 0.0
        %2088 = vmatpush1.msra.mxu0 0.0
        %2089 = vmatprep.subr.mxu0 0.0
        %2090 = vmatpush1.msra.mxu0 0.0
        %2091 = vmatprep.subr.mxu0 0.0
        %2092 = vmatpush1.msra.mxu0 0.0
        %2093 = vmatprep.subr.mxu0 0.0
        %2094 = vmatpush1.msra.mxu0 0.0
        %2095 = vmatprep.subr.mxu0 0.0
        %2096 = vmatpush1.msra.mxu0 0.0
        %2097 = vmatprep.subr.mxu0 0.0
        %2098 = vmatpush1.msra.mxu0 0.0
        %2099 = vmatprep.subr.mxu0 0.0
        %2100 = vmatpush1.msra.mxu0 0.0
        %2101 = vmatprep.subr.mxu0 0.0
        %2102 = vmatpush1.msra.mxu0 0.0
        %2103 = vmatprep.subr.mxu0 0.0
        %2104 = vmatpush1.msra.mxu0 0.0
        %2105 = vmatprep.subr.mxu0 0.0
        %2106 = vmatpush1.msra.mxu0 0.0
        %2107 = vmatprep.subr.mxu0 0.0
        %2108 = vmatpush1.msra.mxu0 0.0
        %2109 = vmatprep.subr.mxu0 0.0
        %2110 = vmatpush1.msra.mxu0 0.0
        %2111 = vmatprep.subr.mxu0 0.0
        %2112 = vmatpush1.msra.mxu0 0.0
        %2113 = vmatprep.subr.mxu0 0.0
        %2114 = vmatpush1.msra.mxu0 0.0
        %2115 = vmatprep.subr.mxu0 0.0
        %2116 = vmatpush1.msra.mxu0 0.0
        %2117 = vmatprep.subr.mxu0 0.0
        %2118 = vmatpush1.msra.mxu0 0.0
        %2119 = vmatprep.subr.mxu0 0.0
        %2120 = vmatpush1.msra.mxu0 0.0
        %2121 = vmatprep.subr.mxu0 0.0
        %2122 = vmatpush1.msra.mxu0 0.0
        %2123 = vmatprep.subr.mxu0 0.0
        %2124 = vmatpush1.msra.mxu0 0.0
        %2125 = vmatprep.subr.mxu0 0.0
        %2126 = vmatpush1.msra.mxu0 0.0
        %2127 = vmatprep.subr.mxu0 0.0
        %2128 = vmatpush1.msra.mxu0 0.0
        %2129 = vmatprep.subr.mxu0 0.0
        %2130 = vmatpush1.msra.mxu0 0.0
        %2131 = vmatprep.subr.mxu0 0.0
        %2132 = vmatpush1.msra.mxu0 0.0
        %2133 = vmatprep.subr.mxu0 0.0
        %2134 = vmatpush1.msra.mxu0 0.0
        %2135 = vmatprep.mubr.f32.mxu0 0.0
        %2136 = vmatmul.mubr.f32.gmra.mrb[0].mxu0 %v2067
        %v2137 = vpop.f32.mrb[0].mxu0
        %v2138 = vadd.f32 0.0, %v2137
        %v2139 = vpop.f32.mrb[0].mxu0
        %2140 = vmatprep.mubr.f32.mxu0 0.0
        %2141 = vmatmul.mubr.f32.gmra.mrb[0].mxu0 %v2069
        %v2142 = vpop.f32.mrb[0].mxu0
        %v2143 = vadd.f32 0.0, %v2142
        %v2144 = vpop.f32.mrb[0].mxu0
        %2145 = vdwg.mxu0
        %v2146 = vadd.f32 %v2047, %v2138
        %v2147 = vadd.f32 %v2052, %v2143
        %s2148 = scalar_lea.vmem [#allocation2], 192
        %v2149 = vld [vmem:[%s2148] sm:$0xff]
        %v2150 = vld [vmem:[%s2148 + $0x8] sm:$0xff]
        %v2151 = vld [vmem:[%s2148 + $0x10] sm:$0xff]
        %v2152 = vld [vmem:[%s2148 + $0x18] sm:$0xff]
        %v2153 = vld [vmem:[%s2148 + $0x20] sm:$0xff]
        %v2154 = vld [vmem:[%s2148 + $0x28] sm:$0xff]
        %v2155 = vld [vmem:[%s2148 + $0x30] sm:$0xff]
        %v2156 = vld [vmem:[%s2148 + $0x38] sm:$0xff]
        %v2157 = vrot.slane %v1871, 3
        %v2158 = vrot.slane %v1872, 3
        %v2159 = vsel %vm963, %v2157, %v2158
        %v2160 = vsel %vm1896, %v2159, 0
        %v2162 = vsel %vm1896, %v2158, 0
        %2164 = vmatprep.subr.mxu0 0.0
        %2165 = vmatpush1.msra.mxu0 %v2149
        %2166 = vmatprep.subr.mxu0 0.0
        %2167 = vmatpush1.msra.mxu0 %v2150
        %2168 = vmatprep.subr.mxu0 0.0
        %2169 = vmatpush1.msra.mxu0 %v2151
        %2170 = vmatprep.subr.mxu0 0.0
        %2171 = vmatpush1.msra.mxu0 %v2152
        %2172 = vmatprep.subr.mxu0 0.0
        %2173 = vmatpush1.msra.mxu0 %v2153
        %2174 = vmatprep.subr.mxu0 0.0
        %2175 = vmatpush1.msra.mxu0 %v2154
        %2176 = vmatprep.subr.mxu0 0.0
        %2177 = vmatpush1.msra.mxu0 %v2155
        %2178 = vmatprep.subr.mxu0 0.0
        %2179 = vmatpush1.msra.mxu0 %v2156
        %2180 = vmatprep.subr.mxu0 0.0
        %2181 = vmatpush1.msra.mxu0 0.0
        %2182 = vmatprep.subr.mxu0 0.0
        %2183 = vmatpush1.msra.mxu0 0.0
        %2184 = vmatprep.subr.mxu0 0.0
        %2185 = vmatpush1.msra.mxu0 0.0
        %2186 = vmatprep.subr.mxu0 0.0
        %2187 = vmatpush1.msra.mxu0 0.0
        %2188 = vmatprep.subr.mxu0 0.0
        %2189 = vmatpush1.msra.mxu0 0.0
        %2190 = vmatprep.subr.mxu0 0.0
        %2191 = vmatpush1.msra.mxu0 0.0
        %2192 = vmatprep.subr.mxu0 0.0
        %2193 = vmatpush1.msra.mxu0 0.0
        %2194 = vmatprep.subr.mxu0 0.0
        %2195 = vmatpush1.msra.mxu0 0.0
        %2196 = vmatprep.subr.mxu0 0.0
        %2197 = vmatpush1.msra.mxu0 0.0
        %2198 = vmatprep.subr.mxu0 0.0
        %2199 = vmatpush1.msra.mxu0 0.0
        %2200 = vmatprep.subr.mxu0 0.0
        %2201 = vmatpush1.msra.mxu0 0.0
        %2202 = vmatprep.subr.mxu0 0.0
        %2203 = vmatpush1.msra.mxu0 0.0
        %2204 = vmatprep.subr.mxu0 0.0
        %2205 = vmatpush1.msra.mxu0 0.0
        %2206 = vmatprep.subr.mxu0 0.0
        %2207 = vmatpush1.msra.mxu0 0.0
        %2208 = vmatprep.subr.mxu0 0.0
        %2209 = vmatpush1.msra.mxu0 0.0
        %2210 = vmatprep.subr.mxu0 0.0
        %2211 = vmatpush1.msra.mxu0 0.0
        %2212 = vmatprep.subr.mxu0 0.0
        %2213 = vmatpush1.msra.mxu0 0.0
        %2214 = vmatprep.subr.mxu0 0.0
        %2215 = vmatpush1.msra.mxu0 0.0
        %2216 = vmatprep.subr.mxu0 0.0
        %2217 = vmatpush1.msra.mxu0 0.0
        %2218 = vmatprep.subr.mxu0 0.0
        %2219 = vmatpush1.msra.mxu0 0.0
        %2220 = vmatprep.subr.mxu0 0.0
        %2221 = vmatpush1.msra.mxu0 0.0
        %2222 = vmatprep.subr.mxu0 0.0
        %2223 = vmatpush1.msra.mxu0 0.0
        %2224 = vmatprep.subr.mxu0 0.0
        %2225 = vmatpush1.msra.mxu0 0.0
        %2226 = vmatprep.subr.mxu0 0.0
        %2227 = vmatpush1.msra.mxu0 0.0
        %2228 = vmatprep.mubr.f32.mxu0 0.0
        %2229 = vmatmul.mubr.f32.gmra.mrb[0].mxu0 %v2160
        %v2230 = vpop.f32.mrb[0].mxu0
        %v2231 = vadd.f32 0.0, %v2230
        %v2232 = vpop.f32.mrb[0].mxu0
        %2233 = vmatprep.mubr.f32.mxu0 0.0
        %2234 = vmatmul.mubr.f32.gmra.mrb[0].mxu0 %v2162
        %v2235 = vpop.f32.mrb[0].mxu0
        %v2236 = vadd.f32 0.0, %v2235
        %v2237 = vpop.f32.mrb[0].mxu0
        %2238 = vdwg.mxu0
        %v2239 = vadd.f32 %v2146, %v2231
        %v2240 = vadd.f32 %v2147, %v2236
        %s2241 = scalar_lea.vmem [#allocation2], 256
        %v2242 = vld [vmem:[%s2241] sm:$0xff]
        %v2243 = vld [vmem:[%s2241 + $0x8] sm:$0xff]
        %v2244 = vld [vmem:[%s2241 + $0x10] sm:$0xff]
        %v2245 = vld [vmem:[%s2241 + $0x18] sm:$0xff]
        %v2246 = vld [vmem:[%s2241 + $0x20] sm:$0xff]
        %v2247 = vld [vmem:[%s2241 + $0x28] sm:$0xff]
        %v2248 = vld [vmem:[%s2241 + $0x30] sm:$0xff]
        %v2249 = vld [vmem:[%s2241 + $0x38] sm:$0xff]
        %v2250 = vrot.slane %v1871, 4
        %v2251 = vrot.slane %v1872, 4
        %v2252 = vsel %vm1465, %v2250, %v2251
        %v2253 = vsel %vm1896, %v2252, 0
        %v2255 = vsel %vm1896, %v2251, 0
        %2257 = vmatprep.subr.mxu0 0.0
        %2258 = vmatpush1.msra.mxu0 %v2242
        %2259 = vmatprep.subr.mxu0 0.0
        %2260 = vmatpush1.msra.mxu0 %v2243
        %2261 = vmatprep.subr.mxu0 0.0
        %2262 = vmatpush1.msra.mxu0 %v2244
        %2263 = vmatprep.subr.mxu0 0.0
        %2264 = vmatpush1.msra.mxu0 %v2245
        %2265 = vmatprep.subr.mxu0 0.0
        %2266 = vmatpush1.msra.mxu0 %v2246
        %2267 = vmatprep.subr.mxu0 0.0
        %2268 = vmatpush1.msra.mxu0 %v2247
        %2269 = vmatprep.subr.mxu0 0.0
        %2270 = vmatpush1.msra.mxu0 %v2248
        %2271 = vmatprep.subr.mxu0 0.0
        %2272 = vmatpush1.msra.mxu0 %v2249
        %2273 = vmatprep.subr.mxu0 0.0
        %2274 = vmatpush1.msra.mxu0 0.0
        %2275 = vmatprep.subr.mxu0 0.0
        %2276 = vmatpush1.msra.mxu0 0.0
        %2277 = vmatprep.subr.mxu0 0.0
        %2278 = vmatpush1.msra.mxu0 0.0
        %2279 = vmatprep.subr.mxu0 0.0
        %2280 = vmatpush1.msra.mxu0 0.0
        %2281 = vmatprep.subr.mxu0 0.0
        %2282 = vmatpush1.msra.mxu0 0.0
        %2283 = vmatprep.subr.mxu0 0.0
        %2284 = vmatpush1.msra.mxu0 0.0
        %2285 = vmatprep.subr.mxu0 0.0
        %2286 = vmatpush1.msra.mxu0 0.0
        %2287 = vmatprep.subr.mxu0 0.0
        %2288 = vmatpush1.msra.mxu0 0.0
        %2289 = vmatprep.subr.mxu0 0.0
        %2290 = vmatpush1.msra.mxu0 0.0
        %2291 = vmatprep.subr.mxu0 0.0
        %2292 = vmatpush1.msra.mxu0 0.0
        %2293 = vmatprep.subr.mxu0 0.0
        %2294 = vmatpush1.msra.mxu0 0.0
        %2295 = vmatprep.subr.mxu0 0.0
        %2296 = vmatpush1.msra.mxu0 0.0
        %2297 = vmatprep.subr.mxu0 0.0
        %2298 = vmatpush1.msra.mxu0 0.0
        %2299 = vmatprep.subr.mxu0 0.0
        %2300 = vmatpush1.msra.mxu0 0.0
        %2301 = vmatprep.subr.mxu0 0.0
        %2302 = vmatpush1.msra.mxu0 0.0
        %2303 = vmatprep.subr.mxu0 0.0
        %2304 = vmatpush1.msra.mxu0 0.0
        %2305 = vmatprep.subr.mxu0 0.0
        %2306 = vmatpush1.msra.mxu0 0.0
        %2307 = vmatprep.subr.mxu0 0.0
        %2308 = vmatpush1.msra.mxu0 0.0
        %2309 = vmatprep.subr.mxu0 0.0
        %2310 = vmatpush1.msra.mxu0 0.0
        %2311 = vmatprep.subr.mxu0 0.0
        %2312 = vmatpush1.msra.mxu0 0.0
        %2313 = vmatprep.subr.mxu0 0.0
        %2314 = vmatpush1.msra.mxu0 0.0
        %2315 = vmatprep.subr.mxu0 0.0
        %2316 = vmatpush1.msra.mxu0 0.0
        %2317 = vmatprep.subr.mxu0 0.0
        %2318 = vmatpush1.msra.mxu0 0.0
        %2319 = vmatprep.subr.mxu0 0.0
        %2320 = vmatpush1.msra.mxu0 0.0
        %2321 = vmatprep.mubr.f32.mxu0 0.0
        %2322 = vmatmul.mubr.f32.gmra.mrb[0].mxu0 %v2253
        %v2323 = vpop.f32.mrb[0].mxu0
        %v2324 = vadd.f32 0.0, %v2323
        %v2325 = vpop.f32.mrb[0].mxu0
        %2326 = vmatprep.mubr.f32.mxu0 0.0
        %2327 = vmatmul.mubr.f32.gmra.mrb[0].mxu0 %v2255
        %v2328 = vpop.f32.mrb[0].mxu0
        %v2329 = vadd.f32 0.0, %v2328
        %v2330 = vpop.f32.mrb[0].mxu0
        %2331 = vdwg.mxu0
        %v2332 = vadd.f32 %v2239, %v2324
        %v2333 = vadd.f32 %v2240, %v2329
        %s2334 = scalar_lea.vmem [#allocation2], 320
        %v2335 = vld [vmem:[%s2334] sm:$0xff]
        %v2336 = vld [vmem:[%s2334 + $0x8] sm:$0xff]
        %v2337 = vld [vmem:[%s2334 + $0x10] sm:$0xff]
        %v2338 = vld [vmem:[%s2334 + $0x18] sm:$0xff]
        %v2339 = vld [vmem:[%s2334 + $0x20] sm:$0xff]
        %v2340 = vld [vmem:[%s2334 + $0x28] sm:$0xff]
        %v2341 = vld [vmem:[%s2334 + $0x30] sm:$0xff]
        %v2342 = vld [vmem:[%s2334 + $0x38] sm:$0xff]
        %v2343 = vrot.slane %v1871, 5
        %v2344 = vrot.slane %v1872, 5
        %v2345 = vsel %vm1565, %v2343, %v2344
        %v2346 = vsel %vm1896, %v2345, 0
        %v2348 = vsel %vm1896, %v2344, 0
        %2350 = vmatprep.subr.mxu0 0.0
        %2351 = vmatpush1.msra.mxu0 %v2335
        %2352 = vmatprep.subr.mxu0 0.0
        %2353 = vmatpush1.msra.mxu0 %v2336
        %2354 = vmatprep.subr.mxu0 0.0
        %2355 = vmatpush1.msra.mxu0 %v2337
        %2356 = vmatprep.subr.mxu0 0.0
        %2357 = vmatpush1.msra.mxu0 %v2338
        %2358 = vmatprep.subr.mxu0 0.0
        %2359 = vmatpush1.msra.mxu0 %v2339
        %2360 = vmatprep.subr.mxu0 0.0
        %2361 = vmatpush1.msra.mxu0 %v2340
        %2362 = vmatprep.subr.mxu0 0.0
        %2363 = vmatpush1.msra.mxu0 %v2341
        %2364 = vmatprep.subr.mxu0 0.0
        %2365 = vmatpush1.msra.mxu0 %v2342
        %2366 = vmatprep.subr.mxu0 0.0
        %2367 = vmatpush1.msra.mxu0 0.0
        %2368 = vmatprep.subr.mxu0 0.0
        %2369 = vmatpush1.msra.mxu0 0.0
        %2370 = vmatprep.subr.mxu0 0.0
        %2371 = vmatpush1.msra.mxu0 0.0
        %2372 = vmatprep.subr.mxu0 0.0
        %2373 = vmatpush1.msra.mxu0 0.0
        %2374 = vmatprep.subr.mxu0 0.0
        %2375 = vmatpush1.msra.mxu0 0.0
        %2376 = vmatprep.subr.mxu0 0.0
        %2377 = vmatpush1.msra.mxu0 0.0
        %2378 = vmatprep.subr.mxu0 0.0
        %2379 = vmatpush1.msra.mxu0 0.0
        %2380 = vmatprep.subr.mxu0 0.0
        %2381 = vmatpush1.msra.mxu0 0.0
        %2382 = vmatprep.subr.mxu0 0.0
        %2383 = vmatpush1.msra.mxu0 0.0
        %2384 = vmatprep.subr.mxu0 0.0
        %2385 = vmatpush1.msra.mxu0 0.0
        %2386 = vmatprep.subr.mxu0 0.0
        %2387 = vmatpush1.msra.mxu0 0.0
        %2388 = vmatprep.subr.mxu0 0.0
        %2389 = vmatpush1.msra.mxu0 0.0
        %2390 = vmatprep.subr.mxu0 0.0
        %2391 = vmatpush1.msra.mxu0 0.0
        %2392 = vmatprep.subr.mxu0 0.0
        %2393 = vmatpush1.msra.mxu0 0.0
        %2394 = vmatprep.subr.mxu0 0.0
        %2395 = vmatpush1.msra.mxu0 0.0
        %2396 = vmatprep.subr.mxu0 0.0
        %2397 = vmatpush1.msra.mxu0 0.0
        %2398 = vmatprep.subr.mxu0 0.0
        %2399 = vmatpush1.msra.mxu0 0.0
        %2400 = vmatprep.subr.mxu0 0.0
        %2401 = vmatpush1.msra.mxu0 0.0
        %2402 = vmatprep.subr.mxu0 0.0
        %2403 = vmatpush1.msra.mxu0 0.0
        %2404 = vmatprep.subr.mxu0 0.0
        %2405 = vmatpush1.msra.mxu0 0.0
        %2406 = vmatprep.subr.mxu0 0.0
        %2407 = vmatpush1.msra.mxu0 0.0
        %2408 = vmatprep.subr.mxu0 0.0
        %2409 = vmatpush1.msra.mxu0 0.0
        %2410 = vmatprep.subr.mxu0 0.0
        %2411 = vmatpush1.msra.mxu0 0.0
        %2412 = vmatprep.subr.mxu0 0.0
        %2413 = vmatpush1.msra.mxu0 0.0
        %2414 = vmatprep.mubr.f32.mxu0 0.0
        %2415 = vmatmul.mubr.f32.gmra.mrb[0].mxu0 %v2346
        %v2416 = vpop.f32.mrb[0].mxu0
        %v2417 = vadd.f32 0.0, %v2416
        %v2418 = vpop.f32.mrb[0].mxu0
        %2419 = vmatprep.mubr.f32.mxu0 0.0
        %2420 = vmatmul.mubr.f32.gmra.mrb[0].mxu0 %v2348
        %v2421 = vpop.f32.mrb[0].mxu0
        %v2422 = vadd.f32 0.0, %v2421
        %v2423 = vpop.f32.mrb[0].mxu0
        %2424 = vdwg.mxu0
        %v2425 = vadd.f32 %v2332, %v2417
        %v2426 = vadd.f32 %v2333, %v2422
        %s2427 = scalar_lea.vmem [#allocation2], 384
        %v2428 = vld [vmem:[%s2427] sm:$0xff]
        %v2429 = vld [vmem:[%s2427 + $0x8] sm:$0xff]
        %v2430 = vld [vmem:[%s2427 + $0x10] sm:$0xff]
        %v2431 = vld [vmem:[%s2427 + $0x18] sm:$0xff]
        %v2432 = vld [vmem:[%s2427 + $0x20] sm:$0xff]
        %v2433 = vld [vmem:[%s2427 + $0x28] sm:$0xff]
        %v2434 = vld [vmem:[%s2427 + $0x30] sm:$0xff]
        %v2435 = vld [vmem:[%s2427 + $0x38] sm:$0xff]
        %v2437 = vrot.slane %v1871, 6
        %v2438 = vrot.slane %v1872, 6
        %v2439 = vsel %vm453, %v2437, %v2438
        %v2440 = vrot.slane %v1873, 6
        %v2441 = vsel %vm453, %v2438, %v2440
        %v2442 = vsel %vm1896, %v2439, 0
        %v2444 = vsel %vm1896, %v2441, 0
        %2446 = vmatprep.subr.mxu0 0.0
        %2447 = vmatpush1.msra.mxu0 %v2428
        %2448 = vmatprep.subr.mxu0 0.0
        %2449 = vmatpush1.msra.mxu0 %v2429
        %2450 = vmatprep.subr.mxu0 0.0
        %2451 = vmatpush1.msra.mxu0 %v2430
        %2452 = vmatprep.subr.mxu0 0.0
        %2453 = vmatpush1.msra.mxu0 %v2431
        %2454 = vmatprep.subr.mxu0 0.0
        %2455 = vmatpush1.msra.mxu0 %v2432
        %2456 = vmatprep.subr.mxu0 0.0
        %2457 = vmatpush1.msra.mxu0 %v2433
        %2458 = vmatprep.subr.mxu0 0.0
        %2459 = vmatpush1.msra.mxu0 %v2434
        %2460 = vmatprep.subr.mxu0 0.0
        %2461 = vmatpush1.msra.mxu0 %v2435
        %2462 = vmatprep.subr.mxu0 0.0
        %2463 = vmatpush1.msra.mxu0 0.0
        %2464 = vmatprep.subr.mxu0 0.0
        %2465 = vmatpush1.msra.mxu0 0.0
        %2466 = vmatprep.subr.mxu0 0.0
        %2467 = vmatpush1.msra.mxu0 0.0
        %2468 = vmatprep.subr.mxu0 0.0
        %2469 = vmatpush1.msra.mxu0 0.0
        %2470 = vmatprep.subr.mxu0 0.0
        %2471 = vmatpush1.msra.mxu0 0.0
        %2472 = vmatprep.subr.mxu0 0.0
        %2473 = vmatpush1.msra.mxu0 0.0
        %2474 = vmatprep.subr.mxu0 0.0
        %2475 = vmatpush1.msra.mxu0 0.0
        %2476 = vmatprep.subr.mxu0 0.0
        %2477 = vmatpush1.msra.mxu0 0.0
        %2478 = vmatprep.subr.mxu0 0.0
        %2479 = vmatpush1.msra.mxu0 0.0
        %2480 = vmatprep.subr.mxu0 0.0
        %2481 = vmatpush1.msra.mxu0 0.0
        %2482 = vmatprep.subr.mxu0 0.0
        %2483 = vmatpush1.msra.mxu0 0.0
        %2484 = vmatprep.subr.mxu0 0.0
        %2485 = vmatpush1.msra.mxu0 0.0
        %2486 = vmatprep.subr.mxu0 0.0
        %2487 = vmatpush1.msra.mxu0 0.0
        %2488 = vmatprep.subr.mxu0 0.0
        %2489 = vmatpush1.msra.mxu0 0.0
        %2490 = vmatprep.subr.mxu0 0.0
        %2491 = vmatpush1.msra.mxu0 0.0
        %2492 = vmatprep.subr.mxu0 0.0
        %2493 = vmatpush1.msra.mxu0 0.0
        %2494 = vmatprep.subr.mxu0 0.0
        %2495 = vmatpush1.msra.mxu0 0.0
        %2496 = vmatprep.subr.mxu0 0.0
        %2497 = vmatpush1.msra.mxu0 0.0
        %2498 = vmatprep.subr.mxu0 0.0
        %2499 = vmatpush1.msra.mxu0 0.0
        %2500 = vmatprep.subr.mxu0 0.0
        %2501 = vmatpush1.msra.mxu0 0.0
        %2502 = vmatprep.subr.mxu0 0.0
        %2503 = vmatpush1.msra.mxu0 0.0
        %2504 = vmatprep.subr.mxu0 0.0
        %2505 = vmatpush1.msra.mxu0 0.0
        %2506 = vmatprep.subr.mxu0 0.0
        %2507 = vmatpush1.msra.mxu0 0.0
        %2508 = vmatprep.subr.mxu0 0.0
        %2509 = vmatpush1.msra.mxu0 0.0
        %2510 = vmatprep.mubr.f32.mxu0 0.0
        %2511 = vmatmul.mubr.f32.gmra.mrb[0].mxu0 %v2442
        %v2512 = vpop.f32.mrb[0].mxu0
        %v2513 = vadd.f32 0.0, %v2512
        %v2514 = vpop.f32.mrb[0].mxu0
        %2515 = vmatprep.mubr.f32.mxu0 0.0
        %2516 = vmatmul.mubr.f32.gmra.mrb[0].mxu0 %v2444
        %v2517 = vpop.f32.mrb[0].mxu0
        %v2518 = vadd.f32 0.0, %v2517
        %v2519 = vpop.f32.mrb[0].mxu0
        %2520 = vdwg.mxu0
        %v2521 = vadd.f32 %v2425, %v2513
        %v2522 = vadd.f32 %v2426, %v2518
        %s2523 = scalar_lea.vmem [#allocation2], 448
        %v2524 = vld [vmem:[%s2523] sm:$0xff]
        %v2525 = vld [vmem:[%s2523 + $0x8] sm:$0xff]
        %v2526 = vld [vmem:[%s2523 + $0x10] sm:$0xff]
        %v2527 = vld [vmem:[%s2523 + $0x18] sm:$0xff]
        %v2528 = vld [vmem:[%s2523 + $0x20] sm:$0xff]
        %v2529 = vld [vmem:[%s2523 + $0x28] sm:$0xff]
        %v2530 = vld [vmem:[%s2523 + $0x30] sm:$0xff]
        %v2531 = vld [vmem:[%s2523 + $0x38] sm:$0xff]
        %v2532 = vrot.slane %v1871, 7
        %v2533 = vrot.slane %v1872, 7
        %v2534 = vsel %vm1764, %v2532, %v2533
        %v2535 = vrot.slane %v1873, 7
        %v2536 = vsel %vm1764, %v2533, %v2535
        %v2537 = vsel %vm1896, %v2534, 0
        %v2539 = vsel %vm1896, %v2536, 0
        %2541 = vmatprep.subr.mxu0 0.0
        %2542 = vmatpush1.msra.mxu0 %v2524
        %2543 = vmatprep.subr.mxu0 0.0
        %2544 = vmatpush1.msra.mxu0 %v2525
        %2545 = vmatprep.subr.mxu0 0.0
        %2546 = vmatpush1.msra.mxu0 %v2526
        %2547 = vmatprep.subr.mxu0 0.0
        %2548 = vmatpush1.msra.mxu0 %v2527
        %2549 = vmatprep.subr.mxu0 0.0
        %2550 = vmatpush1.msra.mxu0 %v2528
        %2551 = vmatprep.subr.mxu0 0.0
        %2552 = vmatpush1.msra.mxu0 %v2529
        %2553 = vmatprep.subr.mxu0 0.0
        %2554 = vmatpush1.msra.mxu0 %v2530
        %2555 = vmatprep.subr.mxu0 0.0
        %2556 = vmatpush1.msra.mxu0 %v2531
        %2557 = vmatprep.subr.mxu0 0.0
        %2558 = vmatpush1.msra.mxu0 0.0
        %2559 = vmatprep.subr.mxu0 0.0
        %2560 = vmatpush1.msra.mxu0 0.0
        %2561 = vmatprep.subr.mxu0 0.0
        %2562 = vmatpush1.msra.mxu0 0.0
        %2563 = vmatprep.subr.mxu0 0.0
        %2564 = vmatpush1.msra.mxu0 0.0
        %2565 = vmatprep.subr.mxu0 0.0
        %2566 = vmatpush1.msra.mxu0 0.0
        %2567 = vmatprep.subr.mxu0 0.0
        %2568 = vmatpush1.msra.mxu0 0.0
        %2569 = vmatprep.subr.mxu0 0.0
        %2570 = vmatpush1.msra.mxu0 0.0
        %2571 = vmatprep.subr.mxu0 0.0
        %2572 = vmatpush1.msra.mxu0 0.0
        %2573 = vmatprep.subr.mxu0 0.0
        %2574 = vmatpush1.msra.mxu0 0.0
        %2575 = vmatprep.subr.mxu0 0.0
        %2576 = vmatpush1.msra.mxu0 0.0
        %2577 = vmatprep.subr.mxu0 0.0
        %2578 = vmatpush1.msra.mxu0 0.0
        %2579 = vmatprep.subr.mxu0 0.0
        %2580 = vmatpush1.msra.mxu0 0.0
        %2581 = vmatprep.subr.mxu0 0.0
        %2582 = vmatpush1.msra.mxu0 0.0
        %2583 = vmatprep.subr.mxu0 0.0
        %2584 = vmatpush1.msra.mxu0 0.0
        %2585 = vmatprep.subr.mxu0 0.0
        %2586 = vmatpush1.msra.mxu0 0.0
        %2587 = vmatprep.subr.mxu0 0.0
        %2588 = vmatpush1.msra.mxu0 0.0
        %2589 = vmatprep.subr.mxu0 0.0
        %2590 = vmatpush1.msra.mxu0 0.0
        %2591 = vmatprep.subr.mxu0 0.0
        %2592 = vmatpush1.msra.mxu0 0.0
        %2593 = vmatprep.subr.mxu0 0.0
        %2594 = vmatpush1.msra.mxu0 0.0
        %2595 = vmatprep.subr.mxu0 0.0
        %2596 = vmatpush1.msra.mxu0 0.0
        %2597 = vmatprep.subr.mxu0 0.0
        %2598 = vmatpush1.msra.mxu0 0.0
        %2599 = vmatprep.subr.mxu0 0.0
        %2600 = vmatpush1.msra.mxu0 0.0
        %2601 = vmatprep.subr.mxu0 0.0
        %2602 = vmatpush1.msra.mxu0 0.0
        %2603 = vmatprep.subr.mxu0 0.0
        %2604 = vmatpush1.msra.mxu0 0.0
        %2605 = vmatprep.mubr.f32.mxu0 0.0
        %2606 = vmatmul.mubr.f32.gmra.mrb[0].mxu0 %v2537
        %v2607 = vpop.f32.mrb[0].mxu0
        %v2608 = vadd.f32 0.0, %v2607
        %v2609 = vpop.f32.mrb[0].mxu0
        %2610 = vmatprep.mubr.f32.mxu0 0.0
        %2611 = vmatmul.mubr.f32.gmra.mrb[0].mxu0 %v2539
        %v2612 = vpop.f32.mrb[0].mxu0
        %v2613 = vadd.f32 0.0, %v2612
        %v2614 = vpop.f32.mrb[0].mxu0
        %2615 = vdwg.mxu0
        %v2616 = vadd.f32 %v2521, %v2608
        %v2617 = vadd.f32 %v2522, %v2613
        %s2618 = scalar_lea.vmem [#allocation2], 512
        %v2619 = vld [vmem:[%s2618] sm:$0xff]
        %v2620 = vld [vmem:[%s2618 + $0x8] sm:$0xff]
        %v2621 = vld [vmem:[%s2618 + $0x10] sm:$0xff]
        %v2622 = vld [vmem:[%s2618 + $0x18] sm:$0xff]
        %v2623 = vld [vmem:[%s2618 + $0x20] sm:$0xff]
        %v2624 = vld [vmem:[%s2618 + $0x28] sm:$0xff]
        %v2625 = vld [vmem:[%s2618 + $0x30] sm:$0xff]
        %v2626 = vld [vmem:[%s2618 + $0x38] sm:$0xff]
        %v2627 = vsel %vm1896, %v1873, 0
        %2629 = vmatprep.subr.mxu0 0.0
        %2630 = vmatpush1.msra.mxu0 %v2619
        %2631 = vmatprep.subr.mxu0 0.0
        %2632 = vmatpush1.msra.mxu0 %v2620
        %2633 = vmatprep.subr.mxu0 0.0
        %2634 = vmatpush1.msra.mxu0 %v2621
        %2635 = vmatprep.subr.mxu0 0.0
        %2636 = vmatpush1.msra.mxu0 %v2622
        %2637 = vmatprep.subr.mxu0 0.0
        %2638 = vmatpush1.msra.mxu0 %v2623
        %2639 = vmatprep.subr.mxu0 0.0
        %2640 = vmatpush1.msra.mxu0 %v2624
        %2641 = vmatprep.subr.mxu0 0.0
        %2642 = vmatpush1.msra.mxu0 %v2625
        %2643 = vmatprep.subr.mxu0 0.0
        %2644 = vmatpush1.msra.mxu0 %v2626
        %2645 = vmatprep.subr.mxu0 0.0
        %2646 = vmatpush1.msra.mxu0 0.0
        %2647 = vmatprep.subr.mxu0 0.0
        %2648 = vmatpush1.msra.mxu0 0.0
        %2649 = vmatprep.subr.mxu0 0.0
        %2650 = vmatpush1.msra.mxu0 0.0
        %2651 = vmatprep.subr.mxu0 0.0
        %2652 = vmatpush1.msra.mxu0 0.0
        %2653 = vmatprep.subr.mxu0 0.0
        %2654 = vmatpush1.msra.mxu0 0.0
        %2655 = vmatprep.subr.mxu0 0.0
        %2656 = vmatpush1.msra.mxu0 0.0
        %2657 = vmatprep.subr.mxu0 0.0
        %2658 = vmatpush1.msra.mxu0 0.0
        %2659 = vmatprep.subr.mxu0 0.0
        %2660 = vmatpush1.msra.mxu0 0.0
        %2661 = vmatprep.subr.mxu0 0.0
        %2662 = vmatpush1.msra.mxu0 0.0
        %2663 = vmatprep.subr.mxu0 0.0
        %2664 = vmatpush1.msra.mxu0 0.0
        %2665 = vmatprep.subr.mxu0 0.0
        %2666 = vmatpush1.msra.mxu0 0.0
        %2667 = vmatprep.subr.mxu0 0.0
        %2668 = vmatpush1.msra.mxu0 0.0
        %2669 = vmatprep.subr.mxu0 0.0
        %2670 = vmatpush1.msra.mxu0 0.0
        %2671 = vmatprep.subr.mxu0 0.0
        %2672 = vmatpush1.msra.mxu0 0.0
        %2673 = vmatprep.subr.mxu0 0.0
        %2674 = vmatpush1.msra.mxu0 0.0
        %2675 = vmatprep.subr.mxu0 0.0
        %2676 = vmatpush1.msra.mxu0 0.0
        %2677 = vmatprep.subr.mxu0 0.0
        %2678 = vmatpush1.msra.mxu0 0.0
        %2679 = vmatprep.subr.mxu0 0.0
        %2680 = vmatpush1.msra.mxu0 0.0
        %2681 = vmatprep.subr.mxu0 0.0
        %2682 = vmatpush1.msra.mxu0 0.0
        %2683 = vmatprep.subr.mxu0 0.0
        %2684 = vmatpush1.msra.mxu0 0.0
        %2685 = vmatprep.subr.mxu0 0.0
        %2686 = vmatpush1.msra.mxu0 0.0
        %2687 = vmatprep.subr.mxu0 0.0
        %2688 = vmatpush1.msra.mxu0 0.0
        %2689 = vmatprep.subr.mxu0 0.0
        %2690 = vmatpush1.msra.mxu0 0.0
        %2691 = vmatprep.subr.mxu0 0.0
        %2692 = vmatpush1.msra.mxu0 0.0
        %2693 = vmatprep.mubr.f32.mxu0 0.0
        %2694 = vmatmul.mubr.f32.gmra.mrb[0].mxu0 %v1978
        %v2695 = vpop.f32.mrb[0].mxu0
        %v2696 = vadd.f32 0.0, %v2695
        %v2697 = vpop.f32.mrb[0].mxu0
        %2698 = vmatprep.mubr.f32.mxu0 0.0
        %2699 = vmatmul.mubr.f32.gmra.mrb[0].mxu0 %v2627
        %v2700 = vpop.f32.mrb[0].mxu0
        %v2701 = vadd.f32 0.0, %v2700
        %v2702 = vpop.f32.mrb[0].mxu0
        %2703 = vdwg.mxu0
        %v2704 = vadd.f32 %v2616, %v2696
        %v2705 = vadd.f32 %v2617, %v2701
        %s2706 = scalar_lea.vmem [#allocation2], 576
        %v2707 = vld [vmem:[%s2706] sm:$0xff]
        %v2708 = vld [vmem:[%s2706 + $0x8] sm:$0xff]
        %v2709 = vld [vmem:[%s2706 + $0x10] sm:$0xff]
        %v2710 = vld [vmem:[%s2706 + $0x18] sm:$0xff]
        %v2711 = vld [vmem:[%s2706 + $0x20] sm:$0xff]
        %v2712 = vld [vmem:[%s2706 + $0x28] sm:$0xff]
        %v2713 = vld [vmem:[%s2706 + $0x30] sm:$0xff]
        %v2714 = vld [vmem:[%s2706 + $0x38] sm:$0xff]
        %v2715 = vrot.slane %v1873, 1
        %v2716 = vsel %vm646, %v1894, %v2715
        %v2717 = vsel %vm1896, %v2716, 0
        %v2719 = vsel %vm1896, %v2715, 0
        %2721 = vmatprep.subr.mxu0 0.0
        %2722 = vmatpush1.msra.mxu0 %v2707
        %2723 = vmatprep.subr.mxu0 0.0
        %2724 = vmatpush1.msra.mxu0 %v2708
        %2725 = vmatprep.subr.mxu0 0.0
        %2726 = vmatpush1.msra.mxu0 %v2709
        %2727 = vmatprep.subr.mxu0 0.0
        %2728 = vmatpush1.msra.mxu0 %v2710
        %2729 = vmatprep.subr.mxu0 0.0
        %2730 = vmatpush1.msra.mxu0 %v2711
        %2731 = vmatprep.subr.mxu0 0.0
        %2732 = vmatpush1.msra.mxu0 %v2712
        %2733 = vmatprep.subr.mxu0 0.0
        %2734 = vmatpush1.msra.mxu0 %v2713
        %2735 = vmatprep.subr.mxu0 0.0
        %2736 = vmatpush1.msra.mxu0 %v2714
        %2737 = vmatprep.subr.mxu0 0.0
        %2738 = vmatpush1.msra.mxu0 0.0
        %2739 = vmatprep.subr.mxu0 0.0
        %2740 = vmatpush1.msra.mxu0 0.0
        %2741 = vmatprep.subr.mxu0 0.0
        %2742 = vmatpush1.msra.mxu0 0.0
        %2743 = vmatprep.subr.mxu0 0.0
        %2744 = vmatpush1.msra.mxu0 0.0
        %2745 = vmatprep.subr.mxu0 0.0
        %2746 = vmatpush1.msra.mxu0 0.0
        %2747 = vmatprep.subr.mxu0 0.0
        %2748 = vmatpush1.msra.mxu0 0.0
        %2749 = vmatprep.subr.mxu0 0.0
        %2750 = vmatpush1.msra.mxu0 0.0
        %2751 = vmatprep.subr.mxu0 0.0
        %2752 = vmatpush1.msra.mxu0 0.0
        %2753 = vmatprep.subr.mxu0 0.0
        %2754 = vmatpush1.msra.mxu0 0.0
        %2755 = vmatprep.subr.mxu0 0.0
        %2756 = vmatpush1.msra.mxu0 0.0
        %2757 = vmatprep.subr.mxu0 0.0
        %2758 = vmatpush1.msra.mxu0 0.0
        %2759 = vmatprep.subr.mxu0 0.0
        %2760 = vmatpush1.msra.mxu0 0.0
        %2761 = vmatprep.subr.mxu0 0.0
        %2762 = vmatpush1.msra.mxu0 0.0
        %2763 = vmatprep.subr.mxu0 0.0
        %2764 = vmatpush1.msra.mxu0 0.0
        %2765 = vmatprep.subr.mxu0 0.0
        %2766 = vmatpush1.msra.mxu0 0.0
        %2767 = vmatprep.subr.mxu0 0.0
        %2768 = vmatpush1.msra.mxu0 0.0
        %2769 = vmatprep.subr.mxu0 0.0
        %2770 = vmatpush1.msra.mxu0 0.0
        %2771 = vmatprep.subr.mxu0 0.0
        %2772 = vmatpush1.msra.mxu0 0.0
        %2773 = vmatprep.subr.mxu0 0.0
        %2774 = vmatpush1.msra.mxu0 0.0
        %2775 = vmatprep.subr.mxu0 0.0
        %2776 = vmatpush1.msra.mxu0 0.0
        %2777 = vmatprep.subr.mxu0 0.0
        %2778 = vmatpush1.msra.mxu0 0.0
        %2779 = vmatprep.subr.mxu0 0.0
        %2780 = vmatpush1.msra.mxu0 0.0
        %2781 = vmatprep.subr.mxu0 0.0
        %2782 = vmatpush1.msra.mxu0 0.0
        %2783 = vmatprep.subr.mxu0 0.0
        %2784 = vmatpush1.msra.mxu0 0.0
        %2785 = vmatprep.mubr.f32.mxu0 0.0
        %2786 = vmatmul.mubr.f32.gmra.mrb[0].mxu0 %v2717
        %v2787 = vpop.f32.mrb[0].mxu0
        %v2788 = vadd.f32 0.0, %v2787
        %v2789 = vpop.f32.mrb[0].mxu0
        %2790 = vmatprep.mubr.f32.mxu0 0.0
        %2791 = vmatmul.mubr.f32.gmra.mrb[0].mxu0 %v2719
        %v2792 = vpop.f32.mrb[0].mxu0
        %v2793 = vadd.f32 0.0, %v2792
        %v2794 = vpop.f32.mrb[0].mxu0
        %2795 = vdwg.mxu0
        %v2796 = vadd.f32 %v2704, %v2788
        %v2797 = vadd.f32 %v2705, %v2793
        %s2798 = scalar_lea.vmem [#allocation2], 640
        %v2799 = vld [vmem:[%s2798] sm:$0xff]
        %v2800 = vld [vmem:[%s2798 + $0x8] sm:$0xff]
        %v2801 = vld [vmem:[%s2798 + $0x10] sm:$0xff]
        %v2802 = vld [vmem:[%s2798 + $0x18] sm:$0xff]
        %v2803 = vld [vmem:[%s2798 + $0x20] sm:$0xff]
        %v2804 = vld [vmem:[%s2798 + $0x28] sm:$0xff]
        %v2805 = vld [vmem:[%s2798 + $0x30] sm:$0xff]
        %v2806 = vld [vmem:[%s2798 + $0x38] sm:$0xff]
        %v2807 = vrot.slane %v1873, 2
        %v2808 = vsel %vm845, %v2065, %v2807
        %v2809 = vsel %vm1896, %v2808, 0
        %v2811 = vsel %vm1896, %v2807, 0
        %2813 = vmatprep.subr.mxu0 0.0
        %2814 = vmatpush1.msra.mxu0 %v2799
        %2815 = vmatprep.subr.mxu0 0.0
        %2816 = vmatpush1.msra.mxu0 %v2800
        %2817 = vmatprep.subr.mxu0 0.0
        %2818 = vmatpush1.msra.mxu0 %v2801
        %2819 = vmatprep.subr.mxu0 0.0
        %2820 = vmatpush1.msra.mxu0 %v2802
        %2821 = vmatprep.subr.mxu0 0.0
        %2822 = vmatpush1.msra.mxu0 %v2803
        %2823 = vmatprep.subr.mxu0 0.0
        %2824 = vmatpush1.msra.mxu0 %v2804
        %2825 = vmatprep.subr.mxu0 0.0
        %2826 = vmatpush1.msra.mxu0 %v2805
        %2827 = vmatprep.subr.mxu0 0.0
        %2828 = vmatpush1.msra.mxu0 %v2806
        %2829 = vmatprep.subr.mxu0 0.0
        %2830 = vmatpush1.msra.mxu0 0.0
        %2831 = vmatprep.subr.mxu0 0.0
        %2832 = vmatpush1.msra.mxu0 0.0
        %2833 = vmatprep.subr.mxu0 0.0
        %2834 = vmatpush1.msra.mxu0 0.0
        %2835 = vmatprep.subr.mxu0 0.0
        %2836 = vmatpush1.msra.mxu0 0.0
        %2837 = vmatprep.subr.mxu0 0.0
        %2838 = vmatpush1.msra.mxu0 0.0
        %2839 = vmatprep.subr.mxu0 0.0
        %2840 = vmatpush1.msra.mxu0 0.0
        %2841 = vmatprep.subr.mxu0 0.0
        %2842 = vmatpush1.msra.mxu0 0.0
        %2843 = vmatprep.subr.mxu0 0.0
        %2844 = vmatpush1.msra.mxu0 0.0
        %2845 = vmatprep.subr.mxu0 0.0
        %2846 = vmatpush1.msra.mxu0 0.0
        %2847 = vmatprep.subr.mxu0 0.0
        %2848 = vmatpush1.msra.mxu0 0.0
        %2849 = vmatprep.subr.mxu0 0.0
        %2850 = vmatpush1.msra.mxu0 0.0
        %2851 = vmatprep.subr.mxu0 0.0
        %2852 = vmatpush1.msra.mxu0 0.0
        %2853 = vmatprep.subr.mxu0 0.0
        %2854 = vmatpush1.msra.mxu0 0.0
        %2855 = vmatprep.subr.mxu0 0.0
        %2856 = vmatpush1.msra.mxu0 0.0
        %2857 = vmatprep.subr.mxu0 0.0
        %2858 = vmatpush1.msra.mxu0 0.0
        %2859 = vmatprep.subr.mxu0 0.0
        %2860 = vmatpush1.msra.mxu0 0.0
        %2861 = vmatprep.subr.mxu0 0.0
        %2862 = vmatpush1.msra.mxu0 0.0
        %2863 = vmatprep.subr.mxu0 0.0
        %2864 = vmatpush1.msra.mxu0 0.0
        %2865 = vmatprep.subr.mxu0 0.0
        %2866 = vmatpush1.msra.mxu0 0.0
        %2867 = vmatprep.subr.mxu0 0.0
        %2868 = vmatpush1.msra.mxu0 0.0
        %2869 = vmatprep.subr.mxu0 0.0
        %2870 = vmatpush1.msra.mxu0 0.0
        %2871 = vmatprep.subr.mxu0 0.0
        %2872 = vmatpush1.msra.mxu0 0.0
        %2873 = vmatprep.subr.mxu0 0.0
        %2874 = vmatpush1.msra.mxu0 0.0
        %2875 = vmatprep.subr.mxu0 0.0
        %2876 = vmatpush1.msra.mxu0 0.0
        %2877 = vmatprep.mubr.f32.mxu0 0.0
        %2878 = vmatmul.mubr.f32.gmra.mrb[0].mxu0 %v2809
        %v2879 = vpop.f32.mrb[0].mxu0
        %v2880 = vadd.f32 0.0, %v2879
        %v2881 = vpop.f32.mrb[0].mxu0
        %2882 = vmatprep.mubr.f32.mxu0 0.0
        %2883 = vmatmul.mubr.f32.gmra.mrb[0].mxu0 %v2811
        %v2884 = vpop.f32.mrb[0].mxu0
        %v2885 = vadd.f32 0.0, %v2884
        %v2886 = vpop.f32.mrb[0].mxu0
        %2887 = vdwg.mxu0
        %v2888 = vadd.f32 %v2796, %v2880
        %v2889 = vadd.f32 %v2797, %v2885
        %s2890 = scalar_lea.vmem [#allocation2], 704
        %v2891 = vld [vmem:[%s2890] sm:$0xff]
        %v2892 = vld [vmem:[%s2890 + $0x8] sm:$0xff]
        %v2893 = vld [vmem:[%s2890 + $0x10] sm:$0xff]
        %v2894 = vld [vmem:[%s2890 + $0x18] sm:$0xff]
        %v2895 = vld [vmem:[%s2890 + $0x20] sm:$0xff]
        %v2896 = vld [vmem:[%s2890 + $0x28] sm:$0xff]
        %v2897 = vld [vmem:[%s2890 + $0x30] sm:$0xff]
        %v2898 = vld [vmem:[%s2890 + $0x38] sm:$0xff]
        %v2899 = vrot.slane %v1873, 3
        %v2900 = vsel %vm963, %v2158, %v2899
        %v2901 = vsel %vm1896, %v2900, 0
        %v2903 = vsel %vm1896, %v2899, 0
        %2905 = vmatprep.subr.mxu0 0.0
        %2906 = vmatpush1.msra.mxu0 %v2891
        %2907 = vmatprep.subr.mxu0 0.0
        %2908 = vmatpush1.msra.mxu0 %v2892
        %2909 = vmatprep.subr.mxu0 0.0
        %2910 = vmatpush1.msra.mxu0 %v2893
        %2911 = vmatprep.subr.mxu0 0.0
        %2912 = vmatpush1.msra.mxu0 %v2894
        %2913 = vmatprep.subr.mxu0 0.0
        %2914 = vmatpush1.msra.mxu0 %v2895
        %2915 = vmatprep.subr.mxu0 0.0
        %2916 = vmatpush1.msra.mxu0 %v2896
        %2917 = vmatprep.subr.mxu0 0.0
        %2918 = vmatpush1.msra.mxu0 %v2897
        %2919 = vmatprep.subr.mxu0 0.0
        %2920 = vmatpush1.msra.mxu0 %v2898
        %2921 = vmatprep.subr.mxu0 0.0
        %2922 = vmatpush1.msra.mxu0 0.0
        %2923 = vmatprep.subr.mxu0 0.0
        %2924 = vmatpush1.msra.mxu0 0.0
        %2925 = vmatprep.subr.mxu0 0.0
        %2926 = vmatpush1.msra.mxu0 0.0
        %2927 = vmatprep.subr.mxu0 0.0
        %2928 = vmatpush1.msra.mxu0 0.0
        %2929 = vmatprep.subr.mxu0 0.0
        %2930 = vmatpush1.msra.mxu0 0.0
        %2931 = vmatprep.subr.mxu0 0.0
        %2932 = vmatpush1.msra.mxu0 0.0
        %2933 = vmatprep.subr.mxu0 0.0
        %2934 = vmatpush1.msra.mxu0 0.0
        %2935 = vmatprep.subr.mxu0 0.0
        %2936 = vmatpush1.msra.mxu0 0.0
        %2937 = vmatprep.subr.mxu0 0.0
        %2938 = vmatpush1.msra.mxu0 0.0
        %2939 = vmatprep.subr.mxu0 0.0
        %2940 = vmatpush1.msra.mxu0 0.0
        %2941 = vmatprep.subr.mxu0 0.0
        %2942 = vmatpush1.msra.mxu0 0.0
        %2943 = vmatprep.subr.mxu0 0.0
        %2944 = vmatpush1.msra.mxu0 0.0
        %2945 = vmatprep.subr.mxu0 0.0
        %2946 = vmatpush1.msra.mxu0 0.0
        %2947 = vmatprep.subr.mxu0 0.0
        %2948 = vmatpush1.msra.mxu0 0.0
        %2949 = vmatprep.subr.mxu0 0.0
        %2950 = vmatpush1.msra.mxu0 0.0
        %2951 = vmatprep.subr.mxu0 0.0
        %2952 = vmatpush1.msra.mxu0 0.0
        %2953 = vmatprep.subr.mxu0 0.0
        %2954 = vmatpush1.msra.mxu0 0.0
        %2955 = vmatprep.subr.mxu0 0.0
        %2956 = vmatpush1.msra.mxu0 0.0
        %2957 = vmatprep.subr.mxu0 0.0
        %2958 = vmatpush1.msra.mxu0 0.0
        %2959 = vmatprep.subr.mxu0 0.0
        %2960 = vmatpush1.msra.mxu0 0.0
        %2961 = vmatprep.subr.mxu0 0.0
        %2962 = vmatpush1.msra.mxu0 0.0
        %2963 = vmatprep.subr.mxu0 0.0
        %2964 = vmatpush1.msra.mxu0 0.0
        %2965 = vmatprep.subr.mxu0 0.0
        %2966 = vmatpush1.msra.mxu0 0.0
        %2967 = vmatprep.subr.mxu0 0.0
        %2968 = vmatpush1.msra.mxu0 0.0
        %2969 = vmatprep.mubr.f32.mxu0 0.0
        %2970 = vmatmul.mubr.f32.gmra.mrb[0].mxu0 %v2901
        %v2971 = vpop.f32.mrb[0].mxu0
        %v2972 = vadd.f32 0.0, %v2971
        %v2973 = vpop.f32.mrb[0].mxu0
        %2974 = vmatprep.mubr.f32.mxu0 0.0
        %2975 = vmatmul.mubr.f32.gmra.mrb[0].mxu0 %v2903
        %v2976 = vpop.f32.mrb[0].mxu0
        %v2977 = vadd.f32 0.0, %v2976
        %v2978 = vpop.f32.mrb[0].mxu0
        %2979 = vdwg.mxu0
        %v2980 = vadd.f32 %v2888, %v2972
        %v2981 = vadd.f32 %v2889, %v2977
        %v2982 = vld [vmem:[%s10] sm:$0x1]
        %v2984 = vlaneseq
        %v2985 = vshrl.u32 %v2984, 7
        %v2986 = vsub.s32 0, %v2985
        %v2987 = vrot.slane %v2982, %v2986
        %v2989 = vadd.f32 %v2980, %v2987
        %v2990 = vadd.f32 %v2981, %v2987
        %v2991 = vmax.f32 %v2989, 0.0
        %v2992 = vmax.f32 %v2990, 0.0
        %2993 = vst [vmem:[%s401] sm:$0xff] %v2991
        %2994 = vst [vmem:[%s401 + $0x8] sm:$0x7] %v2992
        %p2995 = scmp.lt.s32.totalorder %s23, 1
        %s2996 = scalar_select %p2995, %s23, 1
        %s2997 = smul.addr %s2996, 2
        %s2998 = smul.addr %s2997, 8
        %s2999 = scalar_lea.vmem %s11, %s2998
        // Predicated region
        $region69: #{tpu_custom_call.1} parent=63 // pred_check
          %p3000 = pneg %p277
        $region70: #{tpu_custom_call.1} parent=63 // pred_check_branch
          %3002 = sbr.rel (%p3000) target = $region72
        $region71: #{tpu_custom_call.1} parent=63 // pred_region
          _
        $region72: #{tpu_custom_call.1} parent=63 // pred_fallthru
          _
      $region64: #{tpu_custom_call.1} parent=5 // pred_fallthru
        _
      %p3003 = scmp.le.s32.totalorder 2, %s18
      // Predicated region
      $region73: #{tpu_custom_call.1} parent=5 // pred_check
        %p3004 = pneg %p3003
      $region74: #{tpu_custom_call.1} parent=5 // pred_check_branch
        %3006 = sbr.rel (%p3004) target = $region76
      $region75: #{tpu_custom_call.1} parent=5 // pred_region
        %s3007 = ssub.s32 %s18, 2
        // Predicated region
        $region77: #{tpu_custom_call.1} parent=75 // pred_check
          %p3008 = pneg %p283
        $region78: #{tpu_custom_call.1} parent=75 // pred_check_branch
          %3010 = sbr.rel (%p3008) target = $region80
        $region79: #{tpu_custom_call.1} parent=75 // pred_region
          %p3011 = scmp.lt.s32.totalorder %s24, 1
          %s3012 = scalar_select %p3011, %s24, 1
          %s3013 = smul.addr %s3012, 2
          %s3014 = smul.addr %s3013, 8
          %s3015 = scalar_lea.vmem %s11, %s3014
        $region80: #{tpu_custom_call.1} parent=75 // pred_fallthru
          _
      $region76: #{tpu_custom_call.1} parent=5 // pred_fallthru
        _
    $region6: #{tpu_custom_call.1} parent=1 // loop_footer
      %s22 = sadd.s32 1, %s18
    $region7: #{tpu_custom_call.1} parent=1 // loop_footer_branch
      %17 = sbr.rel target = $region3
    $region8: #{tpu_custom_call.1} parent=1 // loop_exit
      _
    %3016 = vsyncpa [#allocation3], 1
    %s3017 = scalar_lea.sflag [#allocation3], 1
    %3018 = vsyncpa %s3017, 1

</llo_original>
